<compile_context>
chip_gen: v7x
topology: tpu7x:2x2x1
jax: 0.10.0
libtpu: 0.0.40
codegen_flags: <defaults>
</compile_context>

<pallas_src>
import functools
import math

import jax
import jax.numpy as jnp
from jax import lax
from jax.experimental import pallas as pl
from jax.experimental.pallas import tpu as pltpu


def _layer_norm(x, w, b, eps=1e-5):
    mu = jnp.mean(x, axis=-1, keepdims=True)
    var = jnp.mean((x - mu) ** 2, axis=-1, keepdims=True)
    return (x - mu) * jax.lax.rsqrt(var + eps) * w + b


def transformer_kernel(x_ref,
                       wq_ref, bq_ref, wk_ref, bk_ref, wv_ref, bv_ref,
                       wout_ref, bout_ref, w1_ref, b1_ref, w2_ref, b2_ref,
                       ln1w_ref, ln1b_ref, ln2w_ref, ln2b_ref,
                       wlin_ref, blin_ref,
                       out_ref, x_scratch,
                       *, nhead, matmul_dtype, use_approx):
    l = pl.program_id(1)
    num_layers = pl.num_programs(1)

    _, TB, S, D = x_ref.shape
    dh = D // nhead
    R = TB * S

    # ---- load / initialize the carried activation ---------------------------
    @pl.when(l == 0)
    def _():
        x_scratch[...] = x_ref[0].reshape(R, D)

    x = x_scratch[...]                                    # (R, D) float32

    def mm(a, b):
        # a: activations (cast to matmul dtype), b: weights (already cast)
        return lax.dot_general(a.astype(matmul_dtype), b,
                               dimension_numbers=(((1,), (0,)), ((), ())),
                               preferred_element_type=jnp.float32)

    xc = x.astype(matmul_dtype)                           # single cast, reused 3x

    # ---- QKV projections (1/sqrt(dh) already folded into wq/bq host-side) ---
    q = (mm(xc, wq_ref[0]) + bq_ref[0]).astype(matmul_dtype).reshape(TB, S, D)
    k = (mm(xc, wk_ref[0]) + bk_ref[0]).astype(matmul_dtype).reshape(TB, S, D)
    v = (mm(xc, wv_ref[0]) + bv_ref[0]).astype(matmul_dtype).reshape(TB, S, D)

    # ---- multi-head self-attention -------------------------------------------
    # Static loop over heads (small, static lane offsets for the head slices);
    # every dot inside is batched over the TB sequences via a single batch dim,
    # and the per-head output projection is accumulated into `attn` so there is
    # no narrow-column scratch store.
    wout = wout_ref[0]                                    # (D, D) matmul dtype
    attn = jnp.zeros((R, D), jnp.float32)
    for h in range(nhead):
        c0 = h * dh
        qh = q[:, :, c0:c0 + dh]                          # (TB, S, dh)
        kh = k[:, :, c0:c0 + dh]
        vh = v[:, :, c0:c0 + dh]
        s = lax.dot_general(qh, kh, (((2,), (2,)), ((0,), (0,))),
                            preferred_element_type=jnp.float32)       # (TB,S,S)
        s = s - jnp.max(s, axis=-1, keepdims=True)
        p = jnp.exp(s)
        denom = jnp.sum(p, axis=-1, keepdims=True)
        if use_approx:
            p = p * pl.reciprocal(denom, approx=True)
        else:
            p = p / denom
        ctx_h = lax.dot_general(p.astype(matmul_dtype), vh,
                                (((2,), (1,)), ((0,), (0,))),
                                preferred_element_type=jnp.float32)   # (TB,S,dh)
        # fused per-head output projection, lane-dense f32 accumulation
        attn = attn + lax.dot_general(
            ctx_h.reshape(R, dh).astype(matmul_dtype), wout[c0:c0 + dh, :],
            (((1,), (0,)), ((), ())), preferred_element_type=jnp.float32)
    attn = attn + bout_ref[0]

    x = _layer_norm(x + attn, ln1w_ref[0], ln1b_ref[0])

    # ---- feed-forward ---------------------------------------------------------
    h1 = jnp.maximum(mm(x, w1_ref[0]) + b1_ref[0], 0.0)
    ff = mm(h1, w2_ref[0]) + b2_ref[0]
    x = _layer_norm(x + ff, ln2w_ref[0], ln2b_ref[0])

    x_scratch[...] = x

    # ---- finalize: mean over sequence, Linear (lane-padded), sigmoid ---------
    @pl.when(l == num_layers - 1)
    def _():
        pooled = jnp.sum(x.reshape(TB, S, D), axis=1) * (1.0 / S)     # (TB, D)
        logits = mm(pooled, wlin_ref[...]) + blin_ref[...]            # (TB, Opad)
        out_ref[0] = jax.nn.sigmoid(logits)


def _physical_vmem_bytes():
    phys = 64 * 2**20                      # conservative fallback (v7x per-TC)
    try:
        info = pltpu.get_tpu_info()
        cap = getattr(info, "vmem_capacity_bytes", None)
        if cap:
            phys = int(cap)
    except Exception:
        pass
    return phys


def transformer_encoding_forward(x, params, *, nhead, max_seq_length=None,
                                 block_b=None, matmul_dtype=jnp.bfloat16):
    """x: (batch, seq, d_model) float32. Returns (batch, output_size) float32."""
    if max_seq_length is not None:
        x = x[..., :max_seq_length, :]
    x = x.astype(jnp.float32)
    B, S, D = x.shape
    L, _, F = params["w1"].shape
    O = params["wlin"].shape[1]
    dh = D // nhead
    scale = 1.0 / math.sqrt(dh)

    def w(a):
        return a.astype(matmul_dtype)

    # ---- host-side weight prep ------------------------------------------------
    wqkv, bqkv = params["wqkv"], params["bqkv"]
    wq = w(wqkv[:, :, 0:D] * scale)            # fold 1/sqrt(dh) into Q weights
    bq = bqkv[:, :, 0:D] * scale
    wk = w(wqkv[:, :, D:2 * D])
    bk = bqkv[:, :, D:2 * D]
    wv = w(wqkv[:, :, 2 * D:3 * D])
    bv = bqkv[:, :, 2 * D:3 * D]

    Opad = max(128, -(-O // 128) * 128)        # lane-dense output store
    wlin = w(jnp.pad(params["wlin"], ((0, 0), (0, Opad - O))))
    blin = jnp.pad(params["blin"], ((0, 0), (0, Opad - O)))

    layer_weights = [
        wq, bq, wk, bk, wv, bv,
        w(params["wout"]), params["bout"],
        w(params["w1"]), params["b1"], w(params["w2"]), params["b2"],
        params["ln1w"], params["ln1b"], params["ln2w"], params["ln2b"],
    ]
    const_weights = [wlin, blin]

    # ---- VMEM budget & batch-tile sizing (generation aware) --------------------
    phys = _physical_vmem_bytes()
    budget = int(0.85 * phys)

    layer_block_bytes = sum(int(a.nbytes) // L for a in layer_weights)
    const_bytes = sum(int(a.nbytes) for a in const_weights)
    fixed_bytes = 2 * layer_block_bytes + 2 * const_bytes   # double-buffered stream

    # rough upper bound on live activation bytes per sequence row (token)
    per_row = 4 * (8 * D + 2 * F + S)
    act_budget = max(budget - fixed_bytes, budget // 4)
    max_rows = max(S, act_budget // per_row)

    if block_b is None:
        rows_target = 512                      # clears bf16 weight-streaming roofline
        tb = max(1, min(B, -(-rows_target // S)))
    else:
        tb = max(1, min(B, block_b))
    tb = min(tb, max(1, max_rows // S))
    nbt = -(-B // tb)
    TB = -(-B // nbt)                          # rebalance to minimize padded rows
    NBT = -(-B // TB)
    Bp = NBT * TB
    if Bp != B:
        x = jnp.pad(x, ((0, Bp - B), (0, 0), (0, 0)))
    xg = x.reshape(NBT, TB, S, D)

    # per-step footprint -> vmem limit (clamped to physical capacity)
    x_block = TB * S * D * 4
    out_block = TB * Opad * 4
    needed = fixed_bytes + 3 * x_block + 2 * out_block + TB * S * per_row
    vmem_limit = int(min(budget, max(needed, 32 * 2**20)))

    # ---- specs -----------------------------------------------------------------
    def layer_spec(arr):      # per-layer streamed weight: (L, a, b) -> (1, a, b)
        return pl.BlockSpec((1,) + arr.shape[1:], lambda bt, l: (l, 0, 0))

    def const_spec(arr):      # layer-independent 2-D weight, constant block index
        return pl.BlockSpec(arr.shape, lambda bt, l: (0, 0))

    in_specs = [pl.BlockSpec((1, TB, S, D), lambda bt, l: (bt, 0, 0, 0))]
    in_specs += [layer_spec(a) for a in layer_weights]
    in_specs += [const_spec(a) for a in const_weights]

    kernel = functools.partial(
        transformer_kernel, nhead=nhead, matmul_dtype=matmul_dtype,
        use_approx=(matmul_dtype != jnp.float32))

    out = pl.pallas_call(
        kernel,
        out_shape=jax.ShapeDtypeStruct((NBT, TB, Opad), jnp.float32),
        grid=(NBT, L),
        in_specs=in_specs,
        out_specs=pl.BlockSpec((1, TB, Opad), lambda bt, l: (bt, 0, 0)),
        scratch_shapes=[pltpu.VMEM((TB * S, D), jnp.float32)],  # carried activations
        compiler_params=pltpu.CompilerParams(
            dimension_semantics=("parallel", "arbitrary"),
            vmem_limit_bytes=vmem_limit),
    )(xg, *layer_weights, *const_weights)

    return out.reshape(Bp, Opad)[:B, :O]


def init_params(key, d_model, dim_feedforward, num_layers, output_size):
    ks = jax.random.split(key, 10)

    def n(k, shape, scale=0.1):
        return (scale * jax.random.normal(k, shape)).astype(jnp.float32)

    return dict(
        wqkv=n(ks[0], (num_layers, d_model, 3 * d_model)),
        bqkv=n(ks[1], (num_layers, 1, 3 * d_model)),
        wout=n(ks[2], (num_layers, d_model, d_model)),
        bout=n(ks[3], (num_layers, 1, d_model)),
        w1=n(ks[4], (num_layers, d_model, dim_feedforward)),
        b1=n(ks[5], (num_layers, 1, dim_feedforward)),
        w2=n(ks[6], (num_layers, dim_feedforward, d_model)),
        b2=n(ks[7], (num_layers, 1, d_model)),
        ln1w=jnp.ones((num_layers, 1, d_model), jnp.float32),
        ln1b=jnp.zeros((num_layers, 1, d_model), jnp.float32),
        ln2w=jnp.ones((num_layers, 1, d_model), jnp.float32),
        ln2b=jnp.zeros((num_layers, 1, d_model), jnp.float32),
        wlin=n(ks[8], (d_model, output_size)),
        blin=n(ks[9], (1, output_size)),
    )


def reference_forward(x, params, *, nhead, max_seq_length=None):
    """Pure-JAX f32 reference mirroring torch.nn.TransformerEncoder (eval)."""
    if max_seq_length is not None:
        x = x[..., :max_seq_length, :]
    x = x.astype(jnp.float32)
    B, S, D = x.shape
    L = params["wqkv"].shape[0]
    dh = D // nhead
    for l in range(L):
        proj = jnp.einsum("bsd,de->bse", x, params["wqkv"][l]) + params["bqkv"][l]
        q, k, v = proj[..., :D], proj[..., D:2 * D], proj[..., 2 * D:]
        q = q.reshape(B, S, nhead, dh) / math.sqrt(dh)
        k = k.reshape(B, S, nhead, dh)
        v = v.reshape(B, S, nhead, dh)
        s = jnp.einsum("bqhd,bkhd->bhqk", q, k)
        p = jax.nn.softmax(s, axis=-1)
        ctx = jnp.einsum("bhqk,bkhd->bqhd", p, v).reshape(B, S, D)
        attn = jnp.einsum("bsd,de->bse", ctx, params["wout"][l]) + params["bout"][l]
        x = _layer_norm(x + attn, params["ln1w"][l], params["ln1b"][l])
        h1 = jax.nn.relu(jnp.einsum("bsd,df->bsf", x, params["w1"][l]) + params["b1"][l])
        ff = jnp.einsum("bsf,fd->bsd", h1, params["w2"][l]) + params["b2"][l]
        x = _layer_norm(x + ff, params["ln2w"][l], params["ln2b"][l])
    pooled = x.mean(axis=1)
    logits = pooled @ params["wlin"] + params["blin"][0]
    return jax.nn.sigmoid(logits)


if __name__ == "__main__":
    d_model = 32
    dim_feedforward = 64
    nhead = 4
    num_layers = 2
    output_size = 8
    max_seq_length = 8

    batch = 2
    seq_in = 10   # longer than max_seq_length to exercise the slicing

    key = jax.random.PRNGKey(0)
    kx, kp = jax.random.split(key)
    x = jax.random.normal(kx, (batch, seq_in, d_model), dtype=jnp.float32)
    params = init_params(kp, d_model, dim_feedforward, num_layers, output_size)

    ref = reference_forward(x, params, nhead=nhead, max_seq_length=max_seq_length)

    # exact-ish path (f32 matmuls) — tight tolerance
    out_f32 = transformer_encoding_forward(
        x, params, nhead=nhead, max_seq_length=max_seq_length,
        matmul_dtype=jnp.float32)
    out_f32 = jax.block_until_ready(out_f32)
    assert out_f32.shape == (batch, output_size), out_f32.shape
    assert jnp.allclose(out_f32, ref, atol=1e-4, rtol=1e-4), (out_f32, ref)

    # production path (bf16 matmuls, f32 accumulation / softmax / layer-norm)
    out_bf16 = transformer_encoding_forward(
        x, params, nhead=nhead, max_seq_length=max_seq_length)
    out_bf16 = jax.block_until_ready(out_bf16)
    assert out_bf16.shape == (batch, output_size), out_bf16.shape
    assert jnp.allclose(out_bf16, ref, atol=5e-2, rtol=5e-2), (out_bf16, ref)

    print("KERNEL_OK")
</pallas_src>

<mosaic_0001>
module attributes {stable_mosaic.version = 11 : i64} {
  func.func @transformer_kernel(%arg0: i32, %arg1: i32, %arg2: memref<1x2x8x32xf32, #tpu.memory_space<vmem>>, %arg3: memref<1x32x32xf32, #tpu.memory_space<vmem>>, %arg4: memref<1x1x32xf32, #tpu.memory_space<vmem>>, %arg5: memref<1x32x32xf32, #tpu.memory_space<vmem>>, %arg6: memref<1x1x32xf32, #tpu.memory_space<vmem>>, %arg7: memref<1x32x32xf32, #tpu.memory_space<vmem>>, %arg8: memref<1x1x32xf32, #tpu.memory_space<vmem>>, %arg9: memref<1x32x32xf32, #tpu.memory_space<vmem>>, %arg10: memref<1x1x32xf32, #tpu.memory_space<vmem>>, %arg11: memref<1x32x64xf32, #tpu.memory_space<vmem>>, %arg12: memref<1x1x64xf32, #tpu.memory_space<vmem>>, %arg13: memref<1x64x32xf32, #tpu.memory_space<vmem>>, %arg14: memref<1x1x32xf32, #tpu.memory_space<vmem>>, %arg15: memref<1x1x32xf32, #tpu.memory_space<vmem>>, %arg16: memref<1x1x32xf32, #tpu.memory_space<vmem>>, %arg17: memref<1x1x32xf32, #tpu.memory_space<vmem>>, %arg18: memref<1x1x32xf32, #tpu.memory_space<vmem>>, %arg19: memref<32x128xf32, #tpu.memory_space<vmem>>, %arg20: memref<1x128xf32, #tpu.memory_space<vmem>>, %arg21: memref<1x2x128xf32, #tpu.memory_space<vmem>>, %arg22: memref<16x32xf32, #tpu.memory_space<vmem>>) attributes {dimension_semantics = [#tpu.dimension_semantics<parallel>, #tpu.dimension_semantics<arbitrary>], iteration_bounds = array<i64: 1, 2>, scalar_prefetch = 0 : i64, scratch_operands = 1 : i64, tpu.core_type = #tpu.core_type<tc>, window_params = [{transform_indices = @transform_0, window_bounds = array<i64: 1, 2, 8, 32>}, {transform_indices = @transform_1, window_bounds = array<i64: 1, 32, 32>}, {transform_indices = @transform_2, window_bounds = array<i64: 1, 1, 32>}, {transform_indices = @transform_3, window_bounds = array<i64: 1, 32, 32>}, {transform_indices = @transform_4, window_bounds = array<i64: 1, 1, 32>}, {transform_indices = @transform_5, window_bounds = array<i64: 1, 32, 32>}, {transform_indices = @transform_6, window_bounds = array<i64: 1, 1, 32>}, {transform_indices = @transform_7, window_bounds = array<i64: 1, 32, 32>}, {transform_indices = @transform_8, window_bounds = array<i64: 1, 1, 32>}, {transform_indices = @transform_9, window_bounds = array<i64: 1, 32, 64>}, {transform_indices = @transform_10, window_bounds = array<i64: 1, 1, 64>}, {transform_indices = @transform_11, window_bounds = array<i64: 1, 64, 32>}, {transform_indices = @transform_12, window_bounds = array<i64: 1, 1, 32>}, {transform_indices = @transform_13, window_bounds = array<i64: 1, 1, 32>}, {transform_indices = @transform_14, window_bounds = array<i64: 1, 1, 32>}, {transform_indices = @transform_15, window_bounds = array<i64: 1, 1, 32>}, {transform_indices = @transform_16, window_bounds = array<i64: 1, 1, 32>}, {pipeline_mode = #tpu.pipeline_mode<synchronous>, transform_indices = @transform_17, window_bounds = array<i64: 32, 128>}, {pipeline_mode = #tpu.pipeline_mode<synchronous>, transform_indices = @transform_18, window_bounds = array<i64: 1, 128>}, {transform_indices = @transform_19, window_bounds = array<i64: 1, 2, 128>}]} {
    %c0_i32 = arith.constant 0 : i32
    %0 = arith.cmpi eq, %arg1, %c0_i32 : i32
    %1 = arith.extui %0 : i1 to i32
    %c0_i32_0 = arith.constant 0 : i32
    %2 = arith.cmpi ne, %1, %c0_i32_0 : i32
    scf.if %2 {
      %c0_89 = arith.constant 0 : index
      %c0_90 = arith.constant 0 : index
      %c0_91 = arith.constant 0 : index
      %c0_92 = arith.constant 0 : index
      %181 = vector.load %arg2[%c0_89, %c0_90, %c0_91, %c0_92] : memref<1x2x8x32xf32, #tpu.memory_space<vmem>>, vector<1x2x8x32xf32>
      %182 = vector.shape_cast %181 : vector<1x2x8x32xf32> to vector<2x8x32xf32>
      %183 = vector.shape_cast %182 : vector<2x8x32xf32> to vector<16x32xf32>
      %c0_93 = arith.constant 0 : index
      %c0_94 = arith.constant 0 : index
      %184 = vector.load %arg22[%c0_93, %c0_94] : memref<16x32xf32, #tpu.memory_space<vmem>>, vector<16x32xf32>
      tpu.vector_store %arg22[%c0_93, %c0_94], %183 {strides = array<i32>} : memref<16x32xf32, #tpu.memory_space<vmem>>, vector<16x32xf32>,
    } else {
    }
    %c0 = arith.constant 0 : index
    %c0_1 = arith.constant 0 : index
    %3 = vector.load %arg22[%c0, %c0_1] : memref<16x32xf32, #tpu.memory_space<vmem>>, vector<16x32xf32>
    %c0_2 = arith.constant 0 : index
    %c0_3 = arith.constant 0 : index
    %c0_4 = arith.constant 0 : index
    %4 = vector.load %arg3[%c0_2, %c0_3, %c0_4] : memref<1x32x32xf32, #tpu.memory_space<vmem>>, vector<1x32x32xf32>
    %5 = vector.shape_cast %4 : vector<1x32x32xf32> to vector<32x32xf32>
    %cst = arith.constant dense<0.000000e+00> : vector<16x32xf32>
    %6 = tpu.matmul %3, %5, %cst {dimension_numbers = #tpu.dot_dimension_numbers<[1], [0], [0], [1], [0, 0, 1, 1], [], []>} : vector<16x32xf32>, vector<32x32xf32>, vector<16x32xf32> -> vector<16x32xf32>
    %c0_5 = arith.constant 0 : index
    %c0_6 = arith.constant 0 : index
    %c0_7 = arith.constant 0 : index
    %7 = vector.load %arg4[%c0_5, %c0_6, %c0_7] : memref<1x1x32xf32, #tpu.memory_space<vmem>>, vector<1x1x32xf32>
    %8 = vector.shape_cast %7 : vector<1x1x32xf32> to vector<1x32xf32>
    %9 = vector.broadcast %8 : vector<1x32xf32> to vector<16x32xf32>
    %10 = arith.addf %6, %9 : vector<16x32xf32>
    %11 = vector.shape_cast %10 : vector<16x32xf32> to vector<2x8x32xf32>
    %c0_8 = arith.constant 0 : index
    %c0_9 = arith.constant 0 : index
    %c0_10 = arith.constant 0 : index
    %12 = vector.load %arg5[%c0_8, %c0_9, %c0_10] : memref<1x32x32xf32, #tpu.memory_space<vmem>>, vector<1x32x32xf32>
    %13 = vector.shape_cast %12 : vector<1x32x32xf32> to vector<32x32xf32>
    %cst_11 = arith.constant dense<0.000000e+00> : vector<16x32xf32>
    %14 = tpu.matmul %3, %13, %cst_11 {dimension_numbers = #tpu.dot_dimension_numbers<[1], [0], [0], [1], [0, 0, 1, 1], [], []>} : vector<16x32xf32>, vector<32x32xf32>, vector<16x32xf32> -> vector<16x32xf32>
    %c0_12 = arith.constant 0 : index
    %c0_13 = arith.constant 0 : index
    %c0_14 = arith.constant 0 : index
    %15 = vector.load %arg6[%c0_12, %c0_13, %c0_14] : memref<1x1x32xf32, #tpu.memory_space<vmem>>, vector<1x1x32xf32>
    %16 = vector.shape_cast %15 : vector<1x1x32xf32> to vector<1x32xf32>
    %17 = vector.broadcast %16 : vector<1x32xf32> to vector<16x32xf32>
    %18 = arith.addf %14, %17 : vector<16x32xf32>
    %19 = vector.shape_cast %18 : vector<16x32xf32> to vector<2x8x32xf32>
    %c0_15 = arith.constant 0 : index
    %c0_16 = arith.constant 0 : index
    %c0_17 = arith.constant 0 : index
    %20 = vector.load %arg7[%c0_15, %c0_16, %c0_17] : memref<1x32x32xf32, #tpu.memory_space<vmem>>, vector<1x32x32xf32>
    %21 = vector.shape_cast %20 : vector<1x32x32xf32> to vector<32x32xf32>
    %cst_18 = arith.constant dense<0.000000e+00> : vector<16x32xf32>
    %22 = tpu.matmul %3, %21, %cst_18 {dimension_numbers = #tpu.dot_dimension_numbers<[1], [0], [0], [1], [0, 0, 1, 1], [], []>} : vector<16x32xf32>, vector<32x32xf32>, vector<16x32xf32> -> vector<16x32xf32>
    %c0_19 = arith.constant 0 : index
    %c0_20 = arith.constant 0 : index
    %c0_21 = arith.constant 0 : index
    %23 = vector.load %arg8[%c0_19, %c0_20, %c0_21] : memref<1x1x32xf32, #tpu.memory_space<vmem>>, vector<1x1x32xf32>
    %24 = vector.shape_cast %23 : vector<1x1x32xf32> to vector<1x32xf32>
    %25 = vector.broadcast %24 : vector<1x32xf32> to vector<16x32xf32>
    %26 = arith.addf %22, %25 : vector<16x32xf32>
    %27 = vector.shape_cast %26 : vector<16x32xf32> to vector<2x8x32xf32>
    %c0_22 = arith.constant 0 : index
    %c0_23 = arith.constant 0 : index
    %c0_24 = arith.constant 0 : index
    %28 = vector.load %arg9[%c0_22, %c0_23, %c0_24] : memref<1x32x32xf32, #tpu.memory_space<vmem>>, vector<1x32x32xf32>
    %29 = vector.shape_cast %28 : vector<1x32x32xf32> to vector<32x32xf32>
    %cst_25 = arith.constant 0.000000e+00 : f32
    %30 = vector.broadcast %cst_25 : f32 to vector<16x32xf32>
    %31 = vector.extract_strided_slice %11 {offsets = [0, 0, 0], sizes = [2, 8, 8], strides = [1, 1, 1]} : vector<2x8x32xf32> to vector<2x8x8xf32>
    %32 = vector.extract_strided_slice %19 {offsets = [0, 0, 0], sizes = [2, 8, 8], strides = [1, 1, 1]} : vector<2x8x32xf32> to vector<2x8x8xf32>
    %33 = vector.extract_strided_slice %27 {offsets = [0, 0, 0], sizes = [2, 8, 8], strides = [1, 1, 1]} : vector<2x8x32xf32> to vector<2x8x8xf32>
    %cst_26 = arith.constant dense<0.000000e+00> : vector<2x8x8xf32>
    %34 = tpu.matmul %31, %32, %cst_26 {dimension_numbers = #tpu.dot_dimension_numbers<[2], [2], [1], [1], [0, 0, 0, 1, 1, 1], [0], [0]>} : vector<2x8x8xf32>, vector<2x8x8xf32>, vector<2x8x8xf32> -> vector<2x8x8xf32>
    %cst_27 = arith.constant dense<0xFF800000> : vector<2x8xf32>
    %35 = vector.multi_reduction <maximumf>, %34, %cst_27 [2] : vector<2x8x8xf32> to vector<2x8xf32>
    %36 = vector.shape_cast %35 : vector<2x8xf32> to vector<2x8x1xf32>
    %37 = vector.broadcast %36 : vector<2x8x1xf32> to vector<2x8x8xf32>
    %38 = arith.subf %34, %37 : vector<2x8x8xf32>
    %39 = math.exp %38 : vector<2x8x8xf32>
    %cst_28 = arith.constant dense<0.000000e+00> : vector<2x8xf32>
    %40 = vector.multi_reduction <add>, %39, %cst_28 [2] : vector<2x8x8xf32> to vector<2x8xf32>
    %41 = vector.shape_cast %40 : vector<2x8xf32> to vector<2x8x1xf32>
    %42 = vector.broadcast %41 : vector<2x8x1xf32> to vector<2x8x8xf32>
    %43 = arith.divf %39, %42 : vector<2x8x8xf32>
    %cst_29 = arith.constant dense<0.000000e+00> : vector<2x8x8xf32>
    %44 = tpu.matmul %43, %33, %cst_29 {dimension_numbers = #tpu.dot_dimension_numbers<[2], [1], [1], [2], [0, 0, 0, 1, 1, 2], [0], [0]>} : vector<2x8x8xf32>, vector<2x8x8xf32>, vector<2x8x8xf32> -> vector<2x8x8xf32>
    %45 = vector.shape_cast %44 : vector<2x8x8xf32> to vector<16x8xf32>
    %46 = vector.extract_strided_slice %29 {offsets = [0, 0], sizes = [8, 32], strides = [1, 1]} : vector<32x32xf32> to vector<8x32xf32>
    %cst_30 = arith.constant dense<0.000000e+00> : vector<16x32xf32>
    %47 = tpu.matmul %45, %46, %cst_30 {dimension_numbers = #tpu.dot_dimension_numbers<[1], [0], [0], [1], [0, 0, 1, 1], [], []>} : vector<16x8xf32>, vector<8x32xf32>, vector<16x32xf32> -> vector<16x32xf32>
    %48 = arith.addf %30, %47 : vector<16x32xf32>
    %49 = vector.extract_strided_slice %11 {offsets = [0, 0, 8], sizes = [2, 8, 8], strides = [1, 1, 1]} : vector<2x8x32xf32> to vector<2x8x8xf32>
    %50 = vector.extract_strided_slice %19 {offsets = [0, 0, 8], sizes = [2, 8, 8], strides = [1, 1, 1]} : vector<2x8x32xf32> to vector<2x8x8xf32>
    %51 = vector.extract_strided_slice %27 {offsets = [0, 0, 8], sizes = [2, 8, 8], strides = [1, 1, 1]} : vector<2x8x32xf32> to vector<2x8x8xf32>
    %cst_31 = arith.constant dense<0.000000e+00> : vector<2x8x8xf32>
    %52 = tpu.matmul %49, %50, %cst_31 {dimension_numbers = #tpu.dot_dimension_numbers<[2], [2], [1], [1], [0, 0, 0, 1, 1, 1], [0], [0]>} : vector<2x8x8xf32>, vector<2x8x8xf32>, vector<2x8x8xf32> -> vector<2x8x8xf32>
    %cst_32 = arith.constant dense<0xFF800000> : vector<2x8xf32>
    %53 = vector.multi_reduction <maximumf>, %52, %cst_32 [2] : vector<2x8x8xf32> to vector<2x8xf32>
    %54 = vector.shape_cast %53 : vector<2x8xf32> to vector<2x8x1xf32>
    %55 = vector.broadcast %54 : vector<2x8x1xf32> to vector<2x8x8xf32>
    %56 = arith.subf %52, %55 : vector<2x8x8xf32>
    %57 = math.exp %56 : vector<2x8x8xf32>
    %cst_33 = arith.constant dense<0.000000e+00> : vector<2x8xf32>
    %58 = vector.multi_reduction <add>, %57, %cst_33 [2] : vector<2x8x8xf32> to vector<2x8xf32>
    %59 = vector.shape_cast %58 : vector<2x8xf32> to vector<2x8x1xf32>
    %60 = vector.broadcast %59 : vector<2x8x1xf32> to vector<2x8x8xf32>
    %61 = arith.divf %57, %60 : vector<2x8x8xf32>
    %cst_34 = arith.constant dense<0.000000e+00> : vector<2x8x8xf32>
    %62 = tpu.matmul %61, %51, %cst_34 {dimension_numbers = #tpu.dot_dimension_numbers<[2], [1], [1], [2], [0, 0, 0, 1, 1, 2], [0], [0]>} : vector<2x8x8xf32>, vector<2x8x8xf32>, vector<2x8x8xf32> -> vector<2x8x8xf32>
    %63 = vector.shape_cast %62 : vector<2x8x8xf32> to vector<16x8xf32>
    %64 = vector.extract_strided_slice %29 {offsets = [8, 0], sizes = [8, 32], strides = [1, 1]} : vector<32x32xf32> to vector<8x32xf32>
    %cst_35 = arith.constant dense<0.000000e+00> : vector<16x32xf32>
    %65 = tpu.matmul %63, %64, %cst_35 {dimension_numbers = #tpu.dot_dimension_numbers<[1], [0], [0], [1], [0, 0, 1, 1], [], []>} : vector<16x8xf32>, vector<8x32xf32>, vector<16x32xf32> -> vector<16x32xf32>
    %66 = arith.addf %48, %65 : vector<16x32xf32>
    %67 = vector.extract_strided_slice %11 {offsets = [0, 0, 16], sizes = [2, 8, 8], strides = [1, 1, 1]} : vector<2x8x32xf32> to vector<2x8x8xf32>
    %68 = vector.extract_strided_slice %19 {offsets = [0, 0, 16], sizes = [2, 8, 8], strides = [1, 1, 1]} : vector<2x8x32xf32> to vector<2x8x8xf32>
    %69 = vector.extract_strided_slice %27 {offsets = [0, 0, 16], sizes = [2, 8, 8], strides = [1, 1, 1]} : vector<2x8x32xf32> to vector<2x8x8xf32>
    %cst_36 = arith.constant dense<0.000000e+00> : vector<2x8x8xf32>
    %70 = tpu.matmul %67, %68, %cst_36 {dimension_numbers = #tpu.dot_dimension_numbers<[2], [2], [1], [1], [0, 0, 0, 1, 1, 1], [0], [0]>} : vector<2x8x8xf32>, vector<2x8x8xf32>, vector<2x8x8xf32> -> vector<2x8x8xf32>
    %cst_37 = arith.constant dense<0xFF800000> : vector<2x8xf32>
    %71 = vector.multi_reduction <maximumf>, %70, %cst_37 [2] : vector<2x8x8xf32> to vector<2x8xf32>
    %72 = vector.shape_cast %71 : vector<2x8xf32> to vector<2x8x1xf32>
    %73 = vector.broadcast %72 : vector<2x8x1xf32> to vector<2x8x8xf32>
    %74 = arith.subf %70, %73 : vector<2x8x8xf32>
    %75 = math.exp %74 : vector<2x8x8xf32>
    %cst_38 = arith.constant dense<0.000000e+00> : vector<2x8xf32>
    %76 = vector.multi_reduction <add>, %75, %cst_38 [2] : vector<2x8x8xf32> to vector<2x8xf32>
    %77 = vector.shape_cast %76 : vector<2x8xf32> to vector<2x8x1xf32>
    %78 = vector.broadcast %77 : vector<2x8x1xf32> to vector<2x8x8xf32>
    %79 = arith.divf %75, %78 : vector<2x8x8xf32>
    %cst_39 = arith.constant dense<0.000000e+00> : vector<2x8x8xf32>
    %80 = tpu.matmul %79, %69, %cst_39 {dimension_numbers = #tpu.dot_dimension_numbers<[2], [1], [1], [2], [0, 0, 0, 1, 1, 2], [0], [0]>} : vector<2x8x8xf32>, vector<2x8x8xf32>, vector<2x8x8xf32> -> vector<2x8x8xf32>
    %81 = vector.shape_cast %80 : vector<2x8x8xf32> to vector<16x8xf32>
    %82 = vector.extract_strided_slice %29 {offsets = [16, 0], sizes = [8, 32], strides = [1, 1]} : vector<32x32xf32> to vector<8x32xf32>
    %cst_40 = arith.constant dense<0.000000e+00> : vector<16x32xf32>
    %83 = tpu.matmul %81, %82, %cst_40 {dimension_numbers = #tpu.dot_dimension_numbers<[1], [0], [0], [1], [0, 0, 1, 1], [], []>} : vector<16x8xf32>, vector<8x32xf32>, vector<16x32xf32> -> vector<16x32xf32>
    %84 = arith.addf %66, %83 : vector<16x32xf32>
    %85 = vector.extract_strided_slice %11 {offsets = [0, 0, 24], sizes = [2, 8, 8], strides = [1, 1, 1]} : vector<2x8x32xf32> to vector<2x8x8xf32>
    %86 = vector.extract_strided_slice %19 {offsets = [0, 0, 24], sizes = [2, 8, 8], strides = [1, 1, 1]} : vector<2x8x32xf32> to vector<2x8x8xf32>
    %87 = vector.extract_strided_slice %27 {offsets = [0, 0, 24], sizes = [2, 8, 8], strides = [1, 1, 1]} : vector<2x8x32xf32> to vector<2x8x8xf32>
    %cst_41 = arith.constant dense<0.000000e+00> : vector<2x8x8xf32>
    %88 = tpu.matmul %85, %86, %cst_41 {dimension_numbers = #tpu.dot_dimension_numbers<[2], [2], [1], [1], [0, 0, 0, 1, 1, 1], [0], [0]>} : vector<2x8x8xf32>, vector<2x8x8xf32>, vector<2x8x8xf32> -> vector<2x8x8xf32>
    %cst_42 = arith.constant dense<0xFF800000> : vector<2x8xf32>
    %89 = vector.multi_reduction <maximumf>, %88, %cst_42 [2] : vector<2x8x8xf32> to vector<2x8xf32>
    %90 = vector.shape_cast %89 : vector<2x8xf32> to vector<2x8x1xf32>
    %91 = vector.broadcast %90 : vector<2x8x1xf32> to vector<2x8x8xf32>
    %92 = arith.subf %88, %91 : vector<2x8x8xf32>
    %93 = math.exp %92 : vector<2x8x8xf32>
    %cst_43 = arith.constant dense<0.000000e+00> : vector<2x8xf32>
    %94 = vector.multi_reduction <add>, %93, %cst_43 [2] : vector<2x8x8xf32> to vector<2x8xf32>
    %95 = vector.shape_cast %94 : vector<2x8xf32> to vector<2x8x1xf32>
    %96 = vector.broadcast %95 : vector<2x8x1xf32> to vector<2x8x8xf32>
    %97 = arith.divf %93, %96 : vector<2x8x8xf32>
    %cst_44 = arith.constant dense<0.000000e+00> : vector<2x8x8xf32>
    %98 = tpu.matmul %97, %87, %cst_44 {dimension_numbers = #tpu.dot_dimension_numbers<[2], [1], [1], [2], [0, 0, 0, 1, 1, 2], [0], [0]>} : vector<2x8x8xf32>, vector<2x8x8xf32>, vector<2x8x8xf32> -> vector<2x8x8xf32>
    %99 = vector.shape_cast %98 : vector<2x8x8xf32> to vector<16x8xf32>
    %100 = vector.extract_strided_slice %29 {offsets = [24, 0], sizes = [8, 32], strides = [1, 1]} : vector<32x32xf32> to vector<8x32xf32>
    %cst_45 = arith.constant dense<0.000000e+00> : vector<16x32xf32>
    %101 = tpu.matmul %99, %100, %cst_45 {dimension_numbers = #tpu.dot_dimension_numbers<[1], [0], [0], [1], [0, 0, 1, 1], [], []>} : vector<16x8xf32>, vector<8x32xf32>, vector<16x32xf32> -> vector<16x32xf32>
    %102 = arith.addf %84, %101 : vector<16x32xf32>
    %c0_46 = arith.constant 0 : index
    %c0_47 = arith.constant 0 : index
    %c0_48 = arith.constant 0 : index
    %103 = vector.load %arg10[%c0_46, %c0_47, %c0_48] : memref<1x1x32xf32, #tpu.memory_space<vmem>>, vector<1x1x32xf32>
    %104 = vector.shape_cast %103 : vector<1x1x32xf32> to vector<1x32xf32>
    %105 = vector.broadcast %104 : vector<1x32xf32> to vector<16x32xf32>
    %106 = arith.addf %102, %105 : vector<16x32xf32>
    %107 = arith.addf %3, %106 : vector<16x32xf32>
    %c0_49 = arith.constant 0 : index
    %c0_50 = arith.constant 0 : index
    %c0_51 = arith.constant 0 : index
    %108 = vector.load %arg15[%c0_49, %c0_50, %c0_51] : memref<1x1x32xf32, #tpu.memory_space<vmem>>, vector<1x1x32xf32>
    %109 = vector.shape_cast %108 : vector<1x1x32xf32> to vector<1x32xf32>
    %c0_52 = arith.constant 0 : index
    %c0_53 = arith.constant 0 : index
    %c0_54 = arith.constant 0 : index
    %110 = vector.load %arg16[%c0_52, %c0_53, %c0_54] : memref<1x1x32xf32, #tpu.memory_space<vmem>>, vector<1x1x32xf32>
    %111 = vector.shape_cast %110 : vector<1x1x32xf32> to vector<1x32xf32>
    %cst_55 = arith.constant dense<0.000000e+00> : vector<16xf32>
    %112 = vector.multi_reduction <add>, %107, %cst_55 [1] : vector<16x32xf32> to vector<16xf32>
    %113 = vector.shape_cast %112 : vector<16xf32> to vector<16x1xf32>
    %cst_56 = arith.constant 3.200000e+01 : f32
    %114 = vector.broadcast %cst_56 : f32 to vector<16x1xf32>
    %115 = arith.divf %113, %114 : vector<16x1xf32>
    %116 = vector.broadcast %115 : vector<16x1xf32> to vector<16x32xf32>
    %117 = arith.subf %107, %116 : vector<16x32xf32>
    %118 = arith.mulf %117, %117 : vector<16x32xf32>
    %cst_57 = arith.constant dense<0.000000e+00> : vector<16xf32>
    %119 = vector.multi_reduction <add>, %118, %cst_57 [1] : vector<16x32xf32> to vector<16xf32>
    %120 = vector.shape_cast %119 : vector<16xf32> to vector<16x1xf32>
    %cst_58 = arith.constant 3.200000e+01 : f32
    %121 = vector.broadcast %cst_58 : f32 to vector<16x1xf32>
    %122 = arith.divf %120, %121 : vector<16x1xf32>
    %123 = vector.broadcast %115 : vector<16x1xf32> to vector<16x32xf32>
    %124 = arith.subf %107, %123 : vector<16x32xf32>
    %cst_59 = arith.constant 9.99999974E-6 : f32
    %125 = vector.broadcast %cst_59 : f32 to vector<16x1xf32>
    %126 = arith.addf %122, %125 : vector<16x1xf32>
    %127 = math.rsqrt %126 : vector<16x1xf32>
    %128 = vector.broadcast %127 : vector<16x1xf32> to vector<16x32xf32>
    %129 = arith.mulf %124, %128 : vector<16x32xf32>
    %130 = vector.broadcast %109 : vector<1x32xf32> to vector<16x32xf32>
    %131 = arith.mulf %129, %130 : vector<16x32xf32>
    %132 = vector.broadcast %111 : vector<1x32xf32> to vector<16x32xf32>
    %133 = arith.addf %131, %132 : vector<16x32xf32>
    %c0_60 = arith.constant 0 : index
    %c0_61 = arith.constant 0 : index
    %c0_62 = arith.constant 0 : index
    %134 = vector.load %arg11[%c0_60, %c0_61, %c0_62] : memref<1x32x64xf32, #tpu.memory_space<vmem>>, vector<1x32x64xf32>
    %135 = vector.shape_cast %134 : vector<1x32x64xf32> to vector<32x64xf32>
    %cst_63 = arith.constant dense<0.000000e+00> : vector<16x64xf32>
    %136 = tpu.matmul %133, %135, %cst_63 {dimension_numbers = #tpu.dot_dimension_numbers<[1], [0], [0], [1], [0, 0, 1, 1], [], []>} : vector<16x32xf32>, vector<32x64xf32>, vector<16x64xf32> -> vector<16x64xf32>
    %c0_64 = arith.constant 0 : index
    %c0_65 = arith.constant 0 : index
    %c0_66 = arith.constant 0 : index
    %137 = vector.load %arg12[%c0_64, %c0_65, %c0_66] : memref<1x1x64xf32, #tpu.memory_space<vmem>>, vector<1x1x64xf32>
    %138 = vector.shape_cast %137 : vector<1x1x64xf32> to vector<1x64xf32>
    %139 = vector.broadcast %138 : vector<1x64xf32> to vector<16x64xf32>
    %140 = arith.addf %136, %139 : vector<16x64xf32>
    %cst_67 = arith.constant 0.000000e+00 : f32
    %141 = vector.broadcast %cst_67 : f32 to vector<16x64xf32>
    %142 = arith.maximumf %140, %141 : vector<16x64xf32>
    %c0_68 = arith.constant 0 : index
    %c0_69 = arith.constant 0 : index
    %c0_70 = arith.constant 0 : index
    %143 = vector.load %arg13[%c0_68, %c0_69, %c0_70] : memref<1x64x32xf32, #tpu.memory_space<vmem>>, vector<1x64x32xf32>
    %144 = vector.shape_cast %143 : vector<1x64x32xf32> to vector<64x32xf32>
    %cst_71 = arith.constant dense<0.000000e+00> : vector<16x32xf32>
    %145 = tpu.matmul %142, %144, %cst_71 {dimension_numbers = #tpu.dot_dimension_numbers<[1], [0], [0], [1], [0, 0, 1, 1], [], []>} : vector<16x64xf32>, vector<64x32xf32>, vector<16x32xf32> -> vector<16x32xf32>
    %c0_72 = arith.constant 0 : index
    %c0_73 = arith.constant 0 : index
    %c0_74 = arith.constant 0 : index
    %146 = vector.load %arg14[%c0_72, %c0_73, %c0_74] : memref<1x1x32xf32, #tpu.memory_space<vmem>>, vector<1x1x32xf32>
    %147 = vector.shape_cast %146 : vector<1x1x32xf32> to vector<1x32xf32>
    %148 = vector.broadcast %147 : vector<1x32xf32> to vector<16x32xf32>
    %149 = arith.addf %145, %148 : vector<16x32xf32>
    %150 = arith.addf %133, %149 : vector<16x32xf32>
    %c0_75 = arith.constant 0 : index
    %c0_76 = arith.constant 0 : index
    %c0_77 = arith.constant 0 : index
    %151 = vector.load %arg17[%c0_75, %c0_76, %c0_77] : memref<1x1x32xf32, #tpu.memory_space<vmem>>, vector<1x1x32xf32>
    %152 = vector.shape_cast %151 : vector<1x1x32xf32> to vector<1x32xf32>
    %c0_78 = arith.constant 0 : index
    %c0_79 = arith.constant 0 : index
    %c0_80 = arith.constant 0 : index
    %153 = vector.load %arg18[%c0_78, %c0_79, %c0_80] : memref<1x1x32xf32, #tpu.memory_space<vmem>>, vector<1x1x32xf32>
    %154 = vector.shape_cast %153 : vector<1x1x32xf32> to vector<1x32xf32>
    %cst_81 = arith.constant dense<0.000000e+00> : vector<16xf32>
    %155 = vector.multi_reduction <add>, %150, %cst_81 [1] : vector<16x32xf32> to vector<16xf32>
    %156 = vector.shape_cast %155 : vector<16xf32> to vector<16x1xf32>
    %cst_82 = arith.constant 3.200000e+01 : f32
    %157 = vector.broadcast %cst_82 : f32 to vector<16x1xf32>
    %158 = arith.divf %156, %157 : vector<16x1xf32>
    %159 = vector.broadcast %158 : vector<16x1xf32> to vector<16x32xf32>
    %160 = arith.subf %150, %159 : vector<16x32xf32>
    %161 = arith.mulf %160, %160 : vector<16x32xf32>
    %cst_83 = arith.constant dense<0.000000e+00> : vector<16xf32>
    %162 = vector.multi_reduction <add>, %161, %cst_83 [1] : vector<16x32xf32> to vector<16xf32>
    %163 = vector.shape_cast %162 : vector<16xf32> to vector<16x1xf32>
    %cst_84 = arith.constant 3.200000e+01 : f32
    %164 = vector.broadcast %cst_84 : f32 to vector<16x1xf32>
    %165 = arith.divf %163, %164 : vector<16x1xf32>
    %166 = vector.broadcast %158 : vector<16x1xf32> to vector<16x32xf32>
    %167 = arith.subf %150, %166 : vector<16x32xf32>
    %cst_85 = arith.constant 9.99999974E-6 : f32
    %168 = vector.broadcast %cst_85 : f32 to vector<16x1xf32>
    %169 = arith.addf %165, %168 : vector<16x1xf32>
    %170 = math.rsqrt %169 : vector<16x1xf32>
    %171 = vector.broadcast %170 : vector<16x1xf32> to vector<16x32xf32>
    %172 = arith.mulf %167, %171 : vector<16x32xf32>
    %173 = vector.broadcast %152 : vector<1x32xf32> to vector<16x32xf32>
    %174 = arith.mulf %172, %173 : vector<16x32xf32>
    %175 = vector.broadcast %154 : vector<1x32xf32> to vector<16x32xf32>
    %176 = arith.addf %174, %175 : vector<16x32xf32>
    %c0_86 = arith.constant 0 : index
    %c0_87 = arith.constant 0 : index
    %177 = vector.load %arg22[%c0_86, %c0_87] : memref<16x32xf32, #tpu.memory_space<vmem>>, vector<16x32xf32>
    tpu.vector_store %arg22[%c0_86, %c0_87], %176 {strides = array<i32>} : memref<16x32xf32, #tpu.memory_space<vmem>>, vector<16x32xf32>,
    %c1_i32 = arith.constant 1 : i32
    %178 = arith.cmpi eq, %arg1, %c1_i32 : i32
    %179 = arith.extui %178 : i1 to i32
    %c0_i32_88 = arith.constant 0 : i32
    %180 = arith.cmpi ne, %179, %c0_i32_88 : i32
    scf.if %180 {
      %181 = vector.shape_cast %176 : vector<16x32xf32> to vector<2x8x32xf32>
      %cst_89 = arith.constant dense<0.000000e+00> : vector<2x32xf32>
      %182 = vector.multi_reduction <add>, %181, %cst_89 [1] : vector<2x8x32xf32> to vector<2x32xf32>
      %cst_90 = arith.constant 1.250000e-01 : f32
      %183 = vector.broadcast %cst_90 : f32 to vector<2x32xf32>
      %184 = arith.mulf %182, %183 : vector<2x32xf32>
      %c0_91 = arith.constant 0 : index
      %c0_92 = arith.constant 0 : index
      %185 = vector.load %arg19[%c0_91, %c0_92] : memref<32x128xf32, #tpu.memory_space<vmem>>, vector<32x128xf32>
      %cst_93 = arith.constant dense<0.000000e+00> : vector<2x128xf32>
      %186 = tpu.matmul %184, %185, %cst_93 {dimension_numbers = #tpu.dot_dimension_numbers<[1], [0], [0], [1], [0, 0, 1, 1], [], []>} : vector<2x32xf32>, vector<32x128xf32>, vector<2x128xf32> -> vector<2x128xf32>
      %c0_94 = arith.constant 0 : index
      %c0_95 = arith.constant 0 : index
      %187 = vector.load %arg20[%c0_94, %c0_95] : memref<1x128xf32, #tpu.memory_space<vmem>>, vector<1x128xf32>
      %188 = vector.broadcast %187 : vector<1x128xf32> to vector<2x128xf32>
      %189 = arith.addf %186, %188 : vector<2x128xf32>
      %190 = arith.negf %189 : vector<2x128xf32>
      %191 = math.exp %190 : vector<2x128xf32>
      %cst_96 = arith.constant 1.000000e+00 : f32
      %192 = vector.broadcast %cst_96 : f32 to vector<2x128xf32>
      %193 = arith.addf %192, %191 : vector<2x128xf32>
      %194 = arith.divf %192, %193 : vector<2x128xf32>
      %c0_97 = arith.constant 0 : index
      %c0_98 = arith.constant 0 : index
      %c0_99 = arith.constant 0 : index
      %195 = vector.load %arg21[%c0_97, %c0_98, %c0_99] : memref<1x2x128xf32, #tpu.memory_space<vmem>>, vector<1x2x128xf32>
      %196 = vector.shape_cast %195 : vector<1x2x128xf32> to vector<2x128xf32>
      %197 = vector.shape_cast %194 : vector<2x128xf32> to vector<1x2x128xf32>
      tpu.vector_store %arg21[%c0_97, %c0_98, %c0_99], %197 {strides = array<i32>} : memref<1x2x128xf32, #tpu.memory_space<vmem>>, vector<1x2x128xf32>,
    } else {
    }
    return
  }
  func.func @transform_0(%arg0: i32, %arg1: i32) -> (i32, i32, i32, i32) {
    %c0_i32 = arith.constant 0 : i32
    %c0_i32_0 = arith.constant 0 : i32
    %c0_i32_1 = arith.constant 0 : i32
    %c0_i32_2 = arith.constant 0 : i32
    return %arg0, %c0_i32, %c0_i32_0, %c0_i32_1 : i32, i32, i32, i32
  }
  func.func @transform_1(%arg0: i32, %arg1: i32) -> (i32, i32, i32) {
    %c0_i32 = arith.constant 0 : i32
    %c0_i32_0 = arith.constant 0 : i32
    %c0_i32_1 = arith.constant 0 : i32
    return %arg1, %c0_i32, %c0_i32_0 : i32, i32, i32
  }
  func.func @transform_2(%arg0: i32, %arg1: i32) -> (i32, i32, i32) {
    %c0_i32 = arith.constant 0 : i32
    %c0_i32_0 = arith.constant 0 : i32
    %c0_i32_1 = arith.constant 0 : i32
    return %arg1, %c0_i32, %c0_i32_0 : i32, i32, i32
  }
  func.func @transform_3(%arg0: i32, %arg1: i32) -> (i32, i32, i32) {
    %c0_i32 = arith.constant 0 : i32
    %c0_i32_0 = arith.constant 0 : i32
    %c0_i32_1 = arith.constant 0 : i32
    return %arg1, %c0_i32, %c0_i32_0 : i32, i32, i32
  }
  func.func @transform_4(%arg0: i32, %arg1: i32) -> (i32, i32, i32) {
    %c0_i32 = arith.constant 0 : i32
    %c0_i32_0 = arith.constant 0 : i32
    %c0_i32_1 = arith.constant 0 : i32
    return %arg1, %c0_i32, %c0_i32_0 : i32, i32, i32
  }
  func.func @transform_5(%arg0: i32, %arg1: i32) -> (i32, i32, i32) {
    %c0_i32 = arith.constant 0 : i32
    %c0_i32_0 = arith.constant 0 : i32
    %c0_i32_1 = arith.constant 0 : i32
    return %arg1, %c0_i32, %c0_i32_0 : i32, i32, i32
  }
  func.func @transform_6(%arg0: i32, %arg1: i32) -> (i32, i32, i32) {
    %c0_i32 = arith.constant 0 : i32
    %c0_i32_0 = arith.constant 0 : i32
    %c0_i32_1 = arith.constant 0 : i32
    return %arg1, %c0_i32, %c0_i32_0 : i32, i32, i32
  }
  func.func @transform_7(%arg0: i32, %arg1: i32) -> (i32, i32, i32) {
    %c0_i32 = arith.constant 0 : i32
    %c0_i32_0 = arith.constant 0 : i32
    %c0_i32_1 = arith.constant 0 : i32
    return %arg1, %c0_i32, %c0_i32_0 : i32, i32, i32
  }
  func.func @transform_8(%arg0: i32, %arg1: i32) -> (i32, i32, i32) {
    %c0_i32 = arith.constant 0 : i32
    %c0_i32_0 = arith.constant 0 : i32
    %c0_i32_1 = arith.constant 0 : i32
    return %arg1, %c0_i32, %c0_i32_0 : i32, i32, i32
  }
  func.func @transform_9(%arg0: i32, %arg1: i32) -> (i32, i32, i32) {
    %c0_i32 = arith.constant 0 : i32
    %c0_i32_0 = arith.constant 0 : i32
    %c0_i32_1 = arith.constant 0 : i32
    return %arg1, %c0_i32, %c0_i32_0 : i32, i32, i32
  }
  func.func @transform_10(%arg0: i32, %arg1: i32) -> (i32, i32, i32) {
    %c0_i32 = arith.constant 0 : i32
    %c0_i32_0 = arith.constant 0 : i32
    %c0_i32_1 = arith.constant 0 : i32
    return %arg1, %c0_i32, %c0_i32_0 : i32, i32, i32
  }
  func.func @transform_11(%arg0: i32, %arg1: i32) -> (i32, i32, i32) {
    %c0_i32 = arith.constant 0 : i32
    %c0_i32_0 = arith.constant 0 : i32
    %c0_i32_1 = arith.constant 0 : i32
    return %arg1, %c0_i32, %c0_i32_0 : i32, i32, i32
  }
  func.func @transform_12(%arg0: i32, %arg1: i32) -> (i32, i32, i32) {
    %c0_i32 = arith.constant 0 : i32
    %c0_i32_0 = arith.constant 0 : i32
    %c0_i32_1 = arith.constant 0 : i32
    return %arg1, %c0_i32, %c0_i32_0 : i32, i32, i32
  }
  func.func @transform_13(%arg0: i32, %arg1: i32) -> (i32, i32, i32) {
    %c0_i32 = arith.constant 0 : i32
    %c0_i32_0 = arith.constant 0 : i32
    %c0_i32_1 = arith.constant 0 : i32
    return %arg1, %c0_i32, %c0_i32_0 : i32, i32, i32
  }
  func.func @transform_14(%arg0: i32, %arg1: i32) -> (i32, i32, i32) {
    %c0_i32 = arith.constant 0 : i32
    %c0_i32_0 = arith.constant 0 : i32
    %c0_i32_1 = arith.constant 0 : i32
    return %arg1, %c0_i32, %c0_i32_0 : i32, i32, i32
  }
  func.func @transform_15(%arg0: i32, %arg1: i32) -> (i32, i32, i32) {
    %c0_i32 = arith.constant 0 : i32
    %c0_i32_0 = arith.constant 0 : i32
    %c0_i32_1 = arith.constant 0 : i32
    return %arg1, %c0_i32, %c0_i32_0 : i32, i32, i32
  }
  func.func @transform_16(%arg0: i32, %arg1: i32) -> (i32, i32, i32) {
    %c0_i32 = arith.constant 0 : i32
    %c0_i32_0 = arith.constant 0 : i32
    %c0_i32_1 = arith.constant 0 : i32
    return %arg1, %c0_i32, %c0_i32_0 : i32, i32, i32
  }
  func.func @transform_17(%arg0: i32, %arg1: i32) -> (i32, i32) {
    %c0_i32 = arith.constant 0 : i32
    %c0_i32_0 = arith.constant 0 : i32
    %c0_i32_1 = arith.constant 0 : i32
    return %c0_i32, %c0_i32_0 : i32, i32
  }
  func.func @transform_18(%arg0: i32, %arg1: i32) -> (i32, i32) {
    %c0_i32 = arith.constant 0 : i32
    %c0_i32_0 = arith.constant 0 : i32
    %c0_i32_1 = arith.constant 0 : i32
    return %c0_i32, %c0_i32_0 : i32, i32
  }
  func.func @transform_19(%arg0: i32, %arg1: i32) -> (i32, i32, i32) {
    %c0_i32 = arith.constant 0 : i32
    %c0_i32_0 = arith.constant 0 : i32
    %c0_i32_1 = arith.constant 0 : i32
    return %arg0, %c0_i32, %c0_i32_0 : i32, i32, i32
  }
}

</mosaic_0001>

<llo_original>
// kernel: tpu_custom_call.1
$region0: #{tpu_custom_call.1}
  #allocation0 [shape = 'u32[]', space=smem, size = 0x4, offset = 0x4, fixed_abs, tag = 'smem constant byte address 0x4 - core index']
  #allocation1 [shape = 'u32[144,128]{1,0:T(1,128)}', space=vmem, size = 0x12000, scoped, tag = 'internal scratch']
  #allocation2 [shape = 'f32[16,32]{1,0:T(8,128)}', space=vmem, size = 0x2000, scoped, tag = 'scratch operand']
  %s0 = inlined_call_operand.hbm [shape: f32[1,2,8,32], index: 0, kind: input, shape index: {}]
  %s1 = inlined_call_operand.vmem [shape: f32[2,32,32], index: 1, kind: input, shape index: {}]
  %s2 = inlined_call_operand.vmem [shape: f32[2,1,32], index: 2, kind: input, shape index: {}]
  %s3 = inlined_call_operand.vmem [shape: f32[2,32,32], index: 3, kind: input, shape index: {}]
  %s4 = inlined_call_operand.hbm [shape: f32[2,1,32], index: 4, kind: input, shape index: {}]
  %s5 = inlined_call_operand.vmem [shape: f32[2,32,32], index: 5, kind: input, shape index: {}]
  %s6 = inlined_call_operand.hbm [shape: f32[2,1,32], index: 6, kind: input, shape index: {}]
  %s7 = inlined_call_operand.hbm [shape: f32[2,32,32], index: 7, kind: input, shape index: {}]
  %s8 = inlined_call_operand.hbm [shape: f32[2,1,32], index: 8, kind: input, shape index: {}]
  %s9 = inlined_call_operand.hbm [shape: f32[2,32,64], index: 9, kind: input, shape index: {}]
  %s10 = inlined_call_operand.vmem [shape: f32[2,1,64], index: 10, kind: input, shape index: {}]
  %s11 = inlined_call_operand.vmem [shape: f32[2,64,32], index: 11, kind: input, shape index: {}]
  %s12 = inlined_call_operand.vmem [shape: f32[2,1,32], index: 12, kind: input, shape index: {}]
  %s13 = inlined_call_operand.vmem [shape: f32[2,1,32], index: 13, kind: input, shape index: {}]
  %s14 = inlined_call_operand.vmem [shape: f32[2,1,32], index: 14, kind: input, shape index: {}]
  %s15 = inlined_call_operand.vmem [shape: f32[2,1,32], index: 15, kind: input, shape index: {}]
  %s16 = inlined_call_operand.vmem [shape: f32[2,1,32], index: 16, kind: input, shape index: {}]
  %s17 = inlined_call_operand.vmem [shape: f32[32,128], index: 17, kind: input, shape index: {}]
  %s18 = inlined_call_operand.vmem [shape: f32[1,128], index: 18, kind: input, shape index: {}]
  %s19 = inlined_call_operand.hbm [shape: f32[1,2,128], index: 19, kind: output, shape index: {}]
  %s20 = sld [smem:[#allocation0]]
  $region141: #{tpu_custom_call.1} parent=0
    _
  %s22 = ssub.s32 1, %s20
  %s23 = scalar_select 0, %s22, %s20
  $region1: #{tpu_custom_call.1} parent=0
    #allocation3 [shape = 'u8[8192]{0}', space=vmem, size = 0x2000, scoped, tag = 'input window, operand 0, single buffered']
    #allocation4 [shape = 's32[2]{0}', space=sflag, size = 0x8, scoped, tag = 'scoped memory for tpu_custom_call.1']
    #allocation5 [shape = 's32[2]{0}', space=sflag, size = 0x8, scoped, tag = 'scoped memory for tpu_custom_call.1']
    #allocation6 [shape = 'u8[1024]{0}', space=vmem, size = 0x400, scoped, tag = 'input window, operand 4']
    #allocation7 [shape = 's32[2]{0}', space=sflag, size = 0x8, scoped, tag = 'scoped memory for tpu_custom_call.1']
    #allocation8 [shape = 'u8[1024]{0}', space=vmem, size = 0x400, scoped, tag = 'input window, operand 6']
    #allocation9 [shape = 'u8[32768]{0}', space=vmem, size = 0x8000, scoped, tag = 'input window, operand 7']
    #allocation10 [shape = 's32[2]{0}', space=sflag, size = 0x8, scoped, tag = 'scoped memory for tpu_custom_call.1']
    #allocation11 [shape = 'u8[1024]{0}', space=vmem, size = 0x400, scoped, tag = 'input window, operand 8']
    #allocation12 [shape = 'u8[32768]{0}', space=vmem, size = 0x8000, scoped, tag = 'input window, operand 9']
    #allocation13 [shape = 's32[2]{0}', space=sflag, size = 0x8, scoped, tag = 'scoped memory for tpu_custom_call.1']
    #allocation14 [shape = 'u8[1024]{0}', space=vmem, size = 0x400, scoped, tag = 'output window, operand 0, single buffered']
    %24 = vsyncpa [#allocation4], 0
    %25 = vsyncpa [#allocation7], 0
    %s26 = scalar_lea.sflag [#allocation7], 1
    %27 = vsyncpa %s26, 0
    %28 = vsyncpa [#allocation10], 0
    %s29 = scalar_lea.sflag [#allocation10], 1
    %30 = vsyncpa %s29, 0
    %31 = vsyncpa [#allocation13], 0
    %s32 = scalar_lea.sflag [#allocation13], 1
    %33 = vsyncpa %s32, 0
    %34 = vsyncpa [#allocation5], 0
    loop: start=0, step=1, limit=4
    $region2: #{tpu_custom_call.1} parent=1 // loop_pre_header
      _
    $region3: #{tpu_custom_call.1} parent=1 // loop_header
      %s36 = sphi 0, %s40
      %p37 = scmp.ge.s32.totalorder %s36, 4
      %s43 = sphi 0, %s55
      %s44 = sphi 0, %s51
      %s45 = sphi 0, %s43
      %s46 = sphi 0, %s44
      %s47 = sphi 0, %s45
      %s48 = sphi 0, %s46
      %s58 = sphi 0, %s60
      %s61 = sphi 0, %s58
      %s62 = sphi 0, %s61
      %s78 = sphi 0, %s62
      %s84 = sphi 0, %s86
      %s87 = sphi 0, %s84
      %s88 = sphi 0, %s87
      %s104 = sphi 0, %s88
      %s110 = sphi 0, %s112
      %s113 = sphi 0, %s110
      %s114 = sphi 0, %s113
      %s130 = sphi 0, %s114
      %s136 = sphi 0, %s138
      %s139 = sphi 0, %s136
      %s140 = sphi 0, %s139
      %s156 = sphi 0, %s140
      %s162 = sphi 0, %s164
      %s165 = sphi 0, %s162
      %s166 = sphi 0, %s165
      %s182 = sphi 0, %s166
      %s188 = sphi 0, %s190
      %s191 = sphi 0, %s188
      %s192 = sphi 0, %s191
      %s208 = sphi 0, %s192
      %s214 = sphi 0, %s216
      %s217 = sphi 0, %s214
      %s218 = sphi 0, %s217
      %s234 = sphi 0, %s218
      %s240 = sphi 0, %s242
      %s243 = sphi 0, %s240
      %s244 = sphi 0, %s243
      %s260 = sphi 0, %s244
      %s266 = sphi 0, %s268
      %s269 = sphi 0, %s266
      %s270 = sphi 0, %s269
      %s286 = sphi 0, %s270
      %s292 = sphi 0, %s294
      %s295 = sphi 0, %s292
      %s296 = sphi 0, %s295
      %s312 = sphi 0, %s296
      %s318 = sphi 0, %s320
      %s321 = sphi 0, %s318
      %s322 = sphi 0, %s321
      %s338 = sphi 0, %s322
      %s344 = sphi 0, %s346
      %s347 = sphi 0, %s344
      %s348 = sphi 0, %s347
      %s364 = sphi 0, %s348
      %s370 = sphi 0, %s372
      %s373 = sphi 0, %s370
      %s374 = sphi 0, %s373
      %s390 = sphi 0, %s374
      %s396 = sphi 0, %s398
      %s399 = sphi 0, %s396
      %s400 = sphi 0, %s399
      %s416 = sphi 0, %s400
      %s422 = sphi 0, %s424
      %s425 = sphi 0, %s422
      %s426 = sphi 0, %s425
      %s442 = sphi 0, %s426
      %s448 = sphi 0, %s450
      %s451 = sphi 0, %s448
      %s452 = sphi 0, %s451
      %s468 = sphi 0, %s452
      %s474 = sphi 0, %s476
      %s477 = sphi 0, %s474
      %s478 = sphi 0, %s477
      %s494 = sphi 0, %s478
      %s498 = sphi 0, %s498
      %s500 = sphi 0, %s498
      %s501 = sphi 0, %s500
      %s515 = sphi 0, %s501
      %s519 = sphi 0, %s519
      %s521 = sphi 0, %s519
      %s522 = sphi 0, %s521
      %s536 = sphi 0, %s522
      %s542 = sphi 0, %s544
      %s545 = sphi 0, %s542
      %s546 = sphi 0, %s545
      %s562 = sphi 0, %s546
    $region4: #{tpu_custom_call.1} parent=1 // loop_header_branch
      %39 = sbr.rel (%p37) target = $region8
    $region5: #{tpu_custom_call.1} parent=1 // loop_body
      %s41 = ssub.s32 %s36, 1
      %s42 = ssub.s32 %s36, 2
      %s49 = sadd.s32 1, %s44
      %p50 = scmp.ge.s32.totalorder %s49, 2
      %s51 = scalar_select %p50, 0, %s49
      %s52 = sadd.s32 1, %s43
      %s53 = scalar_select %p50, %s52, %s43
      %p54 = scmp.ge.s32.totalorder %s53, 1
      %s55 = scalar_select %p54, 0, %s53
      %s56 = ssub.s32 %s43, %s55
      %p57 = scmp.eq.s32.totalorder %s56, 0
      %s59 = sadd.s32 %s58, 1
      %s60 = scalar_select %p57, %s58, %s59
      %p63 = pneg %p57
      %p64 = scmp.eq.s32.totalorder %s36, 1
      %p65 = por %p63, %p64
      %p66 = scmp.ne.s32.totalorder %s58, %s61
      %p67 = scmp.eq.s32.totalorder %s36, 0
      %p68 = por %p66, %p67
      %p69 = scmp.ne.s32.totalorder %s58, %s61
      %p70 = scmp.eq.s32.totalorder %s41, 1
      %p71 = por %p69, %p70
      %p72 = scmp.ne.s32.totalorder %s61, %s62
      %p73 = scmp.eq.s32.totalorder %s41, 0
      %p74 = por %p72, %p73
      %p75 = scmp.ne.s32.totalorder %s61, %s62
      %p76 = scmp.eq.s32.totalorder %s42, 1
      %p77 = por %p75, %p76
      %p79 = scmp.ne.s32.totalorder %s62, %s78
      %p80 = scmp.eq.s32.totalorder %s42, 0
      %p81 = por %p79, %p80
      %s82 = ssub.s32 %s44, %s51
      %p83 = scmp.eq.s32.totalorder %s82, 0
      %s85 = sadd.s32 %s84, 1
      %s86 = scalar_select %p83, %s84, %s85
      %p89 = pneg %p83
      %p90 = scmp.eq.s32.totalorder %s36, 1
      %p91 = por %p89, %p90
      %p92 = scmp.ne.s32.totalorder %s84, %s87
      %p93 = scmp.eq.s32.totalorder %s36, 0
      %p94 = por %p92, %p93
      %p95 = scmp.ne.s32.totalorder %s84, %s87
      %p96 = scmp.eq.s32.totalorder %s41, 1
      %p97 = por %p95, %p96
      %p98 = scmp.ne.s32.totalorder %s87, %s88
      %p99 = scmp.eq.s32.totalorder %s41, 0
      %p100 = por %p98, %p99
      %p101 = scmp.ne.s32.totalorder %s87, %s88
      %p102 = scmp.eq.s32.totalorder %s42, 1
      %p103 = por %p101, %p102
      %p105 = scmp.ne.s32.totalorder %s88, %s104
      %p106 = scmp.eq.s32.totalorder %s42, 0
      %p107 = por %p105, %p106
      %s108 = ssub.s32 %s44, %s51
      %p109 = scmp.eq.s32.totalorder %s108, 0
      %s111 = sadd.s32 %s110, 1
      %s112 = scalar_select %p109, %s110, %s111
      %p115 = pneg %p109
      %p116 = scmp.eq.s32.totalorder %s36, 1
      %p117 = por %p115, %p116
      %p118 = scmp.ne.s32.totalorder %s110, %s113
      %p119 = scmp.eq.s32.totalorder %s36, 0
      %p120 = por %p118, %p119
      %p121 = scmp.ne.s32.totalorder %s110, %s113
      %p122 = scmp.eq.s32.totalorder %s41, 1
      %p123 = por %p121, %p122
      %p124 = scmp.ne.s32.totalorder %s113, %s114
      %p125 = scmp.eq.s32.totalorder %s41, 0
      %p126 = por %p124, %p125
      %p127 = scmp.ne.s32.totalorder %s113, %s114
      %p128 = scmp.eq.s32.totalorder %s42, 1
      %p129 = por %p127, %p128
      %p131 = scmp.ne.s32.totalorder %s114, %s130
      %p132 = scmp.eq.s32.totalorder %s42, 0
      %p133 = por %p131, %p132
      %s134 = ssub.s32 %s44, %s51
      %p135 = scmp.eq.s32.totalorder %s134, 0
      %s137 = sadd.s32 %s136, 1
      %s138 = scalar_select %p135, %s136, %s137
      %p141 = pneg %p135
      %p142 = scmp.eq.s32.totalorder %s36, 1
      %p143 = por %p141, %p142
      %p144 = scmp.ne.s32.totalorder %s136, %s139
      %p145 = scmp.eq.s32.totalorder %s36, 0
      %p146 = por %p144, %p145
      %p147 = scmp.ne.s32.totalorder %s136, %s139
      %p148 = scmp.eq.s32.totalorder %s41, 1
      %p149 = por %p147, %p148
      %p150 = scmp.ne.s32.totalorder %s139, %s140
      %p151 = scmp.eq.s32.totalorder %s41, 0
      %p152 = por %p150, %p151
      %p153 = scmp.ne.s32.totalorder %s139, %s140
      %p154 = scmp.eq.s32.totalorder %s42, 1
      %p155 = por %p153, %p154
      %p157 = scmp.ne.s32.totalorder %s140, %s156
      %p158 = scmp.eq.s32.totalorder %s42, 0
      %p159 = por %p157, %p158
      %s160 = ssub.s32 %s44, %s51
      %p161 = scmp.eq.s32.totalorder %s160, 0
      %s163 = sadd.s32 %s162, 1
      %s164 = scalar_select %p161, %s162, %s163
      %p167 = pneg %p161
      %p168 = scmp.eq.s32.totalorder %s36, 1
      %p169 = por %p167, %p168
      %p170 = scmp.ne.s32.totalorder %s162, %s165
      %p171 = scmp.eq.s32.totalorder %s36, 0
      %p172 = por %p170, %p171
      %p173 = scmp.ne.s32.totalorder %s162, %s165
      %p174 = scmp.eq.s32.totalorder %s41, 1
      %p175 = por %p173, %p174
      %p176 = scmp.ne.s32.totalorder %s165, %s166
      %p177 = scmp.eq.s32.totalorder %s41, 0
      %p178 = por %p176, %p177
      %p179 = scmp.ne.s32.totalorder %s165, %s166
      %p180 = scmp.eq.s32.totalorder %s42, 1
      %p181 = por %p179, %p180
      %p183 = scmp.ne.s32.totalorder %s166, %s182
      %p184 = scmp.eq.s32.totalorder %s42, 0
      %p185 = por %p183, %p184
      %s186 = ssub.s32 %s44, %s51
      %p187 = scmp.eq.s32.totalorder %s186, 0
      %s189 = sadd.s32 %s188, 1
      %s190 = scalar_select %p187, %s188, %s189
      %p193 = pneg %p187
      %p194 = scmp.eq.s32.totalorder %s36, 1
      %p195 = por %p193, %p194
      %p196 = scmp.ne.s32.totalorder %s188, %s191
      %p197 = scmp.eq.s32.totalorder %s36, 0
      %p198 = por %p196, %p197
      %p199 = scmp.ne.s32.totalorder %s188, %s191
      %p200 = scmp.eq.s32.totalorder %s41, 1
      %p201 = por %p199, %p200
      %p202 = scmp.ne.s32.totalorder %s191, %s192
      %p203 = scmp.eq.s32.totalorder %s41, 0
      %p204 = por %p202, %p203
      %p205 = scmp.ne.s32.totalorder %s191, %s192
      %p206 = scmp.eq.s32.totalorder %s42, 1
      %p207 = por %p205, %p206
      %p209 = scmp.ne.s32.totalorder %s192, %s208
      %p210 = scmp.eq.s32.totalorder %s42, 0
      %p211 = por %p209, %p210
      %s212 = ssub.s32 %s44, %s51
      %p213 = scmp.eq.s32.totalorder %s212, 0
      %s215 = sadd.s32 %s214, 1
      %s216 = scalar_select %p213, %s214, %s215
      %p219 = pneg %p213
      %p220 = scmp.eq.s32.totalorder %s36, 1
      %p221 = por %p219, %p220
      %p222 = scmp.ne.s32.totalorder %s214, %s217
      %p223 = scmp.eq.s32.totalorder %s36, 0
      %p224 = por %p222, %p223
      %p225 = scmp.ne.s32.totalorder %s214, %s217
      %p226 = scmp.eq.s32.totalorder %s41, 1
      %p227 = por %p225, %p226
      %p228 = scmp.ne.s32.totalorder %s217, %s218
      %p229 = scmp.eq.s32.totalorder %s41, 0
      %p230 = por %p228, %p229
      %p231 = scmp.ne.s32.totalorder %s217, %s218
      %p232 = scmp.eq.s32.totalorder %s42, 1
      %p233 = por %p231, %p232
      %p235 = scmp.ne.s32.totalorder %s218, %s234
      %p236 = scmp.eq.s32.totalorder %s42, 0
      %p237 = por %p235, %p236
      %s238 = ssub.s32 %s44, %s51
      %p239 = scmp.eq.s32.totalorder %s238, 0
      %s241 = sadd.s32 %s240, 1
      %s242 = scalar_select %p239, %s240, %s241
      %p245 = pneg %p239
      %p246 = scmp.eq.s32.totalorder %s36, 1
      %p247 = por %p245, %p246
      %p248 = scmp.ne.s32.totalorder %s240, %s243
      %p249 = scmp.eq.s32.totalorder %s36, 0
      %p250 = por %p248, %p249
      %p251 = scmp.ne.s32.totalorder %s240, %s243
      %p252 = scmp.eq.s32.totalorder %s41, 1
      %p253 = por %p251, %p252
      %p254 = scmp.ne.s32.totalorder %s243, %s244
      %p255 = scmp.eq.s32.totalorder %s41, 0
      %p256 = por %p254, %p255
      %p257 = scmp.ne.s32.totalorder %s243, %s244
      %p258 = scmp.eq.s32.totalorder %s42, 1
      %p259 = por %p257, %p258
      %p261 = scmp.ne.s32.totalorder %s244, %s260
      %p262 = scmp.eq.s32.totalorder %s42, 0
      %p263 = por %p261, %p262
      %s264 = ssub.s32 %s44, %s51
      %p265 = scmp.eq.s32.totalorder %s264, 0
      %s267 = sadd.s32 %s266, 1
      %s268 = scalar_select %p265, %s266, %s267
      %p271 = pneg %p265
      %p272 = scmp.eq.s32.totalorder %s36, 1
      %p273 = por %p271, %p272
      %p274 = scmp.ne.s32.totalorder %s266, %s269
      %p275 = scmp.eq.s32.totalorder %s36, 0
      %p276 = por %p274, %p275
      %p277 = scmp.ne.s32.totalorder %s266, %s269
      %p278 = scmp.eq.s32.totalorder %s41, 1
      %p279 = por %p277, %p278
      %p280 = scmp.ne.s32.totalorder %s269, %s270
      %p281 = scmp.eq.s32.totalorder %s41, 0
      %p282 = por %p280, %p281
      %p283 = scmp.ne.s32.totalorder %s269, %s270
      %p284 = scmp.eq.s32.totalorder %s42, 1
      %p285 = por %p283, %p284
      %p287 = scmp.ne.s32.totalorder %s270, %s286
      %p288 = scmp.eq.s32.totalorder %s42, 0
      %p289 = por %p287, %p288
      %s290 = ssub.s32 %s44, %s51
      %p291 = scmp.eq.s32.totalorder %s290, 0
      %s293 = sadd.s32 %s292, 1
      %s294 = scalar_select %p291, %s292, %s293
      %p297 = pneg %p291
      %p298 = scmp.eq.s32.totalorder %s36, 1
      %p299 = por %p297, %p298
      %p300 = scmp.ne.s32.totalorder %s292, %s295
      %p301 = scmp.eq.s32.totalorder %s36, 0
      %p302 = por %p300, %p301
      %p303 = scmp.ne.s32.totalorder %s292, %s295
      %p304 = scmp.eq.s32.totalorder %s41, 1
      %p305 = por %p303, %p304
      %p306 = scmp.ne.s32.totalorder %s295, %s296
      %p307 = scmp.eq.s32.totalorder %s41, 0
      %p308 = por %p306, %p307
      %p309 = scmp.ne.s32.totalorder %s295, %s296
      %p310 = scmp.eq.s32.totalorder %s42, 1
      %p311 = por %p309, %p310
      %p313 = scmp.ne.s32.totalorder %s296, %s312
      %p314 = scmp.eq.s32.totalorder %s42, 0
      %p315 = por %p313, %p314
      %s316 = ssub.s32 %s44, %s51
      %p317 = scmp.eq.s32.totalorder %s316, 0
      %s319 = sadd.s32 %s318, 1
      %s320 = scalar_select %p317, %s318, %s319
      %p323 = pneg %p317
      %p324 = scmp.eq.s32.totalorder %s36, 1
      %p325 = por %p323, %p324
      %p326 = scmp.ne.s32.totalorder %s318, %s321
      %p327 = scmp.eq.s32.totalorder %s36, 0
      %p328 = por %p326, %p327
      %p329 = scmp.ne.s32.totalorder %s318, %s321
      %p330 = scmp.eq.s32.totalorder %s41, 1
      %p331 = por %p329, %p330
      %p332 = scmp.ne.s32.totalorder %s321, %s322
      %p333 = scmp.eq.s32.totalorder %s41, 0
      %p334 = por %p332, %p333
      %p335 = scmp.ne.s32.totalorder %s321, %s322
      %p336 = scmp.eq.s32.totalorder %s42, 1
      %p337 = por %p335, %p336
      %p339 = scmp.ne.s32.totalorder %s322, %s338
      %p340 = scmp.eq.s32.totalorder %s42, 0
      %p341 = por %p339, %p340
      %s342 = ssub.s32 %s44, %s51
      %p343 = scmp.eq.s32.totalorder %s342, 0
      %s345 = sadd.s32 %s344, 1
      %s346 = scalar_select %p343, %s344, %s345
      %p349 = pneg %p343
      %p350 = scmp.eq.s32.totalorder %s36, 1
      %p351 = por %p349, %p350
      %p352 = scmp.ne.s32.totalorder %s344, %s347
      %p353 = scmp.eq.s32.totalorder %s36, 0
      %p354 = por %p352, %p353
      %p355 = scmp.ne.s32.totalorder %s344, %s347
      %p356 = scmp.eq.s32.totalorder %s41, 1
      %p357 = por %p355, %p356
      %p358 = scmp.ne.s32.totalorder %s347, %s348
      %p359 = scmp.eq.s32.totalorder %s41, 0
      %p360 = por %p358, %p359
      %p361 = scmp.ne.s32.totalorder %s347, %s348
      %p362 = scmp.eq.s32.totalorder %s42, 1
      %p363 = por %p361, %p362
      %p365 = scmp.ne.s32.totalorder %s348, %s364
      %p366 = scmp.eq.s32.totalorder %s42, 0
      %p367 = por %p365, %p366
      %s368 = ssub.s32 %s44, %s51
      %p369 = scmp.eq.s32.totalorder %s368, 0
      %s371 = sadd.s32 %s370, 1
      %s372 = scalar_select %p369, %s370, %s371
      %p375 = pneg %p369
      %p376 = scmp.eq.s32.totalorder %s36, 1
      %p377 = por %p375, %p376
      %p378 = scmp.ne.s32.totalorder %s370, %s373
      %p379 = scmp.eq.s32.totalorder %s36, 0
      %p380 = por %p378, %p379
      %p381 = scmp.ne.s32.totalorder %s370, %s373
      %p382 = scmp.eq.s32.totalorder %s41, 1
      %p383 = por %p381, %p382
      %p384 = scmp.ne.s32.totalorder %s373, %s374
      %p385 = scmp.eq.s32.totalorder %s41, 0
      %p386 = por %p384, %p385
      %p387 = scmp.ne.s32.totalorder %s373, %s374
      %p388 = scmp.eq.s32.totalorder %s42, 1
      %p389 = por %p387, %p388
      %p391 = scmp.ne.s32.totalorder %s374, %s390
      %p392 = scmp.eq.s32.totalorder %s42, 0
      %p393 = por %p391, %p392
      %s394 = ssub.s32 %s44, %s51
      %p395 = scmp.eq.s32.totalorder %s394, 0
      %s397 = sadd.s32 %s396, 1
      %s398 = scalar_select %p395, %s396, %s397
      %p401 = pneg %p395
      %p402 = scmp.eq.s32.totalorder %s36, 1
      %p403 = por %p401, %p402
      %p404 = scmp.ne.s32.totalorder %s396, %s399
      %p405 = scmp.eq.s32.totalorder %s36, 0
      %p406 = por %p404, %p405
      %p407 = scmp.ne.s32.totalorder %s396, %s399
      %p408 = scmp.eq.s32.totalorder %s41, 1
      %p409 = por %p407, %p408
      %p410 = scmp.ne.s32.totalorder %s399, %s400
      %p411 = scmp.eq.s32.totalorder %s41, 0
      %p412 = por %p410, %p411
      %p413 = scmp.ne.s32.totalorder %s399, %s400
      %p414 = scmp.eq.s32.totalorder %s42, 1
      %p415 = por %p413, %p414
      %p417 = scmp.ne.s32.totalorder %s400, %s416
      %p418 = scmp.eq.s32.totalorder %s42, 0
      %p419 = por %p417, %p418
      %s420 = ssub.s32 %s44, %s51
      %p421 = scmp.eq.s32.totalorder %s420, 0
      %s423 = sadd.s32 %s422, 1
      %s424 = scalar_select %p421, %s422, %s423
      %p427 = pneg %p421
      %p428 = scmp.eq.s32.totalorder %s36, 1
      %p429 = por %p427, %p428
      %p430 = scmp.ne.s32.totalorder %s422, %s425
      %p431 = scmp.eq.s32.totalorder %s36, 0
      %p432 = por %p430, %p431
      %p433 = scmp.ne.s32.totalorder %s422, %s425
      %p434 = scmp.eq.s32.totalorder %s41, 1
      %p435 = por %p433, %p434
      %p436 = scmp.ne.s32.totalorder %s425, %s426
      %p437 = scmp.eq.s32.totalorder %s41, 0
      %p438 = por %p436, %p437
      %p439 = scmp.ne.s32.totalorder %s425, %s426
      %p440 = scmp.eq.s32.totalorder %s42, 1
      %p441 = por %p439, %p440
      %p443 = scmp.ne.s32.totalorder %s426, %s442
      %p444 = scmp.eq.s32.totalorder %s42, 0
      %p445 = por %p443, %p444
      %s446 = ssub.s32 %s44, %s51
      %p447 = scmp.eq.s32.totalorder %s446, 0
      %s449 = sadd.s32 %s448, 1
      %s450 = scalar_select %p447, %s448, %s449
      %p453 = pneg %p447
      %p454 = scmp.eq.s32.totalorder %s36, 1
      %p455 = por %p453, %p454
      %p456 = scmp.ne.s32.totalorder %s448, %s451
      %p457 = scmp.eq.s32.totalorder %s36, 0
      %p458 = por %p456, %p457
      %p459 = scmp.ne.s32.totalorder %s448, %s451
      %p460 = scmp.eq.s32.totalorder %s41, 1
      %p461 = por %p459, %p460
      %p462 = scmp.ne.s32.totalorder %s451, %s452
      %p463 = scmp.eq.s32.totalorder %s41, 0
      %p464 = por %p462, %p463
      %p465 = scmp.ne.s32.totalorder %s451, %s452
      %p466 = scmp.eq.s32.totalorder %s42, 1
      %p467 = por %p465, %p466
      %p469 = scmp.ne.s32.totalorder %s452, %s468
      %p470 = scmp.eq.s32.totalorder %s42, 0
      %p471 = por %p469, %p470
      %s472 = ssub.s32 %s44, %s51
      %p473 = scmp.eq.s32.totalorder %s472, 0
      %s475 = sadd.s32 %s474, 1
      %s476 = scalar_select %p473, %s474, %s475
      %p479 = pneg %p473
      %p480 = scmp.eq.s32.totalorder %s36, 1
      %p481 = por %p479, %p480
      %p482 = scmp.ne.s32.totalorder %s474, %s477
      %p483 = scmp.eq.s32.totalorder %s36, 0
      %p484 = por %p482, %p483
      %p485 = scmp.ne.s32.totalorder %s474, %s477
      %p486 = scmp.eq.s32.totalorder %s41, 1
      %p487 = por %p485, %p486
      %p488 = scmp.ne.s32.totalorder %s477, %s478
      %p489 = scmp.eq.s32.totalorder %s41, 0
      %p490 = por %p488, %p489
      %p491 = scmp.ne.s32.totalorder %s477, %s478
      %p492 = scmp.eq.s32.totalorder %s42, 1
      %p493 = por %p491, %p492
      %p495 = scmp.ne.s32.totalorder %s478, %s494
      %p496 = scmp.eq.s32.totalorder %s42, 0
      %p497 = por %p495, %p496
      %s499 = sadd.s32 %s498, 1
      %p502 = scmp.eq.s32.totalorder %s36, 1
      %p503 = scmp.ne.s32.totalorder %s498, %s500
      %p504 = scmp.eq.s32.totalorder %s36, 0
      %p505 = por %p503, %p504
      %p506 = scmp.ne.s32.totalorder %s498, %s500
      %p507 = scmp.eq.s32.totalorder %s41, 1
      %p508 = por %p506, %p507
      %p509 = scmp.ne.s32.totalorder %s500, %s501
      %p510 = scmp.eq.s32.totalorder %s41, 0
      %p511 = por %p509, %p510
      %p512 = scmp.ne.s32.totalorder %s500, %s501
      %p513 = scmp.eq.s32.totalorder %s42, 1
      %p514 = por %p512, %p513
      %p516 = scmp.ne.s32.totalorder %s501, %s515
      %p517 = scmp.eq.s32.totalorder %s42, 0
      %p518 = por %p516, %p517
      %s520 = sadd.s32 %s519, 1
      %p523 = scmp.eq.s32.totalorder %s36, 1
      %p524 = scmp.ne.s32.totalorder %s519, %s521
      %p525 = scmp.eq.s32.totalorder %s36, 0
      %p526 = por %p524, %p525
      %p527 = scmp.ne.s32.totalorder %s519, %s521
      %p528 = scmp.eq.s32.totalorder %s41, 1
      %p529 = por %p527, %p528
      %p530 = scmp.ne.s32.totalorder %s521, %s522
      %p531 = scmp.eq.s32.totalorder %s41, 0
      %p532 = por %p530, %p531
      %p533 = scmp.ne.s32.totalorder %s521, %s522
      %p534 = scmp.eq.s32.totalorder %s42, 1
      %p535 = por %p533, %p534
      %p537 = scmp.ne.s32.totalorder %s522, %s536
      %p538 = scmp.eq.s32.totalorder %s42, 0
      %p539 = por %p537, %p538
      %s540 = ssub.s32 %s43, %s55
      %p541 = scmp.eq.s32.totalorder %s540, 0
      %s543 = sadd.s32 %s542, 1
      %s544 = scalar_select %p541, %s542, %s543
      %p547 = pneg %p541
      %p548 = scmp.eq.s32.totalorder %s36, 1
      %p549 = por %p547, %p548
      %p550 = scmp.ne.s32.totalorder %s542, %s545
      %p551 = scmp.eq.s32.totalorder %s36, 0
      %p552 = por %p550, %p551
      %p553 = scmp.ne.s32.totalorder %s542, %s545
      %p554 = scmp.eq.s32.totalorder %s41, 1
      %p555 = por %p553, %p554
      %p556 = scmp.ne.s32.totalorder %s545, %s546
      %p557 = scmp.eq.s32.totalorder %s41, 0
      %p558 = por %p556, %p557
      %p559 = scmp.ne.s32.totalorder %s545, %s546
      %p560 = scmp.eq.s32.totalorder %s42, 1
      %p561 = por %p559, %p560
      %p563 = scmp.ne.s32.totalorder %s546, %s562
      %p564 = scmp.eq.s32.totalorder %s42, 0
      %p565 = por %p563, %p564
      %p566 = scmp.le.s32.totalorder 1, %s36
      %p567 = scmp.lt.s32.totalorder %s36, 3
      %p568 = pnand %p566, %p567
      %p569 = pneg %p568
      // Predicated region
      $region9: #{tpu_custom_call.1} parent=5 // pred_check
        _
      $region10: #{tpu_custom_call.1} parent=5 // pred_check_branch
        %571 = sbr.rel (%p568) target = $region12
      $region11: #{tpu_custom_call.1} parent=5 // pred_region
        %s572 = ssub.s32 %s36, 1
        // Predicated region
        $region13: #{tpu_custom_call.1} parent=11 // pred_check
          %p573 = pneg %p74
        $region14: #{tpu_custom_call.1} parent=11 // pred_check_branch
          %575 = sbr.rel (%p573) target = $region16
        $region15: #{tpu_custom_call.1} parent=11 // pred_region
          %s577 = ssub.s32 256, 256
          %578 = vsyncadd [#allocation4], %s577
          %s579 = smul.addr %s45, 2
          %s580 = smul.addr %s579, 128
          %s581 = scalar_lea.hbm %s0, %s580
          %s582 = sshll.u32 [#allocation3], 4
          %s583 = int_to_ptr.vmem [resolvable:$true] %s582
          %588 = dma.hbm_to_vmem [thread:$0]  %s581, 256, %s583, [#allocation4], 128, 128, 8
        $region16: #{tpu_custom_call.1} parent=11 // pred_fallthru
          _
        // Predicated region
        $region17: #{tpu_custom_call.1} parent=11 // pred_check
          %p589 = pneg %p511
        $region18: #{tpu_custom_call.1} parent=11 // pred_check_branch
          %591 = sbr.rel (%p589) target = $region20
        $region19: #{tpu_custom_call.1} parent=11 // pred_region
          _
        $region20: #{tpu_custom_call.1} parent=11 // pred_fallthru
          _
        // Predicated region
        $region21: #{tpu_custom_call.1} parent=11 // pred_check
          %p592 = pneg %p532
        $region22: #{tpu_custom_call.1} parent=11 // pred_check_branch
          %594 = sbr.rel (%p592) target = $region24
        $region23: #{tpu_custom_call.1} parent=11 // pred_region
          _
        $region24: #{tpu_custom_call.1} parent=11 // pred_fallthru
          _
      $region12: #{tpu_custom_call.1} parent=5 // pred_fallthru
        _
      %p595 = scmp.lt.s32.totalorder %s36, 2
      // Predicated region
      $region25: #{tpu_custom_call.1} parent=5 // pred_check
        %p596 = pneg %p595
      $region26: #{tpu_custom_call.1} parent=5 // pred_check_branch
        %598 = sbr.rel (%p596) target = $region28
      $region27: #{tpu_custom_call.1} parent=5 // pred_region
        // Predicated region
        $region29: #{tpu_custom_call.1} parent=27 // pred_check
          %p599 = pneg %p94
        $region30: #{tpu_custom_call.1} parent=27 // pred_check_branch
          %601 = sbr.rel (%p599) target = $region32
        $region31: #{tpu_custom_call.1} parent=27 // pred_region
          %p602 = scmp.lt.s32.totalorder %s44, 1
          %s603 = scalar_select %p602, %s44, 1
          %s604 = smul.addr %s603, 4
          %s605 = smul.addr %s604, 8
          %s606 = scalar_lea.vmem %s1, %s605
        $region32: #{tpu_custom_call.1} parent=27 // pred_fallthru
          _
        // Predicated region
        $region33: #{tpu_custom_call.1} parent=27 // pred_check
          %p607 = pneg %p120
        $region34: #{tpu_custom_call.1} parent=27 // pred_check_branch
          %609 = sbr.rel (%p607) target = $region36
        $region35: #{tpu_custom_call.1} parent=27 // pred_region
          %p610 = scmp.lt.s32.totalorder %s44, 1
          %s611 = scalar_select %p610, %s44, 1
          %s612 = scalar_lea.vmem %s2, %s611
        $region36: #{tpu_custom_call.1} parent=27 // pred_fallthru
          _
        // Predicated region
        $region37: #{tpu_custom_call.1} parent=27 // pred_check
          %p613 = pneg %p146
        $region38: #{tpu_custom_call.1} parent=27 // pred_check_branch
          %615 = sbr.rel (%p613) target = $region40
        $region39: #{tpu_custom_call.1} parent=27 // pred_region
          %p616 = scmp.lt.s32.totalorder %s44, 1
          %s617 = scalar_select %p616, %s44, 1
          %s618 = smul.addr %s617, 4
          %s619 = smul.addr %s618, 8
          %s620 = scalar_lea.vmem %s3, %s619
        $region40: #{tpu_custom_call.1} parent=27 // pred_fallthru
          _
        // Predicated region
        $region41: #{tpu_custom_call.1} parent=27 // pred_check
          %p621 = pneg %p172
        $region42: #{tpu_custom_call.1} parent=27 // pred_check_branch
          %623 = sbr.rel (%p621) target = $region44
        $region43: #{tpu_custom_call.1} parent=27 // pred_region
          %s624 = sand.u32 %s36, 1
          %s625 = scalar_lea.sflag [#allocation7], %s624
          %s626 = sand.u32 %s162, 1
          %s627 = scalar_lea.vmem [#allocation6], %s626
          %s629 = ssub.s32 16, 16
          %630 = vsyncadd %s625, %s629
          %s631 = smul.addr %s44, 16
          %s632 = scalar_lea.hbm %s4, %s631
          %s634 = sshll.u32 %s627, 4
          %s635 = int_to_ptr.vmem [resolvable:$true] %s634
          %637 = dma.hbm_to_vmem [thread:$0]  %s632, 16, %s635, %s625
        $region44: #{tpu_custom_call.1} parent=27 // pred_fallthru
          _
        // Predicated region
        $region45: #{tpu_custom_call.1} parent=27 // pred_check
          %p638 = pneg %p198
        $region46: #{tpu_custom_call.1} parent=27 // pred_check_branch
          %640 = sbr.rel (%p638) target = $region48
        $region47: #{tpu_custom_call.1} parent=27 // pred_region
          %p641 = scmp.lt.s32.totalorder %s44, 1
          %s642 = scalar_select %p641, %s44, 1
          %s643 = smul.addr %s642, 4
          %s644 = smul.addr %s643, 8
          %s645 = scalar_lea.vmem %s5, %s644
        $region48: #{tpu_custom_call.1} parent=27 // pred_fallthru
          _
        // Predicated region
        $region49: #{tpu_custom_call.1} parent=27 // pred_check
          %p646 = pneg %p224
        $region50: #{tpu_custom_call.1} parent=27 // pred_check_branch
          %648 = sbr.rel (%p646) target = $region52
        $region51: #{tpu_custom_call.1} parent=27 // pred_region
          %s649 = sand.u32 %s36, 1
          %s650 = scalar_lea.sflag [#allocation7], %s649
          %s651 = sand.u32 %s214, 1
          %s652 = scalar_lea.vmem [#allocation8], %s651
          %s654 = ssub.s32 16, 16
          %655 = vsyncadd %s650, %s654
          %s656 = smul.addr %s44, 16
          %s657 = scalar_lea.hbm %s6, %s656
          %s659 = sshll.u32 %s652, 4
          %s660 = int_to_ptr.vmem [resolvable:$true] %s659
          %662 = dma.hbm_to_vmem [thread:$0]  %s657, 16, %s660, %s650
        $region52: #{tpu_custom_call.1} parent=27 // pred_fallthru
          _
        // Predicated region
        $region53: #{tpu_custom_call.1} parent=27 // pred_check
          %p663 = pneg %p250
        $region54: #{tpu_custom_call.1} parent=27 // pred_check_branch
          %665 = sbr.rel (%p663) target = $region56
        $region55: #{tpu_custom_call.1} parent=27 // pred_region
          %s666 = sand.u32 %s36, 1
          %s667 = scalar_lea.sflag [#allocation10], %s666
          %s668 = sand.u32 %s240, 1
          %s669 = smul.addr %s668, 32
          %s670 = scalar_lea.vmem [#allocation9], %s669
          %s672 = ssub.s32 512, 512
          %673 = vsyncadd %s667, %s672
          %s674 = smul.addr %s44, 4
          %s675 = smul.addr %s674, 128
          %s676 = scalar_lea.hbm %s7, %s675
          %s677 = sshll.u32 %s670, 4
          %s678 = int_to_ptr.vmem [resolvable:$true] %s677
          %683 = dma.hbm_to_vmem [thread:$0]  %s676, 512, %s678, %s667, 128, 128, 8
        $region56: #{tpu_custom_call.1} parent=27 // pred_fallthru
          _
        // Predicated region
        $region57: #{tpu_custom_call.1} parent=27 // pred_check
          %p684 = pneg %p276
        $region58: #{tpu_custom_call.1} parent=27 // pred_check_branch
          %686 = sbr.rel (%p684) target = $region60
        $region59: #{tpu_custom_call.1} parent=27 // pred_region
          %s687 = sand.u32 %s36, 1
          %s688 = scalar_lea.sflag [#allocation10], %s687
          %s689 = sand.u32 %s266, 1
          %s690 = scalar_lea.vmem [#allocation11], %s689
          %s692 = ssub.s32 16, 16
          %693 = vsyncadd %s688, %s692
          %s694 = smul.addr %s44, 16
          %s695 = scalar_lea.hbm %s8, %s694
          %s697 = sshll.u32 %s690, 4
          %s698 = int_to_ptr.vmem [resolvable:$true] %s697
          %700 = dma.hbm_to_vmem [thread:$0]  %s695, 16, %s698, %s688
        $region60: #{tpu_custom_call.1} parent=27 // pred_fallthru
          _
        // Predicated region
        $region61: #{tpu_custom_call.1} parent=27 // pred_check
          %p701 = pneg %p302
        $region62: #{tpu_custom_call.1} parent=27 // pred_check_branch
          %703 = sbr.rel (%p701) target = $region64
        $region63: #{tpu_custom_call.1} parent=27 // pred_region
          %s704 = sand.u32 %s292, 1
          %s705 = scalar_lea.sflag [#allocation13], %s704
          %s706 = sand.u32 %s292, 1
          %s707 = smul.addr %s706, 32
          %s708 = scalar_lea.vmem [#allocation12], %s707
          %s710 = ssub.s32 512, 512
          %711 = vsyncadd %s705, %s710
          %s712 = smul.addr %s44, 4
          %s713 = smul.addr %s712, 128
          %s714 = scalar_lea.hbm %s9, %s713
          %s715 = sshll.u32 %s708, 4
          %s716 = int_to_ptr.vmem [resolvable:$true] %s715
          %721 = dma.hbm_to_vmem [thread:$0]  %s714, 512, %s716, %s705, 128, 128, 8
        $region64: #{tpu_custom_call.1} parent=27 // pred_fallthru
          _
        // Predicated region
        $region65: #{tpu_custom_call.1} parent=27 // pred_check
          %p722 = pneg %p328
        $region66: #{tpu_custom_call.1} parent=27 // pred_check_branch
          %724 = sbr.rel (%p722) target = $region68
        $region67: #{tpu_custom_call.1} parent=27 // pred_region
          %p725 = scmp.lt.s32.totalorder %s44, 1
          %s726 = scalar_select %p725, %s44, 1
          %s727 = scalar_lea.vmem %s10, %s726
        $region68: #{tpu_custom_call.1} parent=27 // pred_fallthru
          _
        // Predicated region
        $region69: #{tpu_custom_call.1} parent=27 // pred_check
          %p728 = pneg %p354
        $region70: #{tpu_custom_call.1} parent=27 // pred_check_branch
          %730 = sbr.rel (%p728) target = $region72
        $region71: #{tpu_custom_call.1} parent=27 // pred_region
          %p731 = scmp.lt.s32.totalorder %s44, 1
          %s732 = scalar_select %p731, %s44, 1
          %s733 = smul.addr %s732, 8
          %s734 = smul.addr %s733, 8
          %s735 = scalar_lea.vmem %s11, %s734
        $region72: #{tpu_custom_call.1} parent=27 // pred_fallthru
          _
        // Predicated region
        $region73: #{tpu_custom_call.1} parent=27 // pred_check
          %p736 = pneg %p380
        $region74: #{tpu_custom_call.1} parent=27 // pred_check_branch
          %738 = sbr.rel (%p736) target = $region76
        $region75: #{tpu_custom_call.1} parent=27 // pred_region
          %p739 = scmp.lt.s32.totalorder %s44, 1
          %s740 = scalar_select %p739, %s44, 1
          %s741 = scalar_lea.vmem %s12, %s740
        $region76: #{tpu_custom_call.1} parent=27 // pred_fallthru
          _
        // Predicated region
        $region77: #{tpu_custom_call.1} parent=27 // pred_check
          %p742 = pneg %p406
        $region78: #{tpu_custom_call.1} parent=27 // pred_check_branch
          %744 = sbr.rel (%p742) target = $region80
        $region79: #{tpu_custom_call.1} parent=27 // pred_region
          %p745 = scmp.lt.s32.totalorder %s44, 1
          %s746 = scalar_select %p745, %s44, 1
          %s747 = scalar_lea.vmem %s13, %s746
        $region80: #{tpu_custom_call.1} parent=27 // pred_fallthru
          _
        // Predicated region
        $region81: #{tpu_custom_call.1} parent=27 // pred_check
          %p748 = pneg %p432
        $region82: #{tpu_custom_call.1} parent=27 // pred_check_branch
          %750 = sbr.rel (%p748) target = $region84
        $region83: #{tpu_custom_call.1} parent=27 // pred_region
          %p751 = scmp.lt.s32.totalorder %s44, 1
          %s752 = scalar_select %p751, %s44, 1
          %s753 = scalar_lea.vmem %s14, %s752
        $region84: #{tpu_custom_call.1} parent=27 // pred_fallthru
          _
        // Predicated region
        $region85: #{tpu_custom_call.1} parent=27 // pred_check
          %p754 = pneg %p458
        $region86: #{tpu_custom_call.1} parent=27 // pred_check_branch
          %756 = sbr.rel (%p754) target = $region88
        $region87: #{tpu_custom_call.1} parent=27 // pred_region
          %p757 = scmp.lt.s32.totalorder %s44, 1
          %s758 = scalar_select %p757, %s44, 1
          %s759 = scalar_lea.vmem %s15, %s758
        $region88: #{tpu_custom_call.1} parent=27 // pred_fallthru
          _
        // Predicated region
        $region89: #{tpu_custom_call.1} parent=27 // pred_check
          %p760 = pneg %p484
        $region90: #{tpu_custom_call.1} parent=27 // pred_check_branch
          %762 = sbr.rel (%p760) target = $region92
        $region91: #{tpu_custom_call.1} parent=27 // pred_region
          %p763 = scmp.lt.s32.totalorder %s44, 1
          %s764 = scalar_select %p763, %s44, 1
          %s765 = scalar_lea.vmem %s16, %s764
        $region92: #{tpu_custom_call.1} parent=27 // pred_fallthru
          _
      $region28: #{tpu_custom_call.1} parent=5 // pred_fallthru
        _
      %p766 = scmp.le.s32.totalorder 1, %s36
      %p767 = scmp.lt.s32.totalorder %s36, 3
      %p768 = pnand %p766, %p767
      %p769 = pneg %p768
      // Predicated region
      $region93: #{tpu_custom_call.1} parent=5 // pred_check
        _
      $region94: #{tpu_custom_call.1} parent=5 // pred_check_branch
        %771 = sbr.rel (%p768) target = $region96
      $region95: #{tpu_custom_call.1} parent=5 // pred_region
        %s772 = ssub.s32 %s36, 1
        // Predicated region
        $region97: #{tpu_custom_call.1} parent=95 // pred_check
          %p773 = pneg %p74
        $region98: #{tpu_custom_call.1} parent=95 // pred_check_branch
          %775 = sbr.rel (%p773) target = $region100
        $region99: #{tpu_custom_call.1} parent=95 // pred_region
          %776 = dma.done [#allocation4], 256
        $region100: #{tpu_custom_call.1} parent=95 // pred_fallthru
          _
        %s777 = sand.u32 %s41, 1
        %s778 = scalar_lea.sflag [#allocation7], %s777
        %s779 = sand.u32 %s165, 1
        %s780 = scalar_lea.vmem [#allocation6], %s779
        // Predicated region
        $region101: #{tpu_custom_call.1} parent=95 // pred_check
          %p781 = pneg %p178
        $region102: #{tpu_custom_call.1} parent=95 // pred_check_branch
          %783 = sbr.rel (%p781) target = $region104
        $region103: #{tpu_custom_call.1} parent=95 // pred_region
          %784 = dma.done %s778, 16
        $region104: #{tpu_custom_call.1} parent=95 // pred_fallthru
          _
        %s785 = sand.u32 %s41, 1
        %s786 = scalar_lea.sflag [#allocation7], %s785
        %s787 = sand.u32 %s217, 1
        %s788 = scalar_lea.vmem [#allocation8], %s787
        // Predicated region
        $region105: #{tpu_custom_call.1} parent=95 // pred_check
          %p789 = pneg %p230
        $region106: #{tpu_custom_call.1} parent=95 // pred_check_branch
          %791 = sbr.rel (%p789) target = $region108
        $region107: #{tpu_custom_call.1} parent=95 // pred_region
          %792 = dma.done %s786, 16
        $region108: #{tpu_custom_call.1} parent=95 // pred_fallthru
          _
        %s793 = sand.u32 %s41, 1
        %s794 = scalar_lea.sflag [#allocation10], %s793
        %s795 = sand.u32 %s243, 1
        %s796 = smul.addr %s795, 32
        %s797 = scalar_lea.vmem [#allocation9], %s796
        // Predicated region
        $region109: #{tpu_custom_call.1} parent=95 // pred_check
          %p798 = pneg %p256
        $region110: #{tpu_custom_call.1} parent=95 // pred_check_branch
          %800 = sbr.rel (%p798) target = $region112
        $region111: #{tpu_custom_call.1} parent=95 // pred_region
          %801 = dma.done %s794, 512
        $region112: #{tpu_custom_call.1} parent=95 // pred_fallthru
          _
        %s802 = sand.u32 %s41, 1
        %s803 = scalar_lea.sflag [#allocation10], %s802
        %s804 = sand.u32 %s269, 1
        %s805 = scalar_lea.vmem [#allocation11], %s804
        // Predicated region
        $region113: #{tpu_custom_call.1} parent=95 // pred_check
          %p806 = pneg %p282
        $region114: #{tpu_custom_call.1} parent=95 // pred_check_branch
          %808 = sbr.rel (%p806) target = $region116
        $region115: #{tpu_custom_call.1} parent=95 // pred_region
          %809 = dma.done %s803, 16
        $region116: #{tpu_custom_call.1} parent=95 // pred_fallthru
          _
        %s810 = sand.u32 %s295, 1
        %s811 = scalar_lea.sflag [#allocation13], %s810
        %s812 = sand.u32 %s295, 1
        %s813 = smul.addr %s812, 32
        %s814 = scalar_lea.vmem [#allocation12], %s813
        // Predicated region
        $region117: #{tpu_custom_call.1} parent=95 // pred_check
          %p815 = pneg %p308
        $region118: #{tpu_custom_call.1} parent=95 // pred_check_branch
          %817 = sbr.rel (%p815) target = $region120
        $region119: #{tpu_custom_call.1} parent=95 // pred_region
          %818 = dma.done %s811, 512
        $region120: #{tpu_custom_call.1} parent=95 // pred_fallthru
          _
        %p819 = pneg %p74
        %p820 = pneg %p71
        %p821 = scmp.lt.s32.totalorder %s46, 1
        %s822 = scalar_select %p821, %s46, 1
        %s823 = smul.addr %s822, 4
        %s824 = smul.addr %s823, 8
        %s825 = scalar_lea.vmem %s1, %s824
        %p826 = pneg %p100
        %p827 = pneg %p97
        %p828 = scmp.lt.s32.totalorder %s46, 1
        %s829 = scalar_select %p828, %s46, 1
        %s830 = scalar_lea.vmem %s2, %s829
        %p831 = pneg %p126
        %p832 = pneg %p123
        %p833 = scmp.lt.s32.totalorder %s46, 1
        %s834 = scalar_select %p833, %s46, 1
        %s835 = smul.addr %s834, 4
        %s836 = smul.addr %s835, 8
        %s837 = scalar_lea.vmem %s3, %s836
        %p838 = pneg %p152
        %p839 = pneg %p149
        %s840 = sand.u32 %s41, 1
        %s841 = scalar_lea.sflag [#allocation7], %s840
        %s842 = sand.u32 %s165, 1
        %s843 = scalar_lea.vmem [#allocation6], %s842
        %p844 = pneg %p178
        %p845 = pneg %p175
        %p846 = scmp.lt.s32.totalorder %s46, 1
        %s847 = scalar_select %p846, %s46, 1
        %s848 = smul.addr %s847, 4
        %s849 = smul.addr %s848, 8
        %s850 = scalar_lea.vmem %s5, %s849
        %p851 = pneg %p204
        %p852 = pneg %p201
        %s853 = sand.u32 %s41, 1
        %s854 = scalar_lea.sflag [#allocation7], %s853
        %s855 = sand.u32 %s217, 1
        %s856 = scalar_lea.vmem [#allocation8], %s855
        %p857 = pneg %p230
        %p858 = pneg %p227
        %s859 = sand.u32 %s41, 1
        %s860 = scalar_lea.sflag [#allocation10], %s859
        %s861 = sand.u32 %s243, 1
        %s862 = smul.addr %s861, 32
        %s863 = scalar_lea.vmem [#allocation9], %s862
        %p864 = pneg %p256
        %p865 = pneg %p253
        %s866 = sand.u32 %s41, 1
        %s867 = scalar_lea.sflag [#allocation10], %s866
        %s868 = sand.u32 %s269, 1
        %s869 = scalar_lea.vmem [#allocation11], %s868
        %p870 = pneg %p282
        %p871 = pneg %p279
        %s872 = sand.u32 %s295, 1
        %s873 = scalar_lea.sflag [#allocation13], %s872
        %s874 = sand.u32 %s295, 1
        %s875 = smul.addr %s874, 32
        %s876 = scalar_lea.vmem [#allocation12], %s875
        %p877 = pneg %p308
        %p878 = pneg %p305
        %p879 = scmp.lt.s32.totalorder %s46, 1
        %s880 = scalar_select %p879, %s46, 1
        %s881 = scalar_lea.vmem %s10, %s880
        %p882 = pneg %p334
        %p883 = pneg %p331
        %p884 = scmp.lt.s32.totalorder %s46, 1
        %s885 = scalar_select %p884, %s46, 1
        %s886 = smul.addr %s885, 8
        %s887 = smul.addr %s886, 8
        %s888 = scalar_lea.vmem %s11, %s887
        %p889 = pneg %p360
        %p890 = pneg %p357
        %p891 = scmp.lt.s32.totalorder %s46, 1
        %s892 = scalar_select %p891, %s46, 1
        %s893 = scalar_lea.vmem %s12, %s892
        %p894 = pneg %p386
        %p895 = pneg %p383
        %p896 = scmp.lt.s32.totalorder %s46, 1
        %s897 = scalar_select %p896, %s46, 1
        %s898 = scalar_lea.vmem %s13, %s897
        %p899 = pneg %p412
        %p900 = pneg %p409
        %p901 = scmp.lt.s32.totalorder %s46, 1
        %s902 = scalar_select %p901, %s46, 1
        %s903 = scalar_lea.vmem %s14, %s902
        %p904 = pneg %p438
        %p905 = pneg %p435
        %p906 = scmp.lt.s32.totalorder %s46, 1
        %s907 = scalar_select %p906, %s46, 1
        %s908 = scalar_lea.vmem %s15, %s907
        %p909 = pneg %p464
        %p910 = pneg %p461
        %p911 = scmp.lt.s32.totalorder %s46, 1
        %s912 = scalar_select %p911, %s46, 1
        %s913 = scalar_lea.vmem %s16, %s912
        %p914 = pneg %p490
        %p915 = pneg %p487
        %p916 = pneg %p511
        %p917 = pneg %p508
        %p918 = pneg %p532
        %p919 = pneg %p529
        %p920 = pneg %p558
        %p921 = pneg %p555
        %p922 = scmp.lt.s32.totalorder %s46, 1
        %s923 = scalar_select %p922, %s46, 1
        %s924 = smul.addr %s923, 4
        %s925 = smul.addr %s924, 8
        %s926 = scalar_lea.vmem %s1, %s925
        %p927 = scmp.lt.s32.totalorder %s46, 1
        %s928 = scalar_select %p927, %s46, 1
        %s929 = scalar_lea.vmem %s2, %s928
        %p930 = scmp.lt.s32.totalorder %s46, 1
        %s931 = scalar_select %p930, %s46, 1
        %s932 = smul.addr %s931, 4
        %s933 = smul.addr %s932, 8
        %s934 = scalar_lea.vmem %s3, %s933
        %p935 = scmp.lt.s32.totalorder %s46, 1
        %s936 = scalar_select %p935, %s46, 1
        %s937 = smul.addr %s936, 4
        %s938 = smul.addr %s937, 8
        %s939 = scalar_lea.vmem %s5, %s938
        %p940 = scmp.lt.s32.totalorder %s46, 1
        %s941 = scalar_select %p940, %s46, 1
        %s942 = scalar_lea.vmem %s10, %s941
        %p943 = scmp.lt.s32.totalorder %s46, 1
        %s944 = scalar_select %p943, %s46, 1
        %s945 = smul.addr %s944, 8
        %s946 = smul.addr %s945, 8
        %s947 = scalar_lea.vmem %s11, %s946
        %p948 = scmp.lt.s32.totalorder %s46, 1
        %s949 = scalar_select %p948, %s46, 1
        %s950 = scalar_lea.vmem %s12, %s949
        %p951 = scmp.lt.s32.totalorder %s46, 1
        %s952 = scalar_select %p951, %s46, 1
        %s953 = scalar_lea.vmem %s13, %s952
        %p954 = scmp.lt.s32.totalorder %s46, 1
        %s955 = scalar_select %p954, %s46, 1
        %s956 = scalar_lea.vmem %s14, %s955
        %p957 = scmp.lt.s32.totalorder %s46, 1
        %s958 = scalar_select %p957, %s46, 1
        %s959 = scalar_lea.vmem %s15, %s958
        %p960 = scmp.lt.s32.totalorder %s46, 1
        %s961 = scalar_select %p960, %s46, 1
        %s962 = scalar_lea.vmem %s16, %s961
        %p963 = scmp.eq.s32.totalorder %s46, 0
        // Predicated region
        $region121: #{tpu_custom_call.1} parent=95 // pred_check
          %p964 = pneg %p963
        $region122: #{tpu_custom_call.1} parent=95 // pred_check_branch
          %966 = sbr.rel (%p964) target = $region124
        $region123: #{tpu_custom_call.1} parent=95 // pred_region
          %v967 = vld [vmem:[#allocation3] sm:$0xff]
          %v968 = vld [vmem:[#allocation3 + $0x8] sm:$0xff]
          %vm969 = vcmask 261120
          %970 = vst.msk [vmem:[#allocation2] sm:$0xff] %vm969, %v967
          %971 = vst.msk [vmem:[#allocation2 + $0x8] sm:$0xff] %vm969, %v968
        $region124: #{tpu_custom_call.1} parent=95 // pred_fallthru
          _
        %v972 = vld [vmem:[#allocation2] sm:$0xff]
        %v973 = vld [vmem:[#allocation2 + $0x8] sm:$0xff]
        %v974 = vld [vmem:[%s926] sm:$0xff]
        %v975 = vld [vmem:[%s926 + $0x8] sm:$0xff]
        %v976 = vld [vmem:[%s926 + $0x10] sm:$0xff]
        %v977 = vld [vmem:[%s926 + $0x18] sm:$0xff]
        %v978 = vld [vmem:[%s929] sm:$0x1]
        %v980 = vlaneseq
        %v981 = vshrl.u32 %v980, 7
        %v982 = vsub.s32 0, %v981
        %v983 = vrot.slane %v978, %v982
        %vm985 = vcmask 261120
        %v987 = vsel %vm985, %v972, 0
        %v990 = vsel %vm985, %v973, 0
        %992 = vmatprep.subr.mxu0 0.0
        %993 = vmatpush1.msra.mxu0 %v974
        %994 = vmatprep.subr.mxu0 0.0
        %995 = vmatpush1.msra.mxu0 %v975
        %996 = vmatprep.subr.mxu0 0.0
        %997 = vmatpush1.msra.mxu0 %v976
        %998 = vmatprep.subr.mxu0 0.0
        %999 = vmatpush1.msra.mxu0 %v977
        %1000 = vmatprep.subr.mxu0 0.0
        %1001 = vmatpush1.msra.mxu0 0.0
        %1002 = vmatprep.subr.mxu0 0.0
        %1003 = vmatpush1.msra.mxu0 0.0
        %1004 = vmatprep.subr.mxu0 0.0
        %1005 = vmatpush1.msra.mxu0 0.0
        %1006 = vmatprep.subr.mxu0 0.0
        %1007 = vmatpush1.msra.mxu0 0.0
        %1008 = vmatprep.subr.mxu0 0.0
        %1009 = vmatpush1.msra.mxu0 0.0
        %1010 = vmatprep.subr.mxu0 0.0
        %1011 = vmatpush1.msra.mxu0 0.0
        %1012 = vmatprep.subr.mxu0 0.0
        %1013 = vmatpush1.msra.mxu0 0.0
        %1014 = vmatprep.subr.mxu0 0.0
        %1015 = vmatpush1.msra.mxu0 0.0
        %1016 = vmatprep.subr.mxu0 0.0
        %1017 = vmatpush1.msra.mxu0 0.0
        %1018 = vmatprep.subr.mxu0 0.0
        %1019 = vmatpush1.msra.mxu0 0.0
        %1020 = vmatprep.subr.mxu0 0.0
        %1021 = vmatpush1.msra.mxu0 0.0
        %1022 = vmatprep.subr.mxu0 0.0
        %1023 = vmatpush1.msra.mxu0 0.0
        %1024 = vmatprep.subr.mxu0 0.0
        %1025 = vmatpush1.msra.mxu0 0.0
        %1026 = vmatprep.subr.mxu0 0.0
        %1027 = vmatpush1.msra.mxu0 0.0
        %1028 = vmatprep.subr.mxu0 0.0
        %1029 = vmatpush1.msra.mxu0 0.0
        %1030 = vmatprep.subr.mxu0 0.0
        %1031 = vmatpush1.msra.mxu0 0.0
        %1032 = vmatprep.subr.mxu0 0.0
        %1033 = vmatpush1.msra.mxu0 0.0
        %1034 = vmatprep.subr.mxu0 0.0
        %1035 = vmatpush1.msra.mxu0 0.0
        %1036 = vmatprep.subr.mxu0 0.0
        %1037 = vmatpush1.msra.mxu0 0.0
        %1038 = vmatprep.subr.mxu0 0.0
        %1039 = vmatpush1.msra.mxu0 0.0
        %1040 = vmatprep.subr.mxu0 0.0
        %1041 = vmatpush1.msra.mxu0 0.0
        %1042 = vmatprep.subr.mxu0 0.0
        %1043 = vmatpush1.msra.mxu0 0.0
        %1044 = vmatprep.subr.mxu0 0.0
        %1045 = vmatpush1.msra.mxu0 0.0
        %1046 = vmatprep.subr.mxu0 0.0
        %1047 = vmatpush1.msra.mxu0 0.0
        %1048 = vmatprep.subr.mxu0 0.0
        %1049 = vmatpush1.msra.mxu0 0.0
        %1050 = vmatprep.subr.mxu0 0.0
        %1051 = vmatpush1.msra.mxu0 0.0
        %1052 = vmatprep.subr.mxu0 0.0
        %1053 = vmatpush1.msra.mxu0 0.0
        %1054 = vmatprep.subr.mxu0 0.0
        %1055 = vmatpush1.msra.mxu0 0.0
        %1056 = vmatprep.mubr.f32.mxu0 0.0
        %1057 = vmatmul.mubr.f32.gmra.mrb[0].mxu0 %v987
        %v1058 = vpop.f32.mrb[0].mxu0
        %v1059 = vadd.f32 %v983, %v1058
        %v1060 = vpop.f32.mrb[0].mxu0
        %1061 = vmatprep.mubr.f32.mxu0 0.0
        %1062 = vmatmul.mubr.f32.gmra.mrb[0].mxu0 %v990
        %v1063 = vpop.f32.mrb[0].mxu0
        %v1064 = vadd.f32 %v983, %v1063
        %v1065 = vpop.f32.mrb[0].mxu0
        %1066 = vdwg.mxu0
        %v1067 = vld [vmem:[%s934] sm:$0xff]
        %v1068 = vld [vmem:[%s934 + $0x8] sm:$0xff]
        %v1069 = vld [vmem:[%s934 + $0x10] sm:$0xff]
        %v1070 = vld [vmem:[%s934 + $0x18] sm:$0xff]
        %v1071 = vld [vmem:[%s780] sm:$0x1]
        %v1073 = vlaneseq
        %v1074 = vshrl.u32 %v1073, 7
        %v1075 = vsub.s32 0, %v1074
        %v1076 = vrot.slane %v1071, %v1075
        %1078 = vmatprep.subr.mxu0 0.0
        %1079 = vmatpush1.msra.mxu0 %v1067
        %1080 = vmatprep.subr.mxu0 0.0
        %1081 = vmatpush1.msra.mxu0 %v1068
        %1082 = vmatprep.subr.mxu0 0.0
        %1083 = vmatpush1.msra.mxu0 %v1069
        %1084 = vmatprep.subr.mxu0 0.0
        %1085 = vmatpush1.msra.mxu0 %v1070
        %1086 = vmatprep.subr.mxu0 0.0
        %1087 = vmatpush1.msra.mxu0 0.0
        %1088 = vmatprep.subr.mxu0 0.0
        %1089 = vmatpush1.msra.mxu0 0.0
        %1090 = vmatprep.subr.mxu0 0.0
        %1091 = vmatpush1.msra.mxu0 0.0
        %1092 = vmatprep.subr.mxu0 0.0
        %1093 = vmatpush1.msra.mxu0 0.0
        %1094 = vmatprep.subr.mxu0 0.0
        %1095 = vmatpush1.msra.mxu0 0.0
        %1096 = vmatprep.subr.mxu0 0.0
        %1097 = vmatpush1.msra.mxu0 0.0
        %1098 = vmatprep.subr.mxu0 0.0
        %1099 = vmatpush1.msra.mxu0 0.0
        %1100 = vmatprep.subr.mxu0 0.0
        %1101 = vmatpush1.msra.mxu0 0.0
        %1102 = vmatprep.subr.mxu0 0.0
        %1103 = vmatpush1.msra.mxu0 0.0
        %1104 = vmatprep.subr.mxu0 0.0
        %1105 = vmatpush1.msra.mxu0 0.0
        %1106 = vmatprep.subr.mxu0 0.0
        %1107 = vmatpush1.msra.mxu0 0.0
        %1108 = vmatprep.subr.mxu0 0.0
        %1109 = vmatpush1.msra.mxu0 0.0
        %1110 = vmatprep.subr.mxu0 0.0
        %1111 = vmatpush1.msra.mxu0 0.0
        %1112 = vmatprep.subr.mxu0 0.0
        %1113 = vmatpush1.msra.mxu0 0.0
        %1114 = vmatprep.subr.mxu0 0.0
        %1115 = vmatpush1.msra.mxu0 0.0
        %1116 = vmatprep.subr.mxu0 0.0
        %1117 = vmatpush1.msra.mxu0 0.0
        %1118 = vmatprep.subr.mxu0 0.0
        %1119 = vmatpush1.msra.mxu0 0.0
        %1120 = vmatprep.subr.mxu0 0.0
        %1121 = vmatpush1.msra.mxu0 0.0
        %1122 = vmatprep.subr.mxu0 0.0
        %1123 = vmatpush1.msra.mxu0 0.0
        %1124 = vmatprep.subr.mxu0 0.0
        %1125 = vmatpush1.msra.mxu0 0.0
        %1126 = vmatprep.subr.mxu0 0.0
        %1127 = vmatpush1.msra.mxu0 0.0
        %1128 = vmatprep.subr.mxu0 0.0
        %1129 = vmatpush1.msra.mxu0 0.0
        %1130 = vmatprep.subr.mxu0 0.0
        %1131 = vmatpush1.msra.mxu0 0.0
        %1132 = vmatprep.subr.mxu0 0.0
        %1133 = vmatpush1.msra.mxu0 0.0
        %1134 = vmatprep.subr.mxu0 0.0
        %1135 = vmatpush1.msra.mxu0 0.0
        %1136 = vmatprep.subr.mxu0 0.0
        %1137 = vmatpush1.msra.mxu0 0.0
        %1138 = vmatprep.subr.mxu0 0.0
        %1139 = vmatpush1.msra.mxu0 0.0
        %1140 = vmatprep.subr.mxu0 0.0
        %1141 = vmatpush1.msra.mxu0 0.0
        %1142 = vmatprep.mubr.f32.mxu0 0.0
        %1143 = vmatmul.mubr.f32.gmra.mrb[0].mxu0 %v987
        %v1144 = vpop.f32.mrb[0].mxu0
        %v1145 = vadd.f32 %v1076, %v1144
        %v1146 = vpop.f32.mrb[0].mxu0
        %1147 = vmatprep.mubr.f32.mxu0 0.0
        %1148 = vmatmul.mubr.f32.gmra.mrb[0].mxu0 %v990
        %v1149 = vpop.f32.mrb[0].mxu0
        %v1150 = vadd.f32 %v1076, %v1149
        %v1151 = vpop.f32.mrb[0].mxu0
        %1152 = vdwg.mxu0
        %v1153 = vld [vmem:[%s939] sm:$0xff]
        %v1154 = vld [vmem:[%s939 + $0x8] sm:$0xff]
        %v1155 = vld [vmem:[%s939 + $0x10] sm:$0xff]
        %v1156 = vld [vmem:[%s939 + $0x18] sm:$0xff]
        %v1157 = vld [vmem:[%s788] sm:$0x1]
        %v1159 = vlaneseq
        %v1160 = vshrl.u32 %v1159, 7
        %v1161 = vsub.s32 0, %v1160
        %v1162 = vrot.slane %v1157, %v1161
        %1164 = vmatprep.subr.mxu0 0.0
        %1165 = vmatpush1.msra.mxu0 %v1153
        %1166 = vmatprep.subr.mxu0 0.0
        %1167 = vmatpush1.msra.mxu0 %v1154
        %1168 = vmatprep.subr.mxu0 0.0
        %1169 = vmatpush1.msra.mxu0 %v1155
        %1170 = vmatprep.subr.mxu0 0.0
        %1171 = vmatpush1.msra.mxu0 %v1156
        %1172 = vmatprep.subr.mxu0 0.0
        %1173 = vmatpush1.msra.mxu0 0.0
        %1174 = vmatprep.subr.mxu0 0.0
        %1175 = vmatpush1.msra.mxu0 0.0
        %1176 = vmatprep.subr.mxu0 0.0
        %1177 = vmatpush1.msra.mxu0 0.0
        %1178 = vmatprep.subr.mxu0 0.0
        %1179 = vmatpush1.msra.mxu0 0.0
        %1180 = vmatprep.subr.mxu0 0.0
        %1181 = vmatpush1.msra.mxu0 0.0
        %1182 = vmatprep.subr.mxu0 0.0
        %1183 = vmatpush1.msra.mxu0 0.0
        %1184 = vmatprep.subr.mxu0 0.0
        %1185 = vmatpush1.msra.mxu0 0.0
        %1186 = vmatprep.subr.mxu0 0.0
        %1187 = vmatpush1.msra.mxu0 0.0
        %1188 = vmatprep.subr.mxu0 0.0
        %1189 = vmatpush1.msra.mxu0 0.0
        %1190 = vmatprep.subr.mxu0 0.0
        %1191 = vmatpush1.msra.mxu0 0.0
        %1192 = vmatprep.subr.mxu0 0.0
        %1193 = vmatpush1.msra.mxu0 0.0
        %1194 = vmatprep.subr.mxu0 0.0
        %1195 = vmatpush1.msra.mxu0 0.0
        %1196 = vmatprep.subr.mxu0 0.0
        %1197 = vmatpush1.msra.mxu0 0.0
        %1198 = vmatprep.subr.mxu0 0.0
        %1199 = vmatpush1.msra.mxu0 0.0
        %1200 = vmatprep.subr.mxu0 0.0
        %1201 = vmatpush1.msra.mxu0 0.0
        %1202 = vmatprep.subr.mxu0 0.0
        %1203 = vmatpush1.msra.mxu0 0.0
        %1204 = vmatprep.subr.mxu0 0.0
        %1205 = vmatpush1.msra.mxu0 0.0
        %1206 = vmatprep.subr.mxu0 0.0
        %1207 = vmatpush1.msra.mxu0 0.0
        %1208 = vmatprep.subr.mxu0 0.0
        %1209 = vmatpush1.msra.mxu0 0.0
        %1210 = vmatprep.subr.mxu0 0.0
        %1211 = vmatpush1.msra.mxu0 0.0
        %1212 = vmatprep.subr.mxu0 0.0
        %1213 = vmatpush1.msra.mxu0 0.0
        %1214 = vmatprep.subr.mxu0 0.0
        %1215 = vmatpush1.msra.mxu0 0.0
        %1216 = vmatprep.subr.mxu0 0.0
        %1217 = vmatpush1.msra.mxu0 0.0
        %1218 = vmatprep.subr.mxu0 0.0
        %1219 = vmatpush1.msra.mxu0 0.0
        %1220 = vmatprep.subr.mxu0 0.0
        %1221 = vmatpush1.msra.mxu0 0.0
        %1222 = vmatprep.subr.mxu0 0.0
        %1223 = vmatpush1.msra.mxu0 0.0
        %1224 = vmatprep.subr.mxu0 0.0
        %1225 = vmatpush1.msra.mxu0 0.0
        %1226 = vmatprep.subr.mxu0 0.0
        %1227 = vmatpush1.msra.mxu0 0.0
        %1228 = vmatprep.mubr.f32.mxu0 0.0
        %1229 = vmatmul.mubr.f32.gmra.mrb[0].mxu0 %v987
        %v1230 = vpop.f32.mrb[0].mxu0
        %v1231 = vadd.f32 %v1162, %v1230
        %v1232 = vpop.f32.mrb[0].mxu0
        %1233 = vmatprep.mubr.f32.mxu0 0.0
        %1234 = vmatmul.mubr.f32.gmra.mrb[0].mxu0 %v990
        %v1235 = vpop.f32.mrb[0].mxu0
        %v1236 = vadd.f32 %v1162, %v1235
        %v1237 = vpop.f32.mrb[0].mxu0
        %1238 = vdwg.mxu0
        %v1239 = vld [vmem:[%s797] sm:$0xff]
        %v1240 = vld [vmem:[%s797 + $0x8] sm:$0xff]
        %v1241 = vld [vmem:[%s797 + $0x10] sm:$0xff]
        %v1242 = vld [vmem:[%s797 + $0x18] sm:$0xff]
        %vm1243 = vcmask 64512
        %v1245 = vsel %vm1243, %v1059, 0
        %v1248 = vsel %vm1243, %v1145, 0
        %1250 = vmatprep.subr.mxu0 0.0
        %1251 = vmatpush1.xpose.msra.mxu0 %v1248
        %1252 = vmatprep.subr.mxu0 0.0
        %1253 = vmatpush1.xpose.msra.mxu0 0.0
        %1254 = vmatprep.subr.mxu0 0.0
        %1255 = vmatpush1.xpose.msra.mxu0 0.0
        %1256 = vmatprep.subr.mxu0 0.0
        %1257 = vmatpush1.xpose.msra.mxu0 0.0
        %1258 = vmatprep.subr.mxu0 0.0
        %1259 = vmatpush1.xpose.msra.mxu0 0.0
        %1260 = vmatprep.subr.mxu0 0.0
        %1261 = vmatpush1.xpose.msra.mxu0 0.0
        %1262 = vmatprep.subr.mxu0 0.0
        %1263 = vmatpush1.xpose.msra.mxu0 0.0
        %1264 = vmatprep.subr.mxu0 0.0
        %1265 = vmatpush1.xpose.msra.mxu0 0.0
        %1266 = vmatprep.subr.mxu0 0.0
        %1267 = vmatpush1.xpose.msra.mxu0 0.0
        %1268 = vmatprep.subr.mxu0 0.0
        %1269 = vmatpush1.xpose.msra.mxu0 0.0
        %1270 = vmatprep.subr.mxu0 0.0
        %1271 = vmatpush1.xpose.msra.mxu0 0.0
        %1272 = vmatprep.subr.mxu0 0.0
        %1273 = vmatpush1.xpose.msra.mxu0 0.0
        %1274 = vmatprep.subr.mxu0 0.0
        %1275 = vmatpush1.xpose.msra.mxu0 0.0
        %1276 = vmatprep.subr.mxu0 0.0
        %1277 = vmatpush1.xpose.msra.mxu0 0.0
        %1278 = vmatprep.subr.mxu0 0.0
        %1279 = vmatpush1.xpose.msra.mxu0 0.0
        %1280 = vmatprep.subr.mxu0 0.0
        %1281 = vmatpush1.xpose.msra.mxu0 0.0
        %1282 = vmatprep.subr.mxu0 0.0
        %1283 = vmatpush1.xpose.msra.mxu0 0.0
        %1284 = vmatprep.subr.mxu0 0.0
        %1285 = vmatpush1.xpose.msra.mxu0 0.0
        %1286 = vmatprep.subr.mxu0 0.0
        %1287 = vmatpush1.xpose.msra.mxu0 0.0
        %1288 = vmatprep.subr.mxu0 0.0
        %1289 = vmatpush1.xpose.msra.mxu0 0.0
        %1290 = vmatprep.subr.mxu0 0.0
        %1291 = vmatpush1.xpose.msra.mxu0 0.0
        %1292 = vmatprep.subr.mxu0 0.0
        %1293 = vmatpush1.xpose.msra.mxu0 0.0
        %1294 = vmatprep.subr.mxu0 0.0
        %1295 = vmatpush1.xpose.msra.mxu0 0.0
        %1296 = vmatprep.subr.mxu0 0.0
        %1297 = vmatpush1.xpose.msra.mxu0 0.0
        %1298 = vmatprep.subr.mxu0 0.0
        %1299 = vmatpush1.xpose.msra.mxu0 0.0
        %1300 = vmatprep.subr.mxu0 0.0
        %1301 = vmatpush1.xpose.msra.mxu0 0.0
        %1302 = vmatprep.subr.mxu0 0.0
        %1303 = vmatpush1.xpose.msra.mxu0 0.0
        %1304 = vmatprep.subr.mxu0 0.0
        %1305 = vmatpush1.xpose.msra.mxu0 0.0
        %1306 = vmatprep.subr.mxu0 0.0
        %1307 = vmatpush1.xpose.msra.mxu0 0.0
        %1308 = vmatprep.subr.mxu0 0.0
        %1309 = vmatpush1.xpose.msra.mxu0 0.0
        %1310 = vmatprep.subr.mxu0 0.0
        %1311 = vmatpush1.xpose.msra.mxu0 0.0
        %1312 = vmatprep.subr.mxu0 0.0
        %1313 = vmatpush1.xpose.msra.mxu0 0.0
        %1314 = vmatprep.mubr.f32.mxu0 0.0
        %1315 = vmatmul.mubr.f32.gmra.mrb[0].mxu0 %v1245
        %v1316 = vpop.f32.mrb[0].mxu0
        %v1317 = vadd.f32 0.0, %v1316
        %v1318 = vpop.f32.mrb[0].mxu0
        %1319 = vdwg.mxu0
        %v1321 = vsel %vm1243, %v1064, 0
        %v1324 = vsel %vm1243, %v1150, 0
        %1326 = vmatprep.subr.mxu0 0.0
        %1327 = vmatpush1.xpose.msra.mxu0 %v1324
        %1328 = vmatprep.subr.mxu0 0.0
        %1329 = vmatpush1.xpose.msra.mxu0 0.0
        %1330 = vmatprep.subr.mxu0 0.0
        %1331 = vmatpush1.xpose.msra.mxu0 0.0
        %1332 = vmatprep.subr.mxu0 0.0
        %1333 = vmatpush1.xpose.msra.mxu0 0.0
        %1334 = vmatprep.subr.mxu0 0.0
        %1335 = vmatpush1.xpose.msra.mxu0 0.0
        %1336 = vmatprep.subr.mxu0 0.0
        %1337 = vmatpush1.xpose.msra.mxu0 0.0
        %1338 = vmatprep.subr.mxu0 0.0
        %1339 = vmatpush1.xpose.msra.mxu0 0.0
        %1340 = vmatprep.subr.mxu0 0.0
        %1341 = vmatpush1.xpose.msra.mxu0 0.0
        %1342 = vmatprep.subr.mxu0 0.0
        %1343 = vmatpush1.xpose.msra.mxu0 0.0
        %1344 = vmatprep.subr.mxu0 0.0
        %1345 = vmatpush1.xpose.msra.mxu0 0.0
        %1346 = vmatprep.subr.mxu0 0.0
        %1347 = vmatpush1.xpose.msra.mxu0 0.0
        %1348 = vmatprep.subr.mxu0 0.0
        %1349 = vmatpush1.xpose.msra.mxu0 0.0
        %1350 = vmatprep.subr.mxu0 0.0
        %1351 = vmatpush1.xpose.msra.mxu0 0.0
        %1352 = vmatprep.subr.mxu0 0.0
        %1353 = vmatpush1.xpose.msra.mxu0 0.0
        %1354 = vmatprep.subr.mxu0 0.0
        %1355 = vmatpush1.xpose.msra.mxu0 0.0
        %1356 = vmatprep.subr.mxu0 0.0
        %1357 = vmatpush1.xpose.msra.mxu0 0.0
        %1358 = vmatprep.subr.mxu0 0.0
        %1359 = vmatpush1.xpose.msra.mxu0 0.0
        %1360 = vmatprep.subr.mxu0 0.0
        %1361 = vmatpush1.xpose.msra.mxu0 0.0
        %1362 = vmatprep.subr.mxu0 0.0
        %1363 = vmatpush1.xpose.msra.mxu0 0.0
        %1364 = vmatprep.subr.mxu0 0.0
        %1365 = vmatpush1.xpose.msra.mxu0 0.0
        %1366 = vmatprep.subr.mxu0 0.0
        %1367 = vmatpush1.xpose.msra.mxu0 0.0
        %1368 = vmatprep.subr.mxu0 0.0
        %1369 = vmatpush1.xpose.msra.mxu0 0.0
        %1370 = vmatprep.subr.mxu0 0.0
        %1371 = vmatpush1.xpose.msra.mxu0 0.0
        %1372 = vmatprep.subr.mxu0 0.0
        %1373 = vmatpush1.xpose.msra.mxu0 0.0
        %1374 = vmatprep.subr.mxu0 0.0
        %1375 = vmatpush1.xpose.msra.mxu0 0.0
        %1376 = vmatprep.subr.mxu0 0.0
        %1377 = vmatpush1.xpose.msra.mxu0 0.0
        %1378 = vmatprep.subr.mxu0 0.0
        %1379 = vmatpush1.xpose.msra.mxu0 0.0
        %1380 = vmatprep.subr.mxu0 0.0
        %1381 = vmatpush1.xpose.msra.mxu0 0.0
        %1382 = vmatprep.subr.mxu0 0.0
        %1383 = vmatpush1.xpose.msra.mxu0 0.0
        %1384 = vmatprep.subr.mxu0 0.0
        %1385 = vmatpush1.xpose.msra.mxu0 0.0
        %1386 = vmatprep.subr.mxu0 0.0
        %1387 = vmatpush1.xpose.msra.mxu0 0.0
        %1388 = vmatprep.subr.mxu0 0.0
        %1389 = vmatpush1.xpose.msra.mxu0 0.0
        %1390 = vmatprep.mubr.f32.mxu0 0.0
        %1391 = vmatmul.mubr.f32.gmra.mrb[0].mxu0 %v1321
        %v1392 = vpop.f32.mrb[0].mxu0
        %v1393 = vadd.f32 0.0, %v1392
        %v1394 = vpop.f32.mrb[0].mxu0
        %1395 = vdwg.mxu0
        %v1396 = vsel %vm1243, %v1317, -inf
        %1397 = vmax.xlane.f32.xlu0 %v1396
        %v1398 = vpop.xlane.xlu0 %1397
        %v1399 = vsel %vm1243, %v1393, -inf
        %1400 = vmax.xlane.f32.xlu0 %v1399
        %v1401 = vpop.xlane.xlu0 %1400
        %v1402 = vsub.f32 %v1317, %v1398
        %v1403 = vsub.f32 %v1393, %v1401
        %v1404 = vmul.f32 %v1402, 1.442695
        %v1405 = vpow.pop %v1404
        %v1406 = vmul.f32 %v1403, 1.442695
        %v1407 = vpow.pop %v1406
        %v1408 = vsel %vm1243, %v1405, 0.0
        %1409 = vadd.xlane.f32.xlu0 %v1408
        %v1410 = vpop.xlane.xlu0 %1409
        %v1411 = vsel %vm1243, %v1407, 0.0
        %1412 = vadd.xlane.f32.xlu0 %v1411
        %v1413 = vpop.xlane.xlu0 %1412
        %v1414 = vrcp.pop %v1410
        %v1415 = vmul.f32 %v1405, %v1414
        %v1416 = vrcp.pop %v1413
        %v1417 = vmul.f32 %v1407, %v1416
        %v1419 = vsel %vm1243, %v1415, 0
        %1421 = vmatprep.subr.mxu0 0.0
        %1422 = vmatpush1.msra.mxu0 %v1231
        %1423 = vmatprep.subr.mxu0 0.0
        %1424 = vmatpush1.msra.mxu0 0.0
        %1425 = vmatprep.subr.mxu0 0.0
        %1426 = vmatpush1.msra.mxu0 0.0
        %1427 = vmatprep.subr.mxu0 0.0
        %1428 = vmatpush1.msra.mxu0 0.0
        %1429 = vmatprep.subr.mxu0 0.0
        %1430 = vmatpush1.msra.mxu0 0.0
        %1431 = vmatprep.subr.mxu0 0.0
        %1432 = vmatpush1.msra.mxu0 0.0
        %1433 = vmatprep.subr.mxu0 0.0
        %1434 = vmatpush1.msra.mxu0 0.0
        %1435 = vmatprep.subr.mxu0 0.0
        %1436 = vmatpush1.msra.mxu0 0.0
        %1437 = vmatprep.subr.mxu0 0.0
        %1438 = vmatpush1.msra.mxu0 0.0
        %1439 = vmatprep.subr.mxu0 0.0
        %1440 = vmatpush1.msra.mxu0 0.0
        %1441 = vmatprep.subr.mxu0 0.0
        %1442 = vmatpush1.msra.mxu0 0.0
        %1443 = vmatprep.subr.mxu0 0.0
        %1444 = vmatpush1.msra.mxu0 0.0
        %1445 = vmatprep.subr.mxu0 0.0
        %1446 = vmatpush1.msra.mxu0 0.0
        %1447 = vmatprep.subr.mxu0 0.0
        %1448 = vmatpush1.msra.mxu0 0.0
        %1449 = vmatprep.subr.mxu0 0.0
        %1450 = vmatpush1.msra.mxu0 0.0
        %1451 = vmatprep.subr.mxu0 0.0
        %1452 = vmatpush1.msra.mxu0 0.0
        %1453 = vmatprep.subr.mxu0 0.0
        %1454 = vmatpush1.msra.mxu0 0.0
        %1455 = vmatprep.subr.mxu0 0.0
        %1456 = vmatpush1.msra.mxu0 0.0
        %1457 = vmatprep.subr.mxu0 0.0
        %1458 = vmatpush1.msra.mxu0 0.0
        %1459 = vmatprep.subr.mxu0 0.0
        %1460 = vmatpush1.msra.mxu0 0.0
        %1461 = vmatprep.subr.mxu0 0.0
        %1462 = vmatpush1.msra.mxu0 0.0
        %1463 = vmatprep.subr.mxu0 0.0
        %1464 = vmatpush1.msra.mxu0 0.0
        %1465 = vmatprep.subr.mxu0 0.0
        %1466 = vmatpush1.msra.mxu0 0.0
        %1467 = vmatprep.subr.mxu0 0.0
        %1468 = vmatpush1.msra.mxu0 0.0
        %1469 = vmatprep.subr.mxu0 0.0
        %1470 = vmatpush1.msra.mxu0 0.0
        %1471 = vmatprep.subr.mxu0 0.0
        %1472 = vmatpush1.msra.mxu0 0.0
        %1473 = vmatprep.subr.mxu0 0.0
        %1474 = vmatpush1.msra.mxu0 0.0
        %1475 = vmatprep.subr.mxu0 0.0
        %1476 = vmatpush1.msra.mxu0 0.0
        %1477 = vmatprep.subr.mxu0 0.0
        %1478 = vmatpush1.msra.mxu0 0.0
        %1479 = vmatprep.subr.mxu0 0.0
        %1480 = vmatpush1.msra.mxu0 0.0
        %1481 = vmatprep.subr.mxu0 0.0
        %1482 = vmatpush1.msra.mxu0 0.0
        %1483 = vmatprep.subr.mxu0 0.0
        %1484 = vmatpush1.msra.mxu0 0.0
        %1485 = vmatprep.mubr.f32.mxu0 0.0
        %1486 = vmatmul.mubr.f32.gmra.mrb[0].mxu0 %v1419
        %v1487 = vpop.f32.mrb[0].mxu0
        %v1488 = vadd.f32 0.0, %v1487
        %v1489 = vpop.f32.mrb[0].mxu0
        %1490 = vdwg.mxu0
        %v1492 = vsel %vm1243, %v1417, 0
        %1494 = vmatprep.subr.mxu0 0.0
        %1495 = vmatpush1.msra.mxu0 %v1236
        %1496 = vmatprep.subr.mxu0 0.0
        %1497 = vmatpush1.msra.mxu0 0.0
        %1498 = vmatprep.subr.mxu0 0.0
        %1499 = vmatpush1.msra.mxu0 0.0
        %1500 = vmatprep.subr.mxu0 0.0
        %1501 = vmatpush1.msra.mxu0 0.0
        %1502 = vmatprep.subr.mxu0 0.0
        %1503 = vmatpush1.msra.mxu0 0.0
        %1504 = vmatprep.subr.mxu0 0.0
        %1505 = vmatpush1.msra.mxu0 0.0
        %1506 = vmatprep.subr.mxu0 0.0
        %1507 = vmatpush1.msra.mxu0 0.0
        %1508 = vmatprep.subr.mxu0 0.0
        %1509 = vmatpush1.msra.mxu0 0.0
        %1510 = vmatprep.subr.mxu0 0.0
        %1511 = vmatpush1.msra.mxu0 0.0
        %1512 = vmatprep.subr.mxu0 0.0
        %1513 = vmatpush1.msra.mxu0 0.0
        %1514 = vmatprep.subr.mxu0 0.0
        %1515 = vmatpush1.msra.mxu0 0.0
        %1516 = vmatprep.subr.mxu0 0.0
        %1517 = vmatpush1.msra.mxu0 0.0
        %1518 = vmatprep.subr.mxu0 0.0
        %1519 = vmatpush1.msra.mxu0 0.0
        %1520 = vmatprep.subr.mxu0 0.0
        %1521 = vmatpush1.msra.mxu0 0.0
        %1522 = vmatprep.subr.mxu0 0.0
        %1523 = vmatpush1.msra.mxu0 0.0
        %1524 = vmatprep.subr.mxu0 0.0
        %1525 = vmatpush1.msra.mxu0 0.0
        %1526 = vmatprep.subr.mxu0 0.0
        %1527 = vmatpush1.msra.mxu0 0.0
        %1528 = vmatprep.subr.mxu0 0.0
        %1529 = vmatpush1.msra.mxu0 0.0
        %1530 = vmatprep.subr.mxu0 0.0
        %1531 = vmatpush1.msra.mxu0 0.0
        %1532 = vmatprep.subr.mxu0 0.0
        %1533 = vmatpush1.msra.mxu0 0.0
        %1534 = vmatprep.subr.mxu0 0.0
        %1535 = vmatpush1.msra.mxu0 0.0
        %1536 = vmatprep.subr.mxu0 0.0
        %1537 = vmatpush1.msra.mxu0 0.0
        %1538 = vmatprep.subr.mxu0 0.0
        %1539 = vmatpush1.msra.mxu0 0.0
        %1540 = vmatprep.subr.mxu0 0.0
        %1541 = vmatpush1.msra.mxu0 0.0
        %1542 = vmatprep.subr.mxu0 0.0
        %1543 = vmatpush1.msra.mxu0 0.0
        %1544 = vmatprep.subr.mxu0 0.0
        %1545 = vmatpush1.msra.mxu0 0.0
        %1546 = vmatprep.subr.mxu0 0.0
        %1547 = vmatpush1.msra.mxu0 0.0
        %1548 = vmatprep.subr.mxu0 0.0
        %1549 = vmatpush1.msra.mxu0 0.0
        %1550 = vmatprep.subr.mxu0 0.0
        %1551 = vmatpush1.msra.mxu0 0.0
        %1552 = vmatprep.subr.mxu0 0.0
        %1553 = vmatpush1.msra.mxu0 0.0
        %1554 = vmatprep.subr.mxu0 0.0
        %1555 = vmatpush1.msra.mxu0 0.0
        %1556 = vmatprep.subr.mxu0 0.0
        %1557 = vmatpush1.msra.mxu0 0.0
        %1558 = vmatprep.mubr.f32.mxu0 0.0
        %1559 = vmatmul.mubr.f32.gmra.mrb[0].mxu0 %v1492
        %v1560 = vpop.f32.mrb[0].mxu0
        %v1561 = vadd.f32 0.0, %v1560
        %v1562 = vpop.f32.mrb[0].mxu0
        %1563 = vdwg.mxu0
        %1564 = vrot.lane.b32.xlu0 %v1059, 120
        %v1565 = vpop.permute.xlu0 %1564
        %1566 = vrot.lane.b32.xlu0 %v1145, 120
        %v1567 = vpop.permute.xlu0 %1566
        %v1568 = vsel %vm1243, %v1565, 0
        %v1570 = vsel %vm1243, %v1567, 0
        %1572 = vmatprep.subr.mxu0 0.0
        %1573 = vmatpush1.xpose.msra.mxu0 %v1570
        %1574 = vmatprep.subr.mxu0 0.0
        %1575 = vmatpush1.xpose.msra.mxu0 0.0
        %1576 = vmatprep.subr.mxu0 0.0
        %1577 = vmatpush1.xpose.msra.mxu0 0.0
        %1578 = vmatprep.subr.mxu0 0.0
        %1579 = vmatpush1.xpose.msra.mxu0 0.0
        %1580 = vmatprep.subr.mxu0 0.0
        %1581 = vmatpush1.xpose.msra.mxu0 0.0
        %1582 = vmatprep.subr.mxu0 0.0
        %1583 = vmatpush1.xpose.msra.mxu0 0.0
        %1584 = vmatprep.subr.mxu0 0.0
        %1585 = vmatpush1.xpose.msra.mxu0 0.0
        %1586 = vmatprep.subr.mxu0 0.0
        %1587 = vmatpush1.xpose.msra.mxu0 0.0
        %1588 = vmatprep.subr.mxu0 0.0
        %1589 = vmatpush1.xpose.msra.mxu0 0.0
        %1590 = vmatprep.subr.mxu0 0.0
        %1591 = vmatpush1.xpose.msra.mxu0 0.0
        %1592 = vmatprep.subr.mxu0 0.0
        %1593 = vmatpush1.xpose.msra.mxu0 0.0
        %1594 = vmatprep.subr.mxu0 0.0
        %1595 = vmatpush1.xpose.msra.mxu0 0.0
        %1596 = vmatprep.subr.mxu0 0.0
        %1597 = vmatpush1.xpose.msra.mxu0 0.0
        %1598 = vmatprep.subr.mxu0 0.0
        %1599 = vmatpush1.xpose.msra.mxu0 0.0
        %1600 = vmatprep.subr.mxu0 0.0
        %1601 = vmatpush1.xpose.msra.mxu0 0.0
        %1602 = vmatprep.subr.mxu0 0.0
        %1603 = vmatpush1.xpose.msra.mxu0 0.0
        %1604 = vmatprep.subr.mxu0 0.0
        %1605 = vmatpush1.xpose.msra.mxu0 0.0
        %1606 = vmatprep.subr.mxu0 0.0
        %1607 = vmatpush1.xpose.msra.mxu0 0.0
        %1608 = vmatprep.subr.mxu0 0.0
        %1609 = vmatpush1.xpose.msra.mxu0 0.0
        %1610 = vmatprep.subr.mxu0 0.0
        %1611 = vmatpush1.xpose.msra.mxu0 0.0
        %1612 = vmatprep.subr.mxu0 0.0
        %1613 = vmatpush1.xpose.msra.mxu0 0.0
        %1614 = vmatprep.subr.mxu0 0.0
        %1615 = vmatpush1.xpose.msra.mxu0 0.0
        %1616 = vmatprep.subr.mxu0 0.0
        %1617 = vmatpush1.xpose.msra.mxu0 0.0
        %1618 = vmatprep.subr.mxu0 0.0
        %1619 = vmatpush1.xpose.msra.mxu0 0.0
        %1620 = vmatprep.subr.mxu0 0.0
        %1621 = vmatpush1.xpose.msra.mxu0 0.0
        %1622 = vmatprep.subr.mxu0 0.0
        %1623 = vmatpush1.xpose.msra.mxu0 0.0
        %1624 = vmatprep.subr.mxu0 0.0
        %1625 = vmatpush1.xpose.msra.mxu0 0.0
        %1626 = vmatprep.subr.mxu0 0.0
        %1627 = vmatpush1.xpose.msra.mxu0 0.0
        %1628 = vmatprep.subr.mxu0 0.0
        %1629 = vmatpush1.xpose.msra.mxu0 0.0
        %1630 = vmatprep.subr.mxu0 0.0
        %1631 = vmatpush1.xpose.msra.mxu0 0.0
        %1632 = vmatprep.subr.mxu0 0.0
        %1633 = vmatpush1.xpose.msra.mxu0 0.0
        %1634 = vmatprep.subr.mxu0 0.0
        %1635 = vmatpush1.xpose.msra.mxu0 0.0
        %1636 = vmatprep.mubr.f32.mxu0 0.0
        %1637 = vmatmul.mubr.f32.gmra.mrb[0].mxu0 %v1568
        %v1638 = vpop.f32.mrb[0].mxu0
        %v1639 = vadd.f32 0.0, %v1638
        %v1640 = vpop.f32.mrb[0].mxu0
        %1641 = vdwg.mxu0
        %1642 = vrot.lane.b32.xlu0 %v1064, 120
        %v1643 = vpop.permute.xlu0 %1642
        %1644 = vrot.lane.b32.xlu0 %v1150, 120
        %v1645 = vpop.permute.xlu0 %1644
        %v1646 = vsel %vm1243, %v1643, 0
        %v1648 = vsel %vm1243, %v1645, 0
        %1650 = vmatprep.subr.mxu0 0.0
        %1651 = vmatpush1.xpose.msra.mxu0 %v1648
        %1652 = vmatprep.subr.mxu0 0.0
        %1653 = vmatpush1.xpose.msra.mxu0 0.0
        %1654 = vmatprep.subr.mxu0 0.0
        %1655 = vmatpush1.xpose.msra.mxu0 0.0
        %1656 = vmatprep.subr.mxu0 0.0
        %1657 = vmatpush1.xpose.msra.mxu0 0.0
        %1658 = vmatprep.subr.mxu0 0.0
        %1659 = vmatpush1.xpose.msra.mxu0 0.0
        %1660 = vmatprep.subr.mxu0 0.0
        %1661 = vmatpush1.xpose.msra.mxu0 0.0
        %1662 = vmatprep.subr.mxu0 0.0
        %1663 = vmatpush1.xpose.msra.mxu0 0.0
        %1664 = vmatprep.subr.mxu0 0.0
        %1665 = vmatpush1.xpose.msra.mxu0 0.0
        %1666 = vmatprep.subr.mxu0 0.0
        %1667 = vmatpush1.xpose.msra.mxu0 0.0
        %1668 = vmatprep.subr.mxu0 0.0
        %1669 = vmatpush1.xpose.msra.mxu0 0.0
        %1670 = vmatprep.subr.mxu0 0.0
        %1671 = vmatpush1.xpose.msra.mxu0 0.0
        %1672 = vmatprep.subr.mxu0 0.0
        %1673 = vmatpush1.xpose.msra.mxu0 0.0
        %1674 = vmatprep.subr.mxu0 0.0
        %1675 = vmatpush1.xpose.msra.mxu0 0.0
        %1676 = vmatprep.subr.mxu0 0.0
        %1677 = vmatpush1.xpose.msra.mxu0 0.0
        %1678 = vmatprep.subr.mxu0 0.0
        %1679 = vmatpush1.xpose.msra.mxu0 0.0
        %1680 = vmatprep.subr.mxu0 0.0
        %1681 = vmatpush1.xpose.msra.mxu0 0.0
        %1682 = vmatprep.subr.mxu0 0.0
        %1683 = vmatpush1.xpose.msra.mxu0 0.0
        %1684 = vmatprep.subr.mxu0 0.0
        %1685 = vmatpush1.xpose.msra.mxu0 0.0
        %1686 = vmatprep.subr.mxu0 0.0
        %1687 = vmatpush1.xpose.msra.mxu0 0.0
        %1688 = vmatprep.subr.mxu0 0.0
        %1689 = vmatpush1.xpose.msra.mxu0 0.0
        %1690 = vmatprep.subr.mxu0 0.0
        %1691 = vmatpush1.xpose.msra.mxu0 0.0
        %1692 = vmatprep.subr.mxu0 0.0
        %1693 = vmatpush1.xpose.msra.mxu0 0.0
        %1694 = vmatprep.subr.mxu0 0.0
        %1695 = vmatpush1.xpose.msra.mxu0 0.0
        %1696 = vmatprep.subr.mxu0 0.0
        %1697 = vmatpush1.xpose.msra.mxu0 0.0
        %1698 = vmatprep.subr.mxu0 0.0
        %1699 = vmatpush1.xpose.msra.mxu0 0.0
        %1700 = vmatprep.subr.mxu0 0.0
        %1701 = vmatpush1.xpose.msra.mxu0 0.0
        %1702 = vmatprep.subr.mxu0 0.0
        %1703 = vmatpush1.xpose.msra.mxu0 0.0
        %1704 = vmatprep.subr.mxu0 0.0
        %1705 = vmatpush1.xpose.msra.mxu0 0.0
        %1706 = vmatprep.subr.mxu0 0.0
        %1707 = vmatpush1.xpose.msra.mxu0 0.0
        %1708 = vmatprep.subr.mxu0 0.0
        %1709 = vmatpush1.xpose.msra.mxu0 0.0
        %1710 = vmatprep.subr.mxu0 0.0
        %1711 = vmatpush1.xpose.msra.mxu0 0.0
        %1712 = vmatprep.subr.mxu0 0.0
        %1713 = vmatpush1.xpose.msra.mxu0 0.0
        %1714 = vmatprep.mubr.f32.mxu0 0.0
        %1715 = vmatmul.mubr.f32.gmra.mrb[0].mxu0 %v1646
        %v1716 = vpop.f32.mrb[0].mxu0
        %v1717 = vadd.f32 0.0, %v1716
        %v1718 = vpop.f32.mrb[0].mxu0
        %1719 = vdwg.mxu0
        %v1720 = vsel %vm1243, %v1639, -inf
        %1721 = vmax.xlane.f32.xlu0 %v1720
        %v1722 = vpop.xlane.xlu0 %1721
        %v1723 = vsel %vm1243, %v1717, -inf
        %1724 = vmax.xlane.f32.xlu0 %v1723
        %v1725 = vpop.xlane.xlu0 %1724
        %v1726 = vsub.f32 %v1639, %v1722
        %v1727 = vsub.f32 %v1717, %v1725
        %v1728 = vmul.f32 %v1726, 1.442695
        %v1729 = vpow.pop %v1728
        %v1730 = vmul.f32 %v1727, 1.442695
        %v1731 = vpow.pop %v1730
        %v1732 = vsel %vm1243, %v1729, 0.0
        %1733 = vadd.xlane.f32.xlu0 %v1732
        %v1734 = vpop.xlane.xlu0 %1733
        %v1735 = vsel %vm1243, %v1731, 0.0
        %1736 = vadd.xlane.f32.xlu0 %v1735
        %v1737 = vpop.xlane.xlu0 %1736
        %v1738 = vrcp.pop %v1734
        %v1739 = vmul.f32 %v1729, %v1738
        %v1740 = vrcp.pop %v1737
        %v1741 = vmul.f32 %v1731, %v1740
        %1743 = vrot.lane.b32.xlu0 %v1231, 120
        %v1744 = vpop.permute.xlu0 %1743
        %v1747 = vsel %vm1243, %v1739, 0
        %1749 = vmatprep.subr.mxu0 0.0
        %1750 = vmatpush1.msra.mxu0 %v1744
        %1751 = vmatprep.subr.mxu0 0.0
        %1752 = vmatpush1.msra.mxu0 0.0
        %1753 = vmatprep.subr.mxu0 0.0
        %1754 = vmatpush1.msra.mxu0 0.0
        %1755 = vmatprep.subr.mxu0 0.0
        %1756 = vmatpush1.msra.mxu0 0.0
        %1757 = vmatprep.subr.mxu0 0.0
        %1758 = vmatpush1.msra.mxu0 0.0
        %1759 = vmatprep.subr.mxu0 0.0
        %1760 = vmatpush1.msra.mxu0 0.0
        %1761 = vmatprep.subr.mxu0 0.0
        %1762 = vmatpush1.msra.mxu0 0.0
        %1763 = vmatprep.subr.mxu0 0.0
        %1764 = vmatpush1.msra.mxu0 0.0
        %1765 = vmatprep.subr.mxu0 0.0
        %1766 = vmatpush1.msra.mxu0 0.0
        %1767 = vmatprep.subr.mxu0 0.0
        %1768 = vmatpush1.msra.mxu0 0.0
        %1769 = vmatprep.subr.mxu0 0.0
        %1770 = vmatpush1.msra.mxu0 0.0
        %1771 = vmatprep.subr.mxu0 0.0
        %1772 = vmatpush1.msra.mxu0 0.0
        %1773 = vmatprep.subr.mxu0 0.0
        %1774 = vmatpush1.msra.mxu0 0.0
        %1775 = vmatprep.subr.mxu0 0.0
        %1776 = vmatpush1.msra.mxu0 0.0
        %1777 = vmatprep.subr.mxu0 0.0
        %1778 = vmatpush1.msra.mxu0 0.0
        %1779 = vmatprep.subr.mxu0 0.0
        %1780 = vmatpush1.msra.mxu0 0.0
        %1781 = vmatprep.subr.mxu0 0.0
        %1782 = vmatpush1.msra.mxu0 0.0
        %1783 = vmatprep.subr.mxu0 0.0
        %1784 = vmatpush1.msra.mxu0 0.0
        %1785 = vmatprep.subr.mxu0 0.0
        %1786 = vmatpush1.msra.mxu0 0.0
        %1787 = vmatprep.subr.mxu0 0.0
        %1788 = vmatpush1.msra.mxu0 0.0
        %1789 = vmatprep.subr.mxu0 0.0
        %1790 = vmatpush1.msra.mxu0 0.0
        %1791 = vmatprep.subr.mxu0 0.0
        %1792 = vmatpush1.msra.mxu0 0.0
        %1793 = vmatprep.subr.mxu0 0.0
        %1794 = vmatpush1.msra.mxu0 0.0
        %1795 = vmatprep.subr.mxu0 0.0
        %1796 = vmatpush1.msra.mxu0 0.0
        %1797 = vmatprep.subr.mxu0 0.0
        %1798 = vmatpush1.msra.mxu0 0.0
        %1799 = vmatprep.subr.mxu0 0.0
        %1800 = vmatpush1.msra.mxu0 0.0
        %1801 = vmatprep.subr.mxu0 0.0
        %1802 = vmatpush1.msra.mxu0 0.0
        %1803 = vmatprep.subr.mxu0 0.0
        %1804 = vmatpush1.msra.mxu0 0.0
        %1805 = vmatprep.subr.mxu0 0.0
        %1806 = vmatpush1.msra.mxu0 0.0
        %1807 = vmatprep.subr.mxu0 0.0
        %1808 = vmatpush1.msra.mxu0 0.0
        %1809 = vmatprep.subr.mxu0 0.0
        %1810 = vmatpush1.msra.mxu0 0.0
        %1811 = vmatprep.subr.mxu0 0.0
        %1812 = vmatpush1.msra.mxu0 0.0
        %1813 = vmatprep.mubr.f32.mxu0 0.0
        %1814 = vmatmul.mubr.f32.gmra.mrb[0].mxu0 %v1747
        %v1815 = vpop.f32.mrb[0].mxu0
        %v1816 = vadd.f32 0.0, %v1815
        %v1817 = vpop.f32.mrb[0].mxu0
        %1818 = vdwg.mxu0
        %1820 = vrot.lane.b32.xlu0 %v1236, 120
        %v1821 = vpop.permute.xlu0 %1820
        %v1824 = vsel %vm1243, %v1741, 0
        %1826 = vmatprep.subr.mxu0 0.0
        %1827 = vmatpush1.msra.mxu0 %v1821
        %1828 = vmatprep.subr.mxu0 0.0
        %1829 = vmatpush1.msra.mxu0 0.0
        %1830 = vmatprep.subr.mxu0 0.0
        %1831 = vmatpush1.msra.mxu0 0.0
        %1832 = vmatprep.subr.mxu0 0.0
        %1833 = vmatpush1.msra.mxu0 0.0
        %1834 = vmatprep.subr.mxu0 0.0
        %1835 = vmatpush1.msra.mxu0 0.0
        %1836 = vmatprep.subr.mxu0 0.0
        %1837 = vmatpush1.msra.mxu0 0.0
        %1838 = vmatprep.subr.mxu0 0.0
        %1839 = vmatpush1.msra.mxu0 0.0
        %1840 = vmatprep.subr.mxu0 0.0
        %1841 = vmatpush1.msra.mxu0 0.0
        %1842 = vmatprep.subr.mxu0 0.0
        %1843 = vmatpush1.msra.mxu0 0.0
        %1844 = vmatprep.subr.mxu0 0.0
        %1845 = vmatpush1.msra.mxu0 0.0
        %1846 = vmatprep.subr.mxu0 0.0
        %1847 = vmatpush1.msra.mxu0 0.0
        %1848 = vmatprep.subr.mxu0 0.0
        %1849 = vmatpush1.msra.mxu0 0.0
        %1850 = vmatprep.subr.mxu0 0.0
        %1851 = vmatpush1.msra.mxu0 0.0
        %1852 = vmatprep.subr.mxu0 0.0
        %1853 = vmatpush1.msra.mxu0 0.0
        %1854 = vmatprep.subr.mxu0 0.0
        %1855 = vmatpush1.msra.mxu0 0.0
        %1856 = vmatprep.subr.mxu0 0.0
        %1857 = vmatpush1.msra.mxu0 0.0
        %1858 = vmatprep.subr.mxu0 0.0
        %1859 = vmatpush1.msra.mxu0 0.0
        %1860 = vmatprep.subr.mxu0 0.0
        %1861 = vmatpush1.msra.mxu0 0.0
        %1862 = vmatprep.subr.mxu0 0.0
        %1863 = vmatpush1.msra.mxu0 0.0
        %1864 = vmatprep.subr.mxu0 0.0
        %1865 = vmatpush1.msra.mxu0 0.0
        %1866 = vmatprep.subr.mxu0 0.0
        %1867 = vmatpush1.msra.mxu0 0.0
        %1868 = vmatprep.subr.mxu0 0.0
        %1869 = vmatpush1.msra.mxu0 0.0
        %1870 = vmatprep.subr.mxu0 0.0
        %1871 = vmatpush1.msra.mxu0 0.0
        %1872 = vmatprep.subr.mxu0 0.0
        %1873 = vmatpush1.msra.mxu0 0.0
        %1874 = vmatprep.subr.mxu0 0.0
        %1875 = vmatpush1.msra.mxu0 0.0
        %1876 = vmatprep.subr.mxu0 0.0
        %1877 = vmatpush1.msra.mxu0 0.0
        %1878 = vmatprep.subr.mxu0 0.0
        %1879 = vmatpush1.msra.mxu0 0.0
        %1880 = vmatprep.subr.mxu0 0.0
        %1881 = vmatpush1.msra.mxu0 0.0
        %1882 = vmatprep.subr.mxu0 0.0
        %1883 = vmatpush1.msra.mxu0 0.0
        %1884 = vmatprep.subr.mxu0 0.0
        %1885 = vmatpush1.msra.mxu0 0.0
        %1886 = vmatprep.subr.mxu0 0.0
        %1887 = vmatpush1.msra.mxu0 0.0
        %1888 = vmatprep.subr.mxu0 0.0
        %1889 = vmatpush1.msra.mxu0 0.0
        %1890 = vmatprep.mubr.f32.mxu0 0.0
        %1891 = vmatmul.mubr.f32.gmra.mrb[0].mxu0 %v1824
        %v1892 = vpop.f32.mrb[0].mxu0
        %v1893 = vadd.f32 0.0, %v1892
        %v1894 = vpop.f32.mrb[0].mxu0
        %1895 = vdwg.mxu0
        %v1897 = vsel %vm1243, %v1816, 0
        %v1900 = vsel %vm1243, %v1893, 0
        %1902 = vmatprep.subr.mxu0 0.0
        %1903 = vmatpush1.msra.mxu0 %v1240
        %1904 = vmatprep.subr.mxu0 0.0
        %1905 = vmatpush1.msra.mxu0 0.0
        %1906 = vmatprep.subr.mxu0 0.0
        %1907 = vmatpush1.msra.mxu0 0.0
        %1908 = vmatprep.subr.mxu0 0.0
        %1909 = vmatpush1.msra.mxu0 0.0
        %1910 = vmatprep.subr.mxu0 0.0
        %1911 = vmatpush1.msra.mxu0 0.0
        %1912 = vmatprep.subr.mxu0 0.0
        %1913 = vmatpush1.msra.mxu0 0.0
        %1914 = vmatprep.subr.mxu0 0.0
        %1915 = vmatpush1.msra.mxu0 0.0
        %1916 = vmatprep.subr.mxu0 0.0
        %1917 = vmatpush1.msra.mxu0 0.0
        %1918 = vmatprep.subr.mxu0 0.0
        %1919 = vmatpush1.msra.mxu0 0.0
        %1920 = vmatprep.subr.mxu0 0.0
        %1921 = vmatpush1.msra.mxu0 0.0
        %1922 = vmatprep.subr.mxu0 0.0
        %1923 = vmatpush1.msra.mxu0 0.0
        %1924 = vmatprep.subr.mxu0 0.0
        %1925 = vmatpush1.msra.mxu0 0.0
        %1926 = vmatprep.subr.mxu0 0.0
        %1927 = vmatpush1.msra.mxu0 0.0
        %1928 = vmatprep.subr.mxu0 0.0
        %1929 = vmatpush1.msra.mxu0 0.0
        %1930 = vmatprep.subr.mxu0 0.0
        %1931 = vmatpush1.msra.mxu0 0.0
        %1932 = vmatprep.subr.mxu0 0.0
        %1933 = vmatpush1.msra.mxu0 0.0
        %1934 = vmatprep.subr.mxu0 0.0
        %1935 = vmatpush1.msra.mxu0 0.0
        %1936 = vmatprep.subr.mxu0 0.0
        %1937 = vmatpush1.msra.mxu0 0.0
        %1938 = vmatprep.subr.mxu0 0.0
        %1939 = vmatpush1.msra.mxu0 0.0
        %1940 = vmatprep.subr.mxu0 0.0
        %1941 = vmatpush1.msra.mxu0 0.0
        %1942 = vmatprep.subr.mxu0 0.0
        %1943 = vmatpush1.msra.mxu0 0.0
        %1944 = vmatprep.subr.mxu0 0.0
        %1945 = vmatpush1.msra.mxu0 0.0
        %1946 = vmatprep.subr.mxu0 0.0
        %1947 = vmatpush1.msra.mxu0 0.0
        %1948 = vmatprep.subr.mxu0 0.0
        %1949 = vmatpush1.msra.mxu0 0.0
        %1950 = vmatprep.subr.mxu0 0.0
        %1951 = vmatpush1.msra.mxu0 0.0
        %1952 = vmatprep.subr.mxu0 0.0
        %1953 = vmatpush1.msra.mxu0 0.0
        %1954 = vmatprep.subr.mxu0 0.0
        %1955 = vmatpush1.msra.mxu0 0.0
        %1956 = vmatprep.subr.mxu0 0.0
        %1957 = vmatpush1.msra.mxu0 0.0
        %1958 = vmatprep.subr.mxu0 0.0
        %1959 = vmatpush1.msra.mxu0 0.0
        %1960 = vmatprep.subr.mxu0 0.0
        %1961 = vmatpush1.msra.mxu0 0.0
        %1962 = vmatprep.subr.mxu0 0.0
        %1963 = vmatpush1.msra.mxu0 0.0
        %1964 = vmatprep.subr.mxu0 0.0
        %1965 = vmatpush1.msra.mxu0 0.0
        %1966 = vmatprep.mubr.f32.mxu0 0.0
        %1967 = vmatmul.mubr.f32.gmra.mrb[0].mxu0 %v1897
        %v1968 = vpop.f32.mrb[0].mxu0
        %v1969 = vadd.f32 0.0, %v1968
        %v1970 = vpop.f32.mrb[0].mxu0
        %1971 = vmatprep.mubr.f32.mxu0 0.0
        %1972 = vmatmul.mubr.f32.gmra.mrb[0].mxu0 %v1900
        %v1973 = vpop.f32.mrb[0].mxu0
        %v1974 = vadd.f32 0.0, %v1973
        %v1975 = vpop.f32.mrb[0].mxu0
        %1976 = vdwg.mxu0
        %v1978 = vsel %vm1243, %v1488, 0
        %v1981 = vsel %vm1243, %v1561, 0
        %1983 = vmatprep.subr.mxu0 0.0
        %1984 = vmatpush1.msra.mxu0 %v1239
        %1985 = vmatprep.subr.mxu0 0.0
        %1986 = vmatpush1.msra.mxu0 0.0
        %1987 = vmatprep.subr.mxu0 0.0
        %1988 = vmatpush1.msra.mxu0 0.0
        %1989 = vmatprep.subr.mxu0 0.0
        %1990 = vmatpush1.msra.mxu0 0.0
        %1991 = vmatprep.subr.mxu0 0.0
        %1992 = vmatpush1.msra.mxu0 0.0
        %1993 = vmatprep.subr.mxu0 0.0
        %1994 = vmatpush1.msra.mxu0 0.0
        %1995 = vmatprep.subr.mxu0 0.0
        %1996 = vmatpush1.msra.mxu0 0.0
        %1997 = vmatprep.subr.mxu0 0.0
        %1998 = vmatpush1.msra.mxu0 0.0
        %1999 = vmatprep.subr.mxu0 0.0
        %2000 = vmatpush1.msra.mxu0 0.0
        %2001 = vmatprep.subr.mxu0 0.0
        %2002 = vmatpush1.msra.mxu0 0.0
        %2003 = vmatprep.subr.mxu0 0.0
        %2004 = vmatpush1.msra.mxu0 0.0
        %2005 = vmatprep.subr.mxu0 0.0
        %2006 = vmatpush1.msra.mxu0 0.0
        %2007 = vmatprep.subr.mxu0 0.0
        %2008 = vmatpush1.msra.mxu0 0.0
        %2009 = vmatprep.subr.mxu0 0.0
        %2010 = vmatpush1.msra.mxu0 0.0
        %2011 = vmatprep.subr.mxu0 0.0
        %2012 = vmatpush1.msra.mxu0 0.0
        %2013 = vmatprep.subr.mxu0 0.0
        %2014 = vmatpush1.msra.mxu0 0.0
        %2015 = vmatprep.subr.mxu0 0.0
        %2016 = vmatpush1.msra.mxu0 0.0
        %2017 = vmatprep.subr.mxu0 0.0
        %2018 = vmatpush1.msra.mxu0 0.0
        %2019 = vmatprep.subr.mxu0 0.0
        %2020 = vmatpush1.msra.mxu0 0.0
        %2021 = vmatprep.subr.mxu0 0.0
        %2022 = vmatpush1.msra.mxu0 0.0
        %2023 = vmatprep.subr.mxu0 0.0
        %2024 = vmatpush1.msra.mxu0 0.0
        %2025 = vmatprep.subr.mxu0 0.0
        %2026 = vmatpush1.msra.mxu0 0.0
        %2027 = vmatprep.subr.mxu0 0.0
        %2028 = vmatpush1.msra.mxu0 0.0
        %2029 = vmatprep.subr.mxu0 0.0
        %2030 = vmatpush1.msra.mxu0 0.0
        %2031 = vmatprep.subr.mxu0 0.0
        %2032 = vmatpush1.msra.mxu0 0.0
        %2033 = vmatprep.subr.mxu0 0.0
        %2034 = vmatpush1.msra.mxu0 0.0
        %2035 = vmatprep.subr.mxu0 0.0
        %2036 = vmatpush1.msra.mxu0 0.0
        %2037 = vmatprep.subr.mxu0 0.0
        %2038 = vmatpush1.msra.mxu0 0.0
        %2039 = vmatprep.subr.mxu0 0.0
        %2040 = vmatpush1.msra.mxu0 0.0
        %2041 = vmatprep.subr.mxu0 0.0
        %2042 = vmatpush1.msra.mxu0 0.0
        %2043 = vmatprep.subr.mxu0 0.0
        %2044 = vmatpush1.msra.mxu0 0.0
        %2045 = vmatprep.subr.mxu0 0.0
        %2046 = vmatpush1.msra.mxu0 0.0
        %2047 = vmatprep.mubr.f32.mxu0 0.0
        %2048 = vmatmul.mubr.f32.gmra.mrb[0].mxu0 %v1978
        %v2049 = vpop.f32.mrb[0].mxu0
        %v2050 = vadd.f32 %v1969, %v2049
        %v2051 = vpop.f32.mrb[0].mxu0
        %2052 = vmatprep.mubr.f32.mxu0 0.0
        %2053 = vmatmul.mubr.f32.gmra.mrb[0].mxu0 %v1981
        %v2054 = vpop.f32.mrb[0].mxu0
        %v2055 = vadd.f32 %v1974, %v2054
        %v2056 = vpop.f32.mrb[0].mxu0
        %2057 = vdwg.mxu0
        %2058 = vrot.lane.b32.xlu0 %v1059, 112
        %v2059 = vpop.permute.xlu0 %2058
        %2060 = vrot.lane.b32.xlu0 %v1145, 112
        %v2061 = vpop.permute.xlu0 %2060
        %v2062 = vsel %vm1243, %v2059, 0
        %v2064 = vsel %vm1243, %v2061, 0
        %2066 = vmatprep.subr.mxu0 0.0
        %2067 = vmatpush1.xpose.msra.mxu0 %v2064
        %2068 = vmatprep.subr.mxu0 0.0
        %2069 = vmatpush1.xpose.msra.mxu0 0.0
        %2070 = vmatprep.subr.mxu0 0.0
        %2071 = vmatpush1.xpose.msra.mxu0 0.0
        %2072 = vmatprep.subr.mxu0 0.0
        %2073 = vmatpush1.xpose.msra.mxu0 0.0
        %2074 = vmatprep.subr.mxu0 0.0
        %2075 = vmatpush1.xpose.msra.mxu0 0.0
        %2076 = vmatprep.subr.mxu0 0.0
        %2077 = vmatpush1.xpose.msra.mxu0 0.0
        %2078 = vmatprep.subr.mxu0 0.0
        %2079 = vmatpush1.xpose.msra.mxu0 0.0
        %2080 = vmatprep.subr.mxu0 0.0
        %2081 = vmatpush1.xpose.msra.mxu0 0.0
        %2082 = vmatprep.subr.mxu0 0.0
        %2083 = vmatpush1.xpose.msra.mxu0 0.0
        %2084 = vmatprep.subr.mxu0 0.0
        %2085 = vmatpush1.xpose.msra.mxu0 0.0
        %2086 = vmatprep.subr.mxu0 0.0
        %2087 = vmatpush1.xpose.msra.mxu0 0.0
        %2088 = vmatprep.subr.mxu0 0.0
        %2089 = vmatpush1.xpose.msra.mxu0 0.0
        %2090 = vmatprep.subr.mxu0 0.0
        %2091 = vmatpush1.xpose.msra.mxu0 0.0
        %2092 = vmatprep.subr.mxu0 0.0
        %2093 = vmatpush1.xpose.msra.mxu0 0.0
        %2094 = vmatprep.subr.mxu0 0.0
        %2095 = vmatpush1.xpose.msra.mxu0 0.0
        %2096 = vmatprep.subr.mxu0 0.0
        %2097 = vmatpush1.xpose.msra.mxu0 0.0
        %2098 = vmatprep.subr.mxu0 0.0
        %2099 = vmatpush1.xpose.msra.mxu0 0.0
        %2100 = vmatprep.subr.mxu0 0.0
        %2101 = vmatpush1.xpose.msra.mxu0 0.0
        %2102 = vmatprep.subr.mxu0 0.0
        %2103 = vmatpush1.xpose.msra.mxu0 0.0
        %2104 = vmatprep.subr.mxu0 0.0
        %2105 = vmatpush1.xpose.msra.mxu0 0.0
        %2106 = vmatprep.subr.mxu0 0.0
        %2107 = vmatpush1.xpose.msra.mxu0 0.0
        %2108 = vmatprep.subr.mxu0 0.0
        %2109 = vmatpush1.xpose.msra.mxu0 0.0
        %2110 = vmatprep.subr.mxu0 0.0
        %2111 = vmatpush1.xpose.msra.mxu0 0.0
        %2112 = vmatprep.subr.mxu0 0.0
        %2113 = vmatpush1.xpose.msra.mxu0 0.0
        %2114 = vmatprep.subr.mxu0 0.0
        %2115 = vmatpush1.xpose.msra.mxu0 0.0
        %2116 = vmatprep.subr.mxu0 0.0
        %2117 = vmatpush1.xpose.msra.mxu0 0.0
        %2118 = vmatprep.subr.mxu0 0.0
        %2119 = vmatpush1.xpose.msra.mxu0 0.0
        %2120 = vmatprep.subr.mxu0 0.0
        %2121 = vmatpush1.xpose.msra.mxu0 0.0
        %2122 = vmatprep.subr.mxu0 0.0
        %2123 = vmatpush1.xpose.msra.mxu0 0.0
        %2124 = vmatprep.subr.mxu0 0.0
        %2125 = vmatpush1.xpose.msra.mxu0 0.0
        %2126 = vmatprep.subr.mxu0 0.0
        %2127 = vmatpush1.xpose.msra.mxu0 0.0
        %2128 = vmatprep.subr.mxu0 0.0
        %2129 = vmatpush1.xpose.msra.mxu0 0.0
        %2130 = vmatprep.mubr.f32.mxu0 0.0
        %2131 = vmatmul.mubr.f32.gmra.mrb[0].mxu0 %v2062
        %v2132 = vpop.f32.mrb[0].mxu0
        %v2133 = vadd.f32 0.0, %v2132
        %v2134 = vpop.f32.mrb[0].mxu0
        %2135 = vdwg.mxu0
        %2136 = vrot.lane.b32.xlu0 %v1064, 112
        %v2137 = vpop.permute.xlu0 %2136
        %2138 = vrot.lane.b32.xlu0 %v1150, 112
        %v2139 = vpop.permute.xlu0 %2138
        %v2140 = vsel %vm1243, %v2137, 0
        %v2142 = vsel %vm1243, %v2139, 0
        %2144 = vmatprep.subr.mxu0 0.0
        %2145 = vmatpush1.xpose.msra.mxu0 %v2142
        %2146 = vmatprep.subr.mxu0 0.0
        %2147 = vmatpush1.xpose.msra.mxu0 0.0
        %2148 = vmatprep.subr.mxu0 0.0
        %2149 = vmatpush1.xpose.msra.mxu0 0.0
        %2150 = vmatprep.subr.mxu0 0.0
        %2151 = vmatpush1.xpose.msra.mxu0 0.0
        %2152 = vmatprep.subr.mxu0 0.0
        %2153 = vmatpush1.xpose.msra.mxu0 0.0
        %2154 = vmatprep.subr.mxu0 0.0
        %2155 = vmatpush1.xpose.msra.mxu0 0.0
        %2156 = vmatprep.subr.mxu0 0.0
        %2157 = vmatpush1.xpose.msra.mxu0 0.0
        %2158 = vmatprep.subr.mxu0 0.0
        %2159 = vmatpush1.xpose.msra.mxu0 0.0
        %2160 = vmatprep.subr.mxu0 0.0
        %2161 = vmatpush1.xpose.msra.mxu0 0.0
        %2162 = vmatprep.subr.mxu0 0.0
        %2163 = vmatpush1.xpose.msra.mxu0 0.0
        %2164 = vmatprep.subr.mxu0 0.0
        %2165 = vmatpush1.xpose.msra.mxu0 0.0
        %2166 = vmatprep.subr.mxu0 0.0
        %2167 = vmatpush1.xpose.msra.mxu0 0.0
        %2168 = vmatprep.subr.mxu0 0.0
        %2169 = vmatpush1.xpose.msra.mxu0 0.0
        %2170 = vmatprep.subr.mxu0 0.0
        %2171 = vmatpush1.xpose.msra.mxu0 0.0
        %2172 = vmatprep.subr.mxu0 0.0
        %2173 = vmatpush1.xpose.msra.mxu0 0.0
        %2174 = vmatprep.subr.mxu0 0.0
        %2175 = vmatpush1.xpose.msra.mxu0 0.0
        %2176 = vmatprep.subr.mxu0 0.0
        %2177 = vmatpush1.xpose.msra.mxu0 0.0
        %2178 = vmatprep.subr.mxu0 0.0
        %2179 = vmatpush1.xpose.msra.mxu0 0.0
        %2180 = vmatprep.subr.mxu0 0.0
        %2181 = vmatpush1.xpose.msra.mxu0 0.0
        %2182 = vmatprep.subr.mxu0 0.0
        %2183 = vmatpush1.xpose.msra.mxu0 0.0
        %2184 = vmatprep.subr.mxu0 0.0
        %2185 = vmatpush1.xpose.msra.mxu0 0.0
        %2186 = vmatprep.subr.mxu0 0.0
        %2187 = vmatpush1.xpose.msra.mxu0 0.0
        %2188 = vmatprep.subr.mxu0 0.0
        %2189 = vmatpush1.xpose.msra.mxu0 0.0
        %2190 = vmatprep.subr.mxu0 0.0
        %2191 = vmatpush1.xpose.msra.mxu0 0.0
        %2192 = vmatprep.subr.mxu0 0.0
        %2193 = vmatpush1.xpose.msra.mxu0 0.0
        %2194 = vmatprep.subr.mxu0 0.0
        %2195 = vmatpush1.xpose.msra.mxu0 0.0
        %2196 = vmatprep.subr.mxu0 0.0
        %2197 = vmatpush1.xpose.msra.mxu0 0.0
        %2198 = vmatprep.subr.mxu0 0.0
        %2199 = vmatpush1.xpose.msra.mxu0 0.0
        %2200 = vmatprep.subr.mxu0 0.0
        %2201 = vmatpush1.xpose.msra.mxu0 0.0
        %2202 = vmatprep.subr.mxu0 0.0
        %2203 = vmatpush1.xpose.msra.mxu0 0.0
        %2204 = vmatprep.subr.mxu0 0.0
        %2205 = vmatpush1.xpose.msra.mxu0 0.0
        %2206 = vmatprep.subr.mxu0 0.0
        %2207 = vmatpush1.xpose.msra.mxu0 0.0
        %2208 = vmatprep.mubr.f32.mxu0 0.0
        %2209 = vmatmul.mubr.f32.gmra.mrb[0].mxu0 %v2140
        %v2210 = vpop.f32.mrb[0].mxu0
        %v2211 = vadd.f32 0.0, %v2210
        %v2212 = vpop.f32.mrb[0].mxu0
        %2213 = vdwg.mxu0
        %v2214 = vsel %vm1243, %v2133, -inf
        %2215 = vmax.xlane.f32.xlu0 %v2214
        %v2216 = vpop.xlane.xlu0 %2215
        %v2217 = vsel %vm1243, %v2211, -inf
        %2218 = vmax.xlane.f32.xlu0 %v2217
        %v2219 = vpop.xlane.xlu0 %2218
        %v2220 = vsub.f32 %v2133, %v2216
        %v2221 = vsub.f32 %v2211, %v2219
        %v2222 = vmul.f32 %v2220, 1.442695
        %v2223 = vpow.pop %v2222
        %v2224 = vmul.f32 %v2221, 1.442695
        %v2225 = vpow.pop %v2224
        %v2226 = vsel %vm1243, %v2223, 0.0
        %2227 = vadd.xlane.f32.xlu0 %v2226
        %v2228 = vpop.xlane.xlu0 %2227
        %v2229 = vsel %vm1243, %v2225, 0.0
        %2230 = vadd.xlane.f32.xlu0 %v2229
        %v2231 = vpop.xlane.xlu0 %2230
        %v2232 = vrcp.pop %v2228
        %v2233 = vmul.f32 %v2223, %v2232
        %v2234 = vrcp.pop %v2231
        %v2235 = vmul.f32 %v2225, %v2234
        %2236 = vrot.lane.b32.xlu0 %v1231, 112
        %v2237 = vpop.permute.xlu0 %2236
        %v2240 = vsel %vm1243, %v2233, 0
        %2242 = vmatprep.subr.mxu0 0.0
        %2243 = vmatpush1.msra.mxu0 %v2237
        %2244 = vmatprep.subr.mxu0 0.0
        %2245 = vmatpush1.msra.mxu0 0.0
        %2246 = vmatprep.subr.mxu0 0.0
        %2247 = vmatpush1.msra.mxu0 0.0
        %2248 = vmatprep.subr.mxu0 0.0
        %2249 = vmatpush1.msra.mxu0 0.0
        %2250 = vmatprep.subr.mxu0 0.0
        %2251 = vmatpush1.msra.mxu0 0.0
        %2252 = vmatprep.subr.mxu0 0.0
        %2253 = vmatpush1.msra.mxu0 0.0
        %2254 = vmatprep.subr.mxu0 0.0
        %2255 = vmatpush1.msra.mxu0 0.0
        %2256 = vmatprep.subr.mxu0 0.0
        %2257 = vmatpush1.msra.mxu0 0.0
        %2258 = vmatprep.subr.mxu0 0.0
        %2259 = vmatpush1.msra.mxu0 0.0
        %2260 = vmatprep.subr.mxu0 0.0
        %2261 = vmatpush1.msra.mxu0 0.0
        %2262 = vmatprep.subr.mxu0 0.0
        %2263 = vmatpush1.msra.mxu0 0.0
        %2264 = vmatprep.subr.mxu0 0.0
        %2265 = vmatpush1.msra.mxu0 0.0
        %2266 = vmatprep.subr.mxu0 0.0
        %2267 = vmatpush1.msra.mxu0 0.0
        %2268 = vmatprep.subr.mxu0 0.0
        %2269 = vmatpush1.msra.mxu0 0.0
        %2270 = vmatprep.subr.mxu0 0.0
        %2271 = vmatpush1.msra.mxu0 0.0
        %2272 = vmatprep.subr.mxu0 0.0
        %2273 = vmatpush1.msra.mxu0 0.0
        %2274 = vmatprep.subr.mxu0 0.0
        %2275 = vmatpush1.msra.mxu0 0.0
        %2276 = vmatprep.subr.mxu0 0.0
        %2277 = vmatpush1.msra.mxu0 0.0
        %2278 = vmatprep.subr.mxu0 0.0
        %2279 = vmatpush1.msra.mxu0 0.0
        %2280 = vmatprep.subr.mxu0 0.0
        %2281 = vmatpush1.msra.mxu0 0.0
        %2282 = vmatprep.subr.mxu0 0.0
        %2283 = vmatpush1.msra.mxu0 0.0
        %2284 = vmatprep.subr.mxu0 0.0
        %2285 = vmatpush1.msra.mxu0 0.0
        %2286 = vmatprep.subr.mxu0 0.0
        %2287 = vmatpush1.msra.mxu0 0.0
        %2288 = vmatprep.subr.mxu0 0.0
        %2289 = vmatpush1.msra.mxu0 0.0
        %2290 = vmatprep.subr.mxu0 0.0
        %2291 = vmatpush1.msra.mxu0 0.0
        %2292 = vmatprep.subr.mxu0 0.0
        %2293 = vmatpush1.msra.mxu0 0.0
        %2294 = vmatprep.subr.mxu0 0.0
        %2295 = vmatpush1.msra.mxu0 0.0
        %2296 = vmatprep.subr.mxu0 0.0
        %2297 = vmatpush1.msra.mxu0 0.0
        %2298 = vmatprep.subr.mxu0 0.0
        %2299 = vmatpush1.msra.mxu0 0.0
        %2300 = vmatprep.subr.mxu0 0.0
        %2301 = vmatpush1.msra.mxu0 0.0
        %2302 = vmatprep.subr.mxu0 0.0
        %2303 = vmatpush1.msra.mxu0 0.0
        %2304 = vmatprep.subr.mxu0 0.0
        %2305 = vmatpush1.msra.mxu0 0.0
        %2306 = vmatprep.mubr.f32.mxu0 0.0
        %2307 = vmatmul.mubr.f32.gmra.mrb[0].mxu0 %v2240
        %v2308 = vpop.f32.mrb[0].mxu0
        %v2309 = vadd.f32 0.0, %v2308
        %v2310 = vpop.f32.mrb[0].mxu0
        %2311 = vdwg.mxu0
        %2312 = vrot.lane.b32.xlu0 %v1236, 112
        %v2313 = vpop.permute.xlu0 %2312
        %v2316 = vsel %vm1243, %v2235, 0
        %2318 = vmatprep.subr.mxu0 0.0
        %2319 = vmatpush1.msra.mxu0 %v2313
        %2320 = vmatprep.subr.mxu0 0.0
        %2321 = vmatpush1.msra.mxu0 0.0
        %2322 = vmatprep.subr.mxu0 0.0
        %2323 = vmatpush1.msra.mxu0 0.0
        %2324 = vmatprep.subr.mxu0 0.0
        %2325 = vmatpush1.msra.mxu0 0.0
        %2326 = vmatprep.subr.mxu0 0.0
        %2327 = vmatpush1.msra.mxu0 0.0
        %2328 = vmatprep.subr.mxu0 0.0
        %2329 = vmatpush1.msra.mxu0 0.0
        %2330 = vmatprep.subr.mxu0 0.0
        %2331 = vmatpush1.msra.mxu0 0.0
        %2332 = vmatprep.subr.mxu0 0.0
        %2333 = vmatpush1.msra.mxu0 0.0
        %2334 = vmatprep.subr.mxu0 0.0
        %2335 = vmatpush1.msra.mxu0 0.0
        %2336 = vmatprep.subr.mxu0 0.0
        %2337 = vmatpush1.msra.mxu0 0.0
        %2338 = vmatprep.subr.mxu0 0.0
        %2339 = vmatpush1.msra.mxu0 0.0
        %2340 = vmatprep.subr.mxu0 0.0
        %2341 = vmatpush1.msra.mxu0 0.0
        %2342 = vmatprep.subr.mxu0 0.0
        %2343 = vmatpush1.msra.mxu0 0.0
        %2344 = vmatprep.subr.mxu0 0.0
        %2345 = vmatpush1.msra.mxu0 0.0
        %2346 = vmatprep.subr.mxu0 0.0
        %2347 = vmatpush1.msra.mxu0 0.0
        %2348 = vmatprep.subr.mxu0 0.0
        %2349 = vmatpush1.msra.mxu0 0.0
        %2350 = vmatprep.subr.mxu0 0.0
        %2351 = vmatpush1.msra.mxu0 0.0
        %2352 = vmatprep.subr.mxu0 0.0
        %2353 = vmatpush1.msra.mxu0 0.0
        %2354 = vmatprep.subr.mxu0 0.0
        %2355 = vmatpush1.msra.mxu0 0.0
        %2356 = vmatprep.subr.mxu0 0.0
        %2357 = vmatpush1.msra.mxu0 0.0
        %2358 = vmatprep.subr.mxu0 0.0
        %2359 = vmatpush1.msra.mxu0 0.0
        %2360 = vmatprep.subr.mxu0 0.0
        %2361 = vmatpush1.msra.mxu0 0.0
        %2362 = vmatprep.subr.mxu0 0.0
        %2363 = vmatpush1.msra.mxu0 0.0
        %2364 = vmatprep.subr.mxu0 0.0
        %2365 = vmatpush1.msra.mxu0 0.0
        %2366 = vmatprep.subr.mxu0 0.0
        %2367 = vmatpush1.msra.mxu0 0.0
        %2368 = vmatprep.subr.mxu0 0.0
        %2369 = vmatpush1.msra.mxu0 0.0
        %2370 = vmatprep.subr.mxu0 0.0
        %2371 = vmatpush1.msra.mxu0 0.0
        %2372 = vmatprep.subr.mxu0 0.0
        %2373 = vmatpush1.msra.mxu0 0.0
        %2374 = vmatprep.subr.mxu0 0.0
        %2375 = vmatpush1.msra.mxu0 0.0
        %2376 = vmatprep.subr.mxu0 0.0
        %2377 = vmatpush1.msra.mxu0 0.0
        %2378 = vmatprep.subr.mxu0 0.0
        %2379 = vmatpush1.msra.mxu0 0.0
        %2380 = vmatprep.subr.mxu0 0.0
        %2381 = vmatpush1.msra.mxu0 0.0
        %2382 = vmatprep.mubr.f32.mxu0 0.0
        %2383 = vmatmul.mubr.f32.gmra.mrb[0].mxu0 %v2316
        %v2384 = vpop.f32.mrb[0].mxu0
        %v2385 = vadd.f32 0.0, %v2384
        %v2386 = vpop.f32.mrb[0].mxu0
        %2387 = vdwg.mxu0
        %v2389 = vsel %vm1243, %v2309, 0
        %v2392 = vsel %vm1243, %v2385, 0
        %2394 = vmatprep.subr.mxu0 0.0
        %2395 = vmatpush1.msra.mxu0 %v1241
        %2396 = vmatprep.subr.mxu0 0.0
        %2397 = vmatpush1.msra.mxu0 0.0
        %2398 = vmatprep.subr.mxu0 0.0
        %2399 = vmatpush1.msra.mxu0 0.0
        %2400 = vmatprep.subr.mxu0 0.0
        %2401 = vmatpush1.msra.mxu0 0.0
        %2402 = vmatprep.subr.mxu0 0.0
        %2403 = vmatpush1.msra.mxu0 0.0
        %2404 = vmatprep.subr.mxu0 0.0
        %2405 = vmatpush1.msra.mxu0 0.0
        %2406 = vmatprep.subr.mxu0 0.0
        %2407 = vmatpush1.msra.mxu0 0.0
        %2408 = vmatprep.subr.mxu0 0.0
        %2409 = vmatpush1.msra.mxu0 0.0
        %2410 = vmatprep.subr.mxu0 0.0
        %2411 = vmatpush1.msra.mxu0 0.0
        %2412 = vmatprep.subr.mxu0 0.0
        %2413 = vmatpush1.msra.mxu0 0.0
        %2414 = vmatprep.subr.mxu0 0.0
        %2415 = vmatpush1.msra.mxu0 0.0
        %2416 = vmatprep.subr.mxu0 0.0
        %2417 = vmatpush1.msra.mxu0 0.0
        %2418 = vmatprep.subr.mxu0 0.0
        %2419 = vmatpush1.msra.mxu0 0.0
        %2420 = vmatprep.subr.mxu0 0.0
        %2421 = vmatpush1.msra.mxu0 0.0
        %2422 = vmatprep.subr.mxu0 0.0
        %2423 = vmatpush1.msra.mxu0 0.0
        %2424 = vmatprep.subr.mxu0 0.0
        %2425 = vmatpush1.msra.mxu0 0.0
        %2426 = vmatprep.subr.mxu0 0.0
        %2427 = vmatpush1.msra.mxu0 0.0
        %2428 = vmatprep.subr.mxu0 0.0
        %2429 = vmatpush1.msra.mxu0 0.0
        %2430 = vmatprep.subr.mxu0 0.0
        %2431 = vmatpush1.msra.mxu0 0.0
        %2432 = vmatprep.subr.mxu0 0.0
        %2433 = vmatpush1.msra.mxu0 0.0
        %2434 = vmatprep.subr.mxu0 0.0
        %2435 = vmatpush1.msra.mxu0 0.0
        %2436 = vmatprep.subr.mxu0 0.0
        %2437 = vmatpush1.msra.mxu0 0.0
        %2438 = vmatprep.subr.mxu0 0.0
        %2439 = vmatpush1.msra.mxu0 0.0
        %2440 = vmatprep.subr.mxu0 0.0
        %2441 = vmatpush1.msra.mxu0 0.0
        %2442 = vmatprep.subr.mxu0 0.0
        %2443 = vmatpush1.msra.mxu0 0.0
        %2444 = vmatprep.subr.mxu0 0.0
        %2445 = vmatpush1.msra.mxu0 0.0
        %2446 = vmatprep.subr.mxu0 0.0
        %2447 = vmatpush1.msra.mxu0 0.0
        %2448 = vmatprep.subr.mxu0 0.0
        %2449 = vmatpush1.msra.mxu0 0.0
        %2450 = vmatprep.subr.mxu0 0.0
        %2451 = vmatpush1.msra.mxu0 0.0
        %2452 = vmatprep.subr.mxu0 0.0
        %2453 = vmatpush1.msra.mxu0 0.0
        %2454 = vmatprep.subr.mxu0 0.0
        %2455 = vmatpush1.msra.mxu0 0.0
        %2456 = vmatprep.subr.mxu0 0.0
        %2457 = vmatpush1.msra.mxu0 0.0
        %2458 = vmatprep.mubr.f32.mxu0 0.0
        %2459 = vmatmul.mubr.f32.gmra.mrb[0].mxu0 %v2389
        %v2460 = vpop.f32.mrb[0].mxu0
        %v2461 = vadd.f32 0.0, %v2460
        %v2462 = vpop.f32.mrb[0].mxu0
        %2463 = vmatprep.mubr.f32.mxu0 0.0
        %2464 = vmatmul.mubr.f32.gmra.mrb[0].mxu0 %v2392
        %v2465 = vpop.f32.mrb[0].mxu0
        %v2466 = vadd.f32 0.0, %v2465
        %v2467 = vpop.f32.mrb[0].mxu0
        %2468 = vdwg.mxu0
        %v2469 = vadd.f32 %v2050, %v2461
        %v2470 = vadd.f32 %v2055, %v2466
        %2471 = vrot.lane.b32.xlu0 %v1059, 104
        %v2472 = vpop.permute.xlu0 %2471
        %2473 = vrot.lane.b32.xlu0 %v1145, 104
        %v2474 = vpop.permute.xlu0 %2473
        %v2475 = vsel %vm1243, %v2472, 0
        %v2477 = vsel %vm1243, %v2474, 0
        %2479 = vmatprep.subr.mxu0 0.0
        %2480 = vmatpush1.xpose.msra.mxu0 %v2477
        %2481 = vmatprep.subr.mxu0 0.0
        %2482 = vmatpush1.xpose.msra.mxu0 0.0
        %2483 = vmatprep.subr.mxu0 0.0
        %2484 = vmatpush1.xpose.msra.mxu0 0.0
        %2485 = vmatprep.subr.mxu0 0.0
        %2486 = vmatpush1.xpose.msra.mxu0 0.0
        %2487 = vmatprep.subr.mxu0 0.0
        %2488 = vmatpush1.xpose.msra.mxu0 0.0
        %2489 = vmatprep.subr.mxu0 0.0
        %2490 = vmatpush1.xpose.msra.mxu0 0.0
        %2491 = vmatprep.subr.mxu0 0.0
        %2492 = vmatpush1.xpose.msra.mxu0 0.0
        %2493 = vmatprep.subr.mxu0 0.0
        %2494 = vmatpush1.xpose.msra.mxu0 0.0
        %2495 = vmatprep.subr.mxu0 0.0
        %2496 = vmatpush1.xpose.msra.mxu0 0.0
        %2497 = vmatprep.subr.mxu0 0.0
        %2498 = vmatpush1.xpose.msra.mxu0 0.0
        %2499 = vmatprep.subr.mxu0 0.0
        %2500 = vmatpush1.xpose.msra.mxu0 0.0
        %2501 = vmatprep.subr.mxu0 0.0
        %2502 = vmatpush1.xpose.msra.mxu0 0.0
        %2503 = vmatprep.subr.mxu0 0.0
        %2504 = vmatpush1.xpose.msra.mxu0 0.0
        %2505 = vmatprep.subr.mxu0 0.0
        %2506 = vmatpush1.xpose.msra.mxu0 0.0
        %2507 = vmatprep.subr.mxu0 0.0
        %2508 = vmatpush1.xpose.msra.mxu0 0.0
        %2509 = vmatprep.subr.mxu0 0.0
        %2510 = vmatpush1.xpose.msra.mxu0 0.0
        %2511 = vmatprep.subr.mxu0 0.0
        %2512 = vmatpush1.xpose.msra.mxu0 0.0
        %2513 = vmatprep.subr.mxu0 0.0
        %2514 = vmatpush1.xpose.msra.mxu0 0.0
        %2515 = vmatprep.subr.mxu0 0.0
        %2516 = vmatpush1.xpose.msra.mxu0 0.0
        %2517 = vmatprep.subr.mxu0 0.0
        %2518 = vmatpush1.xpose.msra.mxu0 0.0
        %2519 = vmatprep.subr.mxu0 0.0
        %2520 = vmatpush1.xpose.msra.mxu0 0.0
        %2521 = vmatprep.subr.mxu0 0.0
        %2522 = vmatpush1.xpose.msra.mxu0 0.0
        %2523 = vmatprep.subr.mxu0 0.0
        %2524 = vmatpush1.xpose.msra.mxu0 0.0
        %2525 = vmatprep.subr.mxu0 0.0
        %2526 = vmatpush1.xpose.msra.mxu0 0.0
        %2527 = vmatprep.subr.mxu0 0.0
        %2528 = vmatpush1.xpose.msra.mxu0 0.0
        %2529 = vmatprep.subr.mxu0 0.0
        %2530 = vmatpush1.xpose.msra.mxu0 0.0
        %2531 = vmatprep.subr.mxu0 0.0
        %2532 = vmatpush1.xpose.msra.mxu0 0.0
        %2533 = vmatprep.subr.mxu0 0.0
        %2534 = vmatpush1.xpose.msra.mxu0 0.0
        %2535 = vmatprep.subr.mxu0 0.0
        %2536 = vmatpush1.xpose.msra.mxu0 0.0
        %2537 = vmatprep.subr.mxu0 0.0
        %2538 = vmatpush1.xpose.msra.mxu0 0.0
        %2539 = vmatprep.subr.mxu0 0.0
        %2540 = vmatpush1.xpose.msra.mxu0 0.0
        %2541 = vmatprep.subr.mxu0 0.0
        %2542 = vmatpush1.xpose.msra.mxu0 0.0
        %2543 = vmatprep.mubr.f32.mxu0 0.0
        %2544 = vmatmul.mubr.f32.gmra.mrb[0].mxu0 %v2475
        %v2545 = vpop.f32.mrb[0].mxu0
        %v2546 = vadd.f32 0.0, %v2545
        %v2547 = vpop.f32.mrb[0].mxu0
        %2548 = vdwg.mxu0
        %2549 = vrot.lane.b32.xlu0 %v1064, 104
        %v2550 = vpop.permute.xlu0 %2549
        %2551 = vrot.lane.b32.xlu0 %v1150, 104
        %v2552 = vpop.permute.xlu0 %2551
        %v2553 = vsel %vm1243, %v2550, 0
        %v2555 = vsel %vm1243, %v2552, 0
        %2557 = vmatprep.subr.mxu0 0.0
        %2558 = vmatpush1.xpose.msra.mxu0 %v2555
        %2559 = vmatprep.subr.mxu0 0.0
        %2560 = vmatpush1.xpose.msra.mxu0 0.0
        %2561 = vmatprep.subr.mxu0 0.0
        %2562 = vmatpush1.xpose.msra.mxu0 0.0
        %2563 = vmatprep.subr.mxu0 0.0
        %2564 = vmatpush1.xpose.msra.mxu0 0.0
        %2565 = vmatprep.subr.mxu0 0.0
        %2566 = vmatpush1.xpose.msra.mxu0 0.0
        %2567 = vmatprep.subr.mxu0 0.0
        %2568 = vmatpush1.xpose.msra.mxu0 0.0
        %2569 = vmatprep.subr.mxu0 0.0
        %2570 = vmatpush1.xpose.msra.mxu0 0.0
        %2571 = vmatprep.subr.mxu0 0.0
        %2572 = vmatpush1.xpose.msra.mxu0 0.0
        %2573 = vmatprep.subr.mxu0 0.0
        %2574 = vmatpush1.xpose.msra.mxu0 0.0
        %2575 = vmatprep.subr.mxu0 0.0
        %2576 = vmatpush1.xpose.msra.mxu0 0.0
        %2577 = vmatprep.subr.mxu0 0.0
        %2578 = vmatpush1.xpose.msra.mxu0 0.0
        %2579 = vmatprep.subr.mxu0 0.0
        %2580 = vmatpush1.xpose.msra.mxu0 0.0
        %2581 = vmatprep.subr.mxu0 0.0
        %2582 = vmatpush1.xpose.msra.mxu0 0.0
        %2583 = vmatprep.subr.mxu0 0.0
        %2584 = vmatpush1.xpose.msra.mxu0 0.0
        %2585 = vmatprep.subr.mxu0 0.0
        %2586 = vmatpush1.xpose.msra.mxu0 0.0
        %2587 = vmatprep.subr.mxu0 0.0
        %2588 = vmatpush1.xpose.msra.mxu0 0.0
        %2589 = vmatprep.subr.mxu0 0.0
        %2590 = vmatpush1.xpose.msra.mxu0 0.0
        %2591 = vmatprep.subr.mxu0 0.0
        %2592 = vmatpush1.xpose.msra.mxu0 0.0
        %2593 = vmatprep.subr.mxu0 0.0
        %2594 = vmatpush1.xpose.msra.mxu0 0.0
        %2595 = vmatprep.subr.mxu0 0.0
        %2596 = vmatpush1.xpose.msra.mxu0 0.0
        %2597 = vmatprep.subr.mxu0 0.0
        %2598 = vmatpush1.xpose.msra.mxu0 0.0
        %2599 = vmatprep.subr.mxu0 0.0
        %2600 = vmatpush1.xpose.msra.mxu0 0.0
        %2601 = vmatprep.subr.mxu0 0.0
        %2602 = vmatpush1.xpose.msra.mxu0 0.0
        %2603 = vmatprep.subr.mxu0 0.0
        %2604 = vmatpush1.xpose.msra.mxu0 0.0
        %2605 = vmatprep.subr.mxu0 0.0
        %2606 = vmatpush1.xpose.msra.mxu0 0.0
        %2607 = vmatprep.subr.mxu0 0.0
        %2608 = vmatpush1.xpose.msra.mxu0 0.0
        %2609 = vmatprep.subr.mxu0 0.0
        %2610 = vmatpush1.xpose.msra.mxu0 0.0
        %2611 = vmatprep.subr.mxu0 0.0
        %2612 = vmatpush1.xpose.msra.mxu0 0.0
        %2613 = vmatprep.subr.mxu0 0.0
        %2614 = vmatpush1.xpose.msra.mxu0 0.0
        %2615 = vmatprep.subr.mxu0 0.0
        %2616 = vmatpush1.xpose.msra.mxu0 0.0
        %2617 = vmatprep.subr.mxu0 0.0
        %2618 = vmatpush1.xpose.msra.mxu0 0.0
        %2619 = vmatprep.subr.mxu0 0.0
        %2620 = vmatpush1.xpose.msra.mxu0 0.0
        %2621 = vmatprep.mubr.f32.mxu0 0.0
        %2622 = vmatmul.mubr.f32.gmra.mrb[0].mxu0 %v2553
        %v2623 = vpop.f32.mrb[0].mxu0
        %v2624 = vadd.f32 0.0, %v2623
        %v2625 = vpop.f32.mrb[0].mxu0
        %2626 = vdwg.mxu0
        %v2627 = vsel %vm1243, %v2546, -inf
        %2628 = vmax.xlane.f32.xlu0 %v2627
        %v2629 = vpop.xlane.xlu0 %2628
        %v2630 = vsel %vm1243, %v2624, -inf
        %2631 = vmax.xlane.f32.xlu0 %v2630
        %v2632 = vpop.xlane.xlu0 %2631
        %v2633 = vsub.f32 %v2546, %v2629
        %v2634 = vsub.f32 %v2624, %v2632
        %v2635 = vmul.f32 %v2633, 1.442695
        %v2636 = vpow.pop %v2635
        %v2637 = vmul.f32 %v2634, 1.442695
        %v2638 = vpow.pop %v2637
        %v2639 = vsel %vm1243, %v2636, 0.0
        %2640 = vadd.xlane.f32.xlu0 %v2639
        %v2641 = vpop.xlane.xlu0 %2640
        %v2642 = vsel %vm1243, %v2638, 0.0
        %2643 = vadd.xlane.f32.xlu0 %v2642
        %v2644 = vpop.xlane.xlu0 %2643
        %v2645 = vrcp.pop %v2641
        %v2646 = vmul.f32 %v2636, %v2645
        %v2647 = vrcp.pop %v2644
        %v2648 = vmul.f32 %v2638, %v2647
        %2649 = vrot.lane.b32.xlu0 %v1231, 104
        %v2650 = vpop.permute.xlu0 %2649
        %v2653 = vsel %vm1243, %v2646, 0
        %2655 = vmatprep.subr.mxu0 0.0
        %2656 = vmatpush1.msra.mxu0 %v2650
        %2657 = vmatprep.subr.mxu0 0.0
        %2658 = vmatpush1.msra.mxu0 0.0
        %2659 = vmatprep.subr.mxu0 0.0
        %2660 = vmatpush1.msra.mxu0 0.0
        %2661 = vmatprep.subr.mxu0 0.0
        %2662 = vmatpush1.msra.mxu0 0.0
        %2663 = vmatprep.subr.mxu0 0.0
        %2664 = vmatpush1.msra.mxu0 0.0
        %2665 = vmatprep.subr.mxu0 0.0
        %2666 = vmatpush1.msra.mxu0 0.0
        %2667 = vmatprep.subr.mxu0 0.0
        %2668 = vmatpush1.msra.mxu0 0.0
        %2669 = vmatprep.subr.mxu0 0.0
        %2670 = vmatpush1.msra.mxu0 0.0
        %2671 = vmatprep.subr.mxu0 0.0
        %2672 = vmatpush1.msra.mxu0 0.0
        %2673 = vmatprep.subr.mxu0 0.0
        %2674 = vmatpush1.msra.mxu0 0.0
        %2675 = vmatprep.subr.mxu0 0.0
        %2676 = vmatpush1.msra.mxu0 0.0
        %2677 = vmatprep.subr.mxu0 0.0
        %2678 = vmatpush1.msra.mxu0 0.0
        %2679 = vmatprep.subr.mxu0 0.0
        %2680 = vmatpush1.msra.mxu0 0.0
        %2681 = vmatprep.subr.mxu0 0.0
        %2682 = vmatpush1.msra.mxu0 0.0
        %2683 = vmatprep.subr.mxu0 0.0
        %2684 = vmatpush1.msra.mxu0 0.0
        %2685 = vmatprep.subr.mxu0 0.0
        %2686 = vmatpush1.msra.mxu0 0.0
        %2687 = vmatprep.subr.mxu0 0.0
        %2688 = vmatpush1.msra.mxu0 0.0
        %2689 = vmatprep.subr.mxu0 0.0
        %2690 = vmatpush1.msra.mxu0 0.0
        %2691 = vmatprep.subr.mxu0 0.0
        %2692 = vmatpush1.msra.mxu0 0.0
        %2693 = vmatprep.subr.mxu0 0.0
        %2694 = vmatpush1.msra.mxu0 0.0
        %2695 = vmatprep.subr.mxu0 0.0
        %2696 = vmatpush1.msra.mxu0 0.0
        %2697 = vmatprep.subr.mxu0 0.0
        %2698 = vmatpush1.msra.mxu0 0.0
        %2699 = vmatprep.subr.mxu0 0.0
        %2700 = vmatpush1.msra.mxu0 0.0
        %2701 = vmatprep.subr.mxu0 0.0
        %2702 = vmatpush1.msra.mxu0 0.0
        %2703 = vmatprep.subr.mxu0 0.0
        %2704 = vmatpush1.msra.mxu0 0.0
        %2705 = vmatprep.subr.mxu0 0.0
        %2706 = vmatpush1.msra.mxu0 0.0
        %2707 = vmatprep.subr.mxu0 0.0
        %2708 = vmatpush1.msra.mxu0 0.0
        %2709 = vmatprep.subr.mxu0 0.0
        %2710 = vmatpush1.msra.mxu0 0.0
        %2711 = vmatprep.subr.mxu0 0.0
        %2712 = vmatpush1.msra.mxu0 0.0
        %2713 = vmatprep.subr.mxu0 0.0
        %2714 = vmatpush1.msra.mxu0 0.0
        %2715 = vmatprep.subr.mxu0 0.0
        %2716 = vmatpush1.msra.mxu0 0.0
        %2717 = vmatprep.subr.mxu0 0.0
        %2718 = vmatpush1.msra.mxu0 0.0
        %2719 = vmatprep.mubr.f32.mxu0 0.0
        %2720 = vmatmul.mubr.f32.gmra.mrb[0].mxu0 %v2653
        %v2721 = vpop.f32.mrb[0].mxu0
        %v2722 = vadd.f32 0.0, %v2721
        %v2723 = vpop.f32.mrb[0].mxu0
        %2724 = vdwg.mxu0
        %2725 = vrot.lane.b32.xlu0 %v1236, 104
        %v2726 = vpop.permute.xlu0 %2725
        %v2729 = vsel %vm1243, %v2648, 0
        %2731 = vmatprep.subr.mxu0 0.0
        %2732 = vmatpush1.msra.mxu0 %v2726
        %2733 = vmatprep.subr.mxu0 0.0
        %2734 = vmatpush1.msra.mxu0 0.0
        %2735 = vmatprep.subr.mxu0 0.0
        %2736 = vmatpush1.msra.mxu0 0.0
        %2737 = vmatprep.subr.mxu0 0.0
        %2738 = vmatpush1.msra.mxu0 0.0
        %2739 = vmatprep.subr.mxu0 0.0
        %2740 = vmatpush1.msra.mxu0 0.0
        %2741 = vmatprep.subr.mxu0 0.0
        %2742 = vmatpush1.msra.mxu0 0.0
        %2743 = vmatprep.subr.mxu0 0.0
        %2744 = vmatpush1.msra.mxu0 0.0
        %2745 = vmatprep.subr.mxu0 0.0
        %2746 = vmatpush1.msra.mxu0 0.0
        %2747 = vmatprep.subr.mxu0 0.0
        %2748 = vmatpush1.msra.mxu0 0.0
        %2749 = vmatprep.subr.mxu0 0.0
        %2750 = vmatpush1.msra.mxu0 0.0
        %2751 = vmatprep.subr.mxu0 0.0
        %2752 = vmatpush1.msra.mxu0 0.0
        %2753 = vmatprep.subr.mxu0 0.0
        %2754 = vmatpush1.msra.mxu0 0.0
        %2755 = vmatprep.subr.mxu0 0.0
        %2756 = vmatpush1.msra.mxu0 0.0
        %2757 = vmatprep.subr.mxu0 0.0
        %2758 = vmatpush1.msra.mxu0 0.0
        %2759 = vmatprep.subr.mxu0 0.0
        %2760 = vmatpush1.msra.mxu0 0.0
        %2761 = vmatprep.subr.mxu0 0.0
        %2762 = vmatpush1.msra.mxu0 0.0
        %2763 = vmatprep.subr.mxu0 0.0
        %2764 = vmatpush1.msra.mxu0 0.0
        %2765 = vmatprep.subr.mxu0 0.0
        %2766 = vmatpush1.msra.mxu0 0.0
        %2767 = vmatprep.subr.mxu0 0.0
        %2768 = vmatpush1.msra.mxu0 0.0
        %2769 = vmatprep.subr.mxu0 0.0
        %2770 = vmatpush1.msra.mxu0 0.0
        %2771 = vmatprep.subr.mxu0 0.0
        %2772 = vmatpush1.msra.mxu0 0.0
        %2773 = vmatprep.subr.mxu0 0.0
        %2774 = vmatpush1.msra.mxu0 0.0
        %2775 = vmatprep.subr.mxu0 0.0
        %2776 = vmatpush1.msra.mxu0 0.0
        %2777 = vmatprep.subr.mxu0 0.0
        %2778 = vmatpush1.msra.mxu0 0.0
        %2779 = vmatprep.subr.mxu0 0.0
        %2780 = vmatpush1.msra.mxu0 0.0
        %2781 = vmatprep.subr.mxu0 0.0
        %2782 = vmatpush1.msra.mxu0 0.0
        %2783 = vmatprep.subr.mxu0 0.0
        %2784 = vmatpush1.msra.mxu0 0.0
        %2785 = vmatprep.subr.mxu0 0.0
        %2786 = vmatpush1.msra.mxu0 0.0
        %2787 = vmatprep.subr.mxu0 0.0
        %2788 = vmatpush1.msra.mxu0 0.0
        %2789 = vmatprep.subr.mxu0 0.0
        %2790 = vmatpush1.msra.mxu0 0.0
        %2791 = vmatprep.subr.mxu0 0.0
        %2792 = vmatpush1.msra.mxu0 0.0
        %2793 = vmatprep.subr.mxu0 0.0
        %2794 = vmatpush1.msra.mxu0 0.0
        %2795 = vmatprep.mubr.f32.mxu0 0.0
        %2796 = vmatmul.mubr.f32.gmra.mrb[0].mxu0 %v2729
        %v2797 = vpop.f32.mrb[0].mxu0
        %v2798 = vadd.f32 0.0, %v2797
        %v2799 = vpop.f32.mrb[0].mxu0
        %2800 = vdwg.mxu0
        %v2802 = vsel %vm1243, %v2722, 0
        %v2805 = vsel %vm1243, %v2798, 0
        %2807 = vmatprep.subr.mxu0 0.0
        %2808 = vmatpush1.msra.mxu0 %v1242
        %2809 = vmatprep.subr.mxu0 0.0
        %2810 = vmatpush1.msra.mxu0 0.0
        %2811 = vmatprep.subr.mxu0 0.0
        %2812 = vmatpush1.msra.mxu0 0.0
        %2813 = vmatprep.subr.mxu0 0.0
        %2814 = vmatpush1.msra.mxu0 0.0
        %2815 = vmatprep.subr.mxu0 0.0
        %2816 = vmatpush1.msra.mxu0 0.0
        %2817 = vmatprep.subr.mxu0 0.0
        %2818 = vmatpush1.msra.mxu0 0.0
        %2819 = vmatprep.subr.mxu0 0.0
        %2820 = vmatpush1.msra.mxu0 0.0
        %2821 = vmatprep.subr.mxu0 0.0
        %2822 = vmatpush1.msra.mxu0 0.0
        %2823 = vmatprep.subr.mxu0 0.0
        %2824 = vmatpush1.msra.mxu0 0.0
        %2825 = vmatprep.subr.mxu0 0.0
        %2826 = vmatpush1.msra.mxu0 0.0
        %2827 = vmatprep.subr.mxu0 0.0
        %2828 = vmatpush1.msra.mxu0 0.0
        %2829 = vmatprep.subr.mxu0 0.0
        %2830 = vmatpush1.msra.mxu0 0.0
        %2831 = vmatprep.subr.mxu0 0.0
        %2832 = vmatpush1.msra.mxu0 0.0
        %2833 = vmatprep.subr.mxu0 0.0
        %2834 = vmatpush1.msra.mxu0 0.0
        %2835 = vmatprep.subr.mxu0 0.0
        %2836 = vmatpush1.msra.mxu0 0.0
        %2837 = vmatprep.subr.mxu0 0.0
        %2838 = vmatpush1.msra.mxu0 0.0
        %2839 = vmatprep.subr.mxu0 0.0
        %2840 = vmatpush1.msra.mxu0 0.0
        %2841 = vmatprep.subr.mxu0 0.0
        %2842 = vmatpush1.msra.mxu0 0.0
        %2843 = vmatprep.subr.mxu0 0.0
        %2844 = vmatpush1.msra.mxu0 0.0
        %2845 = vmatprep.subr.mxu0 0.0
        %2846 = vmatpush1.msra.mxu0 0.0
        %2847 = vmatprep.subr.mxu0 0.0
        %2848 = vmatpush1.msra.mxu0 0.0
        %2849 = vmatprep.subr.mxu0 0.0
        %2850 = vmatpush1.msra.mxu0 0.0
        %2851 = vmatprep.subr.mxu0 0.0
        %2852 = vmatpush1.msra.mxu0 0.0
        %2853 = vmatprep.subr.mxu0 0.0
        %2854 = vmatpush1.msra.mxu0 0.0
        %2855 = vmatprep.subr.mxu0 0.0
        %2856 = vmatpush1.msra.mxu0 0.0
        %2857 = vmatprep.subr.mxu0 0.0
        %2858 = vmatpush1.msra.mxu0 0.0
        %2859 = vmatprep.subr.mxu0 0.0
        %2860 = vmatpush1.msra.mxu0 0.0
        %2861 = vmatprep.subr.mxu0 0.0
        %2862 = vmatpush1.msra.mxu0 0.0
        %2863 = vmatprep.subr.mxu0 0.0
        %2864 = vmatpush1.msra.mxu0 0.0
        %2865 = vmatprep.subr.mxu0 0.0
        %2866 = vmatpush1.msra.mxu0 0.0
        %2867 = vmatprep.subr.mxu0 0.0
        %2868 = vmatpush1.msra.mxu0 0.0
        %2869 = vmatprep.subr.mxu0 0.0
        %2870 = vmatpush1.msra.mxu0 0.0
        %2871 = vmatprep.mubr.f32.mxu0 0.0
        %2872 = vmatmul.mubr.f32.gmra.mrb[0].mxu0 %v2802
        %v2873 = vpop.f32.mrb[0].mxu0
        %v2874 = vadd.f32 0.0, %v2873
        %v2875 = vpop.f32.mrb[0].mxu0
        %2876 = vmatprep.mubr.f32.mxu0 0.0
        %2877 = vmatmul.mubr.f32.gmra.mrb[0].mxu0 %v2805
        %v2878 = vpop.f32.mrb[0].mxu0
        %v2879 = vadd.f32 0.0, %v2878
        %v2880 = vpop.f32.mrb[0].mxu0
        %2881 = vdwg.mxu0
        %v2882 = vadd.f32 %v2469, %v2874
        %v2883 = vadd.f32 %v2470, %v2879
        %v2884 = vld [vmem:[%s805] sm:$0x1]
        %v2886 = vlaneseq
        %v2887 = vshrl.u32 %v2886, 7
        %v2888 = vsub.s32 0, %v2887
        %v2889 = vrot.slane %v2884, %v2888
        %v2891 = vadd.f32 %v2882, %v2889
        %v2892 = vadd.f32 %v2883, %v2889
        %v2893 = vadd.f32 %v972, %v2891
        %v2894 = vadd.f32 %v973, %v2892
        %v2895 = vld [vmem:[%s953] sm:$0x1]
        %v2896 = vld [vmem:[%s956] sm:$0x1]
        %v2897 = vsel %vm985, %v2893, 0.0
        %2898 = vadd.xlane.f32.xlu0 %v2897
        %v2899 = vpop.xlane.xlu0 %2898
        %v2900 = vsel %vm985, %v2894, 0.0
        %2901 = vadd.xlane.f32.xlu0 %v2900
        %v2902 = vpop.xlane.xlu0 %2901
        %v2903 = vrcp.pop 32.0
        %v2904 = vmul.f32 %v2899, %v2903
        %v2905 = vmul.f32 %v2902, %v2903
        %v2906 = vsub.f32 %v2893, %v2904
        %v2907 = vsub.f32 %v2894, %v2905
        %v2908 = vmul.f32 %v2906, %v2906
        %v2909 = vmul.f32 %v2907, %v2907
        %v2910 = vsel %vm985, %v2908, 0.0
        %2911 = vadd.xlane.f32.xlu0 %v2910
        %v2912 = vpop.xlane.xlu0 %2911
        %v2913 = vsel %vm985, %v2909, 0.0
        %2914 = vadd.xlane.f32.xlu0 %v2913
        %v2915 = vpop.xlane.xlu0 %2914
        %v2916 = vmul.f32 %v2912, %v2903
        %v2917 = vmul.f32 %v2915, %v2903
        %v2918 = vadd.f32 %v2916, 1e-05
        %v2919 = vadd.f32 %v2917, 1e-05
        %v2920 = vrsqrt.pop %v2918
        %v2921 = vrsqrt.pop %v2919
        %v2922 = vmul.f32 %v2906, %v2920
        %v2923 = vmul.f32 %v2907, %v2921
        %v2925 = vlaneseq
        %v2926 = vshrl.u32 %v2925, 7
        %v2927 = vsub.s32 0, %v2926
        %v2928 = vrot.slane %v2895, %v2927
        %v2930 = vmul.f32 %v2922, %v2928
        %v2931 = vmul.f32 %v2923, %v2928
        %v2933 = vlaneseq
        %v2934 = vshrl.u32 %v2933, 7
        %v2935 = vsub.s32 0, %v2934
        %v2936 = vrot.slane %v2896, %v2935
        %v2938 = vadd.f32 %v2930, %v2936
        %v2939 = vadd.f32 %v2931, %v2936
        %v2940 = vld [vmem:[%s814] sm:$0xff]
        %v2941 = vld [vmem:[%s814 + $0x8] sm:$0xff]
        %v2942 = vld [vmem:[%s814 + $0x10] sm:$0xff]
        %v2943 = vld [vmem:[%s814 + $0x18] sm:$0xff]
        %v2944 = vld [vmem:[%s942] sm:$0x1]
        %v2946 = vlaneseq
        %v2947 = vshrl.u32 %v2946, 7
        %v2948 = vsub.s32 0, %v2947
        %v2949 = vrot.slane %v2944, %v2948
        %v2952 = vsel %vm985, %v2938, 0
        %v2955 = vsel %vm985, %v2939, 0
        %2957 = vmatprep.subr.mxu0 0.0
        %2958 = vmatpush1.msra.mxu0 %v2940
        %2959 = vmatprep.subr.mxu0 0.0
        %2960 = vmatpush1.msra.mxu0 %v2941
        %2961 = vmatprep.subr.mxu0 0.0
        %2962 = vmatpush1.msra.mxu0 %v2942
        %2963 = vmatprep.subr.mxu0 0.0
        %2964 = vmatpush1.msra.mxu0 %v2943
        %2965 = vmatprep.subr.mxu0 0.0
        %2966 = vmatpush1.msra.mxu0 0.0
        %2967 = vmatprep.subr.mxu0 0.0
        %2968 = vmatpush1.msra.mxu0 0.0
        %2969 = vmatprep.subr.mxu0 0.0
        %2970 = vmatpush1.msra.mxu0 0.0
        %2971 = vmatprep.subr.mxu0 0.0
        %2972 = vmatpush1.msra.mxu0 0.0
        %2973 = vmatprep.subr.mxu0 0.0
        %2974 = vmatpush1.msra.mxu0 0.0
        %2975 = vmatprep.subr.mxu0 0.0
        %2976 = vmatpush1.msra.mxu0 0.0
        %2977 = vmatprep.subr.mxu0 0.0
        %2978 = vmatpush1.msra.mxu0 0.0
        %2979 = vmatprep.subr.mxu0 0.0
        %2980 = vmatpush1.msra.mxu0 0.0
        %2981 = vmatprep.subr.mxu0 0.0
        %2982 = vmatpush1.msra.mxu0 0.0
        %2983 = vmatprep.subr.mxu0 0.0
        %2984 = vmatpush1.msra.mxu0 0.0
        %2985 = vmatprep.subr.mxu0 0.0
        %2986 = vmatpush1.msra.mxu0 0.0
        %2987 = vmatprep.subr.mxu0 0.0
        %2988 = vmatpush1.msra.mxu0 0.0
        %2989 = vmatprep.subr.mxu0 0.0
        %2990 = vmatpush1.msra.mxu0 0.0
        %2991 = vmatprep.subr.mxu0 0.0
        %2992 = vmatpush1.msra.mxu0 0.0
        %2993 = vmatprep.subr.mxu0 0.0
        %2994 = vmatpush1.msra.mxu0 0.0
        %2995 = vmatprep.subr.mxu0 0.0
        %2996 = vmatpush1.msra.mxu0 0.0
        %2997 = vmatprep.subr.mxu0 0.0
        %2998 = vmatpush1.msra.mxu0 0.0
        %2999 = vmatprep.subr.mxu0 0.0
        %3000 = vmatpush1.msra.mxu0 0.0
        %3001 = vmatprep.subr.mxu0 0.0
        %3002 = vmatpush1.msra.mxu0 0.0
        %3003 = vmatprep.subr.mxu0 0.0
        %3004 = vmatpush1.msra.mxu0 0.0
        %3005 = vmatprep.subr.mxu0 0.0
        %3006 = vmatpush1.msra.mxu0 0.0
        %3007 = vmatprep.subr.mxu0 0.0
        %3008 = vmatpush1.msra.mxu0 0.0
        %3009 = vmatprep.subr.mxu0 0.0
        %3010 = vmatpush1.msra.mxu0 0.0
        %3011 = vmatprep.subr.mxu0 0.0
        %3012 = vmatpush1.msra.mxu0 0.0
        %3013 = vmatprep.subr.mxu0 0.0
        %3014 = vmatpush1.msra.mxu0 0.0
        %3015 = vmatprep.subr.mxu0 0.0
        %3016 = vmatpush1.msra.mxu0 0.0
        %3017 = vmatprep.subr.mxu0 0.0
        %3018 = vmatpush1.msra.mxu0 0.0
        %3019 = vmatprep.subr.mxu0 0.0
        %3020 = vmatpush1.msra.mxu0 0.0
        %3021 = vmatprep.mubr.f32.mxu0 0.0
        %3022 = vmatmul.mubr.f32.gmra.mrb[0].mxu0 %v2952
        %v3023 = vpop.f32.mrb[0].mxu0
        %v3024 = vadd.f32 %v2949, %v3023
        %v3025 = vpop.f32.mrb[0].mxu0
        %3026 = vmatprep.mubr.f32.mxu0 0.0
        %3027 = vmatmul.mubr.f32.gmra.mrb[0].mxu0 %v2955
        %v3028 = vpop.f32.mrb[0].mxu0
        %v3029 = vadd.f32 %v2949, %v3028
        %v3030 = vpop.f32.mrb[0].mxu0
        %3031 = vdwg.mxu0
        %v3032 = vmax.f32 %v3024, 0.0
        %v3033 = vmax.f32 %v3029, 0.0
        %v3034 = vld [vmem:[%s947] sm:$0xff]
        %v3035 = vld [vmem:[%s947 + $0x8] sm:$0xff]
        %v3036 = vld [vmem:[%s947 + $0x10] sm:$0xff]
        %v3037 = vld [vmem:[%s947 + $0x18] sm:$0xff]
        %v3038 = vld [vmem:[%s947 + $0x20] sm:$0xff]
        %v3039 = vld [vmem:[%s947 + $0x28] sm:$0xff]
        %v3040 = vld [vmem:[%s947 + $0x30] sm:$0xff]
        %v3041 = vld [vmem:[%s947 + $0x38] sm:$0xff]
        %v3042 = vld [vmem:[%s950] sm:$0x1]
        %v3044 = vlaneseq
        %v3045 = vshrl.u32 %v3044, 7
        %v3046 = vsub.s32 0, %v3045
        %v3047 = vrot.slane %v3042, %v3046
        %vm3049 = vcmask 523264
        %v3051 = vsel %vm3049, %v3032, 0
        %v3054 = vsel %vm3049, %v3033, 0
        %3056 = vmatprep.subr.mxu0 0.0
        %3057 = vmatpush1.msra.mxu0 %v3034
        %3058 = vmatprep.subr.mxu0 0.0
        %3059 = vmatpush1.msra.mxu0 %v3035
        %3060 = vmatprep.subr.mxu0 0.0
        %3061 = vmatpush1.msra.mxu0 %v3036
        %3062 = vmatprep.subr.mxu0 0.0
        %3063 = vmatpush1.msra.mxu0 %v3037
        %3064 = vmatprep.subr.mxu0 0.0
        %3065 = vmatpush1.msra.mxu0 %v3038
        %3066 = vmatprep.subr.mxu0 0.0
        %3067 = vmatpush1.msra.mxu0 %v3039
        %3068 = vmatprep.subr.mxu0 0.0
        %3069 = vmatpush1.msra.mxu0 %v3040
        %3070 = vmatprep.subr.mxu0 0.0
        %3071 = vmatpush1.msra.mxu0 %v3041
        %3072 = vmatprep.subr.mxu0 0.0
        %3073 = vmatpush1.msra.mxu0 0.0
        %3074 = vmatprep.subr.mxu0 0.0
        %3075 = vmatpush1.msra.mxu0 0.0
        %3076 = vmatprep.subr.mxu0 0.0
        %3077 = vmatpush1.msra.mxu0 0.0
        %3078 = vmatprep.subr.mxu0 0.0
        %3079 = vmatpush1.msra.mxu0 0.0
        %3080 = vmatprep.subr.mxu0 0.0
        %3081 = vmatpush1.msra.mxu0 0.0
        %3082 = vmatprep.subr.mxu0 0.0
        %3083 = vmatpush1.msra.mxu0 0.0
        %3084 = vmatprep.subr.mxu0 0.0
        %3085 = vmatpush1.msra.mxu0 0.0
        %3086 = vmatprep.subr.mxu0 0.0
        %3087 = vmatpush1.msra.mxu0 0.0
        %3088 = vmatprep.subr.mxu0 0.0
        %3089 = vmatpush1.msra.mxu0 0.0
        %3090 = vmatprep.subr.mxu0 0.0
        %3091 = vmatpush1.msra.mxu0 0.0
        %3092 = vmatprep.subr.mxu0 0.0
        %3093 = vmatpush1.msra.mxu0 0.0
        %3094 = vmatprep.subr.mxu0 0.0
        %3095 = vmatpush1.msra.mxu0 0.0
        %3096 = vmatprep.subr.mxu0 0.0
        %3097 = vmatpush1.msra.mxu0 0.0
        %3098 = vmatprep.subr.mxu0 0.0
        %3099 = vmatpush1.msra.mxu0 0.0
        %3100 = vmatprep.subr.mxu0 0.0
        %3101 = vmatpush1.msra.mxu0 0.0
        %3102 = vmatprep.subr.mxu0 0.0
        %3103 = vmatpush1.msra.mxu0 0.0
        %3104 = vmatprep.subr.mxu0 0.0
        %3105 = vmatpush1.msra.mxu0 0.0
        %3106 = vmatprep.subr.mxu0 0.0
        %3107 = vmatpush1.msra.mxu0 0.0
        %3108 = vmatprep.subr.mxu0 0.0
        %3109 = vmatpush1.msra.mxu0 0.0
        %3110 = vmatprep.subr.mxu0 0.0
        %3111 = vmatpush1.msra.mxu0 0.0
        %3112 = vmatprep.subr.mxu0 0.0
        %3113 = vmatpush1.msra.mxu0 0.0
        %3114 = vmatprep.subr.mxu0 0.0
        %3115 = vmatpush1.msra.mxu0 0.0
        %3116 = vmatprep.subr.mxu0 0.0
        %3117 = vmatpush1.msra.mxu0 0.0
        %3118 = vmatprep.subr.mxu0 0.0
        %3119 = vmatpush1.msra.mxu0 0.0
        %3120 = vmatprep.mubr.f32.mxu0 0.0
        %3121 = vmatmul.mubr.f32.gmra.mrb[0].mxu0 %v3051
        %v3122 = vpop.f32.mrb[0].mxu0
        %v3123 = vadd.f32 %v3047, %v3122
        %v3124 = vpop.f32.mrb[0].mxu0
        %3125 = vmatprep.mubr.f32.mxu0 0.0
        %3126 = vmatmul.mubr.f32.gmra.mrb[0].mxu0 %v3054
        %v3127 = vpop.f32.mrb[0].mxu0
        %v3128 = vadd.f32 %v3047, %v3127
        %v3129 = vpop.f32.mrb[0].mxu0
        %3130 = vdwg.mxu0
        %v3131 = vadd.f32 %v2938, %v3123
        %v3132 = vadd.f32 %v2939, %v3128
        %v3133 = vld [vmem:[%s959] sm:$0x1]
        %v3134 = vld [vmem:[%s962] sm:$0x1]
        %v3135 = vsel %vm985, %v3131, 0.0
        %3136 = vadd.xlane.f32.xlu0 %v3135
        %v3137 = vpop.xlane.xlu0 %3136
        %v3138 = vsel %vm985, %v3132, 0.0
        %3139 = vadd.xlane.f32.xlu0 %v3138
        %v3140 = vpop.xlane.xlu0 %3139
        %v3141 = vmul.f32 %v3137, %v2903
        %v3142 = vmul.f32 %v3140, %v2903
        %v3143 = vsub.f32 %v3131, %v3141
        %v3144 = vsub.f32 %v3132, %v3142
        %v3145 = vmul.f32 %v3143, %v3143
        %v3146 = vmul.f32 %v3144, %v3144
        %v3147 = vsel %vm985, %v3145, 0.0
        %3148 = vadd.xlane.f32.xlu0 %v3147
        %v3149 = vpop.xlane.xlu0 %3148
        %v3150 = vsel %vm985, %v3146, 0.0
        %3151 = vadd.xlane.f32.xlu0 %v3150
        %v3152 = vpop.xlane.xlu0 %3151
        %v3153 = vmul.f32 %v3149, %v2903
        %v3154 = vmul.f32 %v3152, %v2903
        %v3155 = vadd.f32 %v3153, 1e-05
        %v3156 = vadd.f32 %v3154, 1e-05
        %v3157 = vrsqrt.pop %v3155
        %v3158 = vrsqrt.pop %v3156
        %v3159 = vmul.f32 %v3143, %v3157
        %v3160 = vmul.f32 %v3144, %v3158
        %v3162 = vlaneseq
        %v3163 = vshrl.u32 %v3162, 7
        %v3164 = vsub.s32 0, %v3163
        %v3165 = vrot.slane %v3133, %v3164
        %v3167 = vmul.f32 %v3159, %v3165
        %v3168 = vmul.f32 %v3160, %v3165
        %v3170 = vlaneseq
        %v3171 = vshrl.u32 %v3170, 7
        %v3172 = vsub.s32 0, %v3171
        %v3173 = vrot.slane %v3134, %v3172
        %v3175 = vadd.f32 %v3167, %v3173
        %v3176 = vadd.f32 %v3168, %v3173
        %3177 = vst.msk [vmem:[#allocation2] sm:$0xff] %vm985, %v3175
        %3178 = vst.msk [vmem:[#allocation2 + $0x8] sm:$0xff] %vm985, %v3176
        %p3179 = scmp.eq.s32.totalorder %s46, 1
        // Predicated region
        $region125: #{tpu_custom_call.1} parent=95 // pred_check
          %p3180 = pneg %p3179
        $region126: #{tpu_custom_call.1} parent=95 // pred_check_branch
          %3182 = sbr.rel (%p3180) target = $region128
        $region127: #{tpu_custom_call.1} parent=95 // pred_region
          %v3183 = vsel %vm985, %v3175, 0.0
          %v3184 = vrot.slane %v3183, 4
          %v3185 = vadd.f32 %v3183, %v3184
          %v3186 = vrot.slane %v3185, 2
          %v3187 = vadd.f32 %v3185, %v3186
          %v3188 = vrot.slane %v3187, 1
          %v3189 = vadd.f32 %v3187, %v3188
          %v3190 = vsel %vm985, %v3176, 0.0
          %v3191 = vrot.slane %v3190, 4
          %v3192 = vadd.f32 %v3190, %v3191
          %v3193 = vrot.slane %v3192, 2
          %v3194 = vadd.f32 %v3192, %v3193
          %v3195 = vrot.slane %v3194, 1
          %v3196 = vadd.f32 %v3194, %v3195
          %v3197 = vmul.f32 %v3189, 0.125
          %v3198 = vmul.f32 %v3196, 0.125
          %v3199 = vld [vmem:[%s17] sm:$0xff]
          %v3200 = vld [vmem:[%s17 + $0x8] sm:$0xff]
          %v3201 = vld [vmem:[%s17 + $0x10] sm:$0xff]
          %v3202 = vld [vmem:[%s17 + $0x18] sm:$0xff]
          %v3203 = vld [vmem:[%s18] sm:$0x1]
          %v3205 = vlaneseq
          %v3206 = vshrl.u32 %v3205, 7
          %v3207 = vsub.s32 0, %v3206
          %v3208 = vrot.slane %v3203, %v3207
          %vm3212 = vcmask 1041409
          %v3213 = vsel %vm3212, %v3198, %v3197
          %v3214 = vsel %vm985, %v3213, 0
          %3216 = vmatprep.subr.mxu0 0.0
          %3217 = vmatpush1.msra.mxu0 %v3199
          %3218 = vmatprep.subr.mxu0 0.0
          %3219 = vmatpush1.msra.mxu0 %v3200
          %3220 = vmatprep.subr.mxu0 0.0
          %3221 = vmatpush1.msra.mxu0 %v3201
          %3222 = vmatprep.subr.mxu0 0.0
          %3223 = vmatpush1.msra.mxu0 %v3202
          %3224 = vmatprep.subr.mxu0 0.0
          %3225 = vmatpush1.msra.mxu0 0.0
          %3226 = vmatprep.subr.mxu0 0.0
          %3227 = vmatpush1.msra.mxu0 0.0
          %3228 = vmatprep.subr.mxu0 0.0
          %3229 = vmatpush1.msra.mxu0 0.0
          %3230 = vmatprep.subr.mxu0 0.0
          %3231 = vmatpush1.msra.mxu0 0.0
          %3232 = vmatprep.subr.mxu0 0.0
          %3233 = vmatpush1.msra.mxu0 0.0
          %3234 = vmatprep.subr.mxu0 0.0
          %3235 = vmatpush1.msra.mxu0 0.0
          %3236 = vmatprep.subr.mxu0 0.0
          %3237 = vmatpush1.msra.mxu0 0.0
          %3238 = vmatprep.subr.mxu0 0.0
          %3239 = vmatpush1.msra.mxu0 0.0
          %3240 = vmatprep.subr.mxu0 0.0
          %3241 = vmatpush1.msra.mxu0 0.0
          %3242 = vmatprep.subr.mxu0 0.0
          %3243 = vmatpush1.msra.mxu0 0.0
          %3244 = vmatprep.subr.mxu0 0.0
          %3245 = vmatpush1.msra.mxu0 0.0
          %3246 = vmatprep.subr.mxu0 0.0
          %3247 = vmatpush1.msra.mxu0 0.0
          %3248 = vmatprep.subr.mxu0 0.0
          %3249 = vmatpush1.msra.mxu0 0.0
          %3250 = vmatprep.subr.mxu0 0.0
          %3251 = vmatpush1.msra.mxu0 0.0
          %3252 = vmatprep.subr.mxu0 0.0
          %3253 = vmatpush1.msra.mxu0 0.0
          %3254 = vmatprep.subr.mxu0 0.0
          %3255 = vmatpush1.msra.mxu0 0.0
          %3256 = vmatprep.subr.mxu0 0.0
          %3257 = vmatpush1.msra.mxu0 0.0
          %3258 = vmatprep.subr.mxu0 0.0
          %3259 = vmatpush1.msra.mxu0 0.0
          %3260 = vmatprep.subr.mxu0 0.0
          %3261 = vmatpush1.msra.mxu0 0.0
          %3262 = vmatprep.subr.mxu0 0.0
          %3263 = vmatpush1.msra.mxu0 0.0
          %3264 = vmatprep.subr.mxu0 0.0
          %3265 = vmatpush1.msra.mxu0 0.0
          %3266 = vmatprep.subr.mxu0 0.0
          %3267 = vmatpush1.msra.mxu0 0.0
          %3268 = vmatprep.subr.mxu0 0.0
          %3269 = vmatpush1.msra.mxu0 0.0
          %3270 = vmatprep.subr.mxu0 0.0
          %3271 = vmatpush1.msra.mxu0 0.0
          %3272 = vmatprep.subr.mxu0 0.0
          %3273 = vmatpush1.msra.mxu0 0.0
          %3274 = vmatprep.subr.mxu0 0.0
          %3275 = vmatpush1.msra.mxu0 0.0
          %3276 = vmatprep.subr.mxu0 0.0
          %3277 = vmatpush1.msra.mxu0 0.0
          %3278 = vmatprep.subr.mxu0 0.0
          %3279 = vmatpush1.msra.mxu0 0.0
          %3280 = vmatprep.mubr.f32.mxu0 0.0
          %3281 = vmatmul.mubr.f32.gmra.mrb[0].mxu0 %v3214
          %v3282 = vpop.f32.mrb[0].mxu0
          %v3283 = vadd.f32 %v3208, %v3282
          %v3284 = vpop.f32.mrb[0].mxu0
          %3285 = vdwg.mxu0
          %v3286 = vxor.u32 %v3283, 2147483648
          %v3287 = vmul.f32 %v3286, 1.442695
          %v3288 = vpow.pop %v3287
          %v3289 = vadd.f32 %v3288, 1.0
          %v3290 = vrcp.pop %v3289
          %v3291 = vmul.f32 1.0, %v3290
          %3292 = vst [vmem:[#allocation14] sm:$0x3] %v3291
        $region128: #{tpu_custom_call.1} parent=95 // pred_fallthru
          _
        // Predicated region
        $region129: #{tpu_custom_call.1} parent=95 // pred_check
          %p3293 = pneg %p555
        $region130: #{tpu_custom_call.1} parent=95 // pred_check_branch
          %3295 = sbr.rel (%p3293) target = $region132
        $region131: #{tpu_custom_call.1} parent=95 // pred_region
          %s3297 = ssub.s32 32, 32
          %3298 = vsyncadd [#allocation5], %s3297
          %s3299 = smul.addr %s45, 32
          %s3300 = scalar_lea.hbm %s19, %s3299
          %s3302 = sshll.u32 [#allocation14], 4
          %s3303 = int_to_ptr.vmem [resolvable:$true] %s3302
          %3305 = dma.vmem_to_hbm [thread:$0]  %s3303, 32, %s3300, [#allocation5]
        $region132: #{tpu_custom_call.1} parent=95 // pred_fallthru
          _
        // Predicated region
        $region133: #{tpu_custom_call.1} parent=95 // pred_check
          %p3306 = pneg %p555
        $region134: #{tpu_custom_call.1} parent=95 // pred_check_branch
          %3308 = sbr.rel (%p3306) target = $region136
        $region135: #{tpu_custom_call.1} parent=95 // pred_region
          %3309 = dma.done [#allocation5], 32
        $region136: #{tpu_custom_call.1} parent=95 // pred_fallthru
          _
      $region96: #{tpu_custom_call.1} parent=5 // pred_fallthru
        _
      %p3310 = scmp.le.s32.totalorder 2, %s36
      // Predicated region
      $region137: #{tpu_custom_call.1} parent=5 // pred_check
        %p3311 = pneg %p3310
      $region138: #{tpu_custom_call.1} parent=5 // pred_check_branch
        %3313 = sbr.rel (%p3311) target = $region140
      $region139: #{tpu_custom_call.1} parent=5 // pred_region
        %s3314 = ssub.s32 %s36, 2
      $region140: #{tpu_custom_call.1} parent=5 // pred_fallthru
        _
    $region6: #{tpu_custom_call.1} parent=1 // loop_footer
      %s40 = sadd.s32 1, %s36
    $region7: #{tpu_custom_call.1} parent=1 // loop_footer_branch
      %35 = sbr.rel target = $region3
    $region8: #{tpu_custom_call.1} parent=1 // loop_exit
      _
    %3315 = vsyncpa [#allocation4], 1
    %s3316 = scalar_lea.sflag [#allocation4], 1
    %3317 = vsyncpa %s3316, 1
    %3318 = vsyncpa [#allocation7], 1
    %s3319 = scalar_lea.sflag [#allocation7], 1
    %3320 = vsyncpa %s3319, 1
    %3321 = vsyncpa [#allocation10], 1
    %s3322 = scalar_lea.sflag [#allocation10], 1
    %3323 = vsyncpa %s3322, 1
    %3324 = vsyncpa [#allocation13], 1
    %s3325 = scalar_lea.sflag [#allocation13], 1
    %3326 = vsyncpa %s3325, 1
    %3327 = vsyncpa [#allocation5], 1
    %s3328 = scalar_lea.sflag [#allocation5], 1
    %3329 = vsyncpa %s3328, 1

</llo_original>
